<compile_context>
chip_gen: v7x
topology: tpu7x:2x2x1
jax: 0.10.0
libtpu: 0.0.40
codegen_flags: <defaults>
</compile_context>

<pallas_src>
import math

import numpy as np
import jax
import jax.numpy as jnp
from jax.experimental import pallas as pl
from jax.experimental.pallas import tpu as pltpu

# ----------------------------- problem sizes --------------------------------
C = 32            # multiplicity of each irrep in the node features
A = 4             # node-attr scalar channels
AP = 8            # node-attr width padded to a full sublane of contraction
SH = 4            # edge-attr width (1 x 0e + 1 x 1o)
SHP = 8           # edge-attr width padded
B = 8             # edge-embedding (radial basis) size
H = 8             # radial_mlp_width
D = 4 * C         # node feature dim  (C x 0e + C x 1o)   = 128  -> lane-dense output
MID = 8 * C       # irreps_mid dim    (2C x 0e + 2C x 1o) (reference only)
WNUM = 4 * C      # tp.weight_numel   (4 'uvu' instructions, C weights each)
NPATH = 10        # 'uvu' paths unrolled over m (1o x 1o -> 0e expanded to 3 instances)
TENC = NPATH * C  # path-major expanded width = 320

N = 16            # nodes per graph
E = 64            # edges per graph
G = 8             # graphs in the batch
GPS = 4           # graphs per grid step
STEPS = G // GPS  # grid size (2) -> sharded over both TCs on v7x
NB = GPS * N      # nodes per grid step = 64
EB = GPS * E      # edges per grid step = 256

AVG_NUM_NEIGHBORS = 4.0
ALPHA = 1.0 / math.sqrt(AVG_NUM_NEIGHBORS)       # scatter_norm_factor

# path table: (x block, edge-attr column, radial-weight block, w2 row half, output block)
#   x blocks:  0 = x0 (scalars), 1..3 = 1o m-components
#   attr cols: 0 = Y_0,          1..3 = Y_1 m-components
#   w blocks:  0: 0e*0e->0e, 1: 0e*1o->1o, 2: 1o*0e->1o, 3: 1o*1o->0e
_PATHS = [
    (0, 0, 0, 0, 0),   # 0e x 0e -> 0e
    (1, 1, 3, 1, 0),   # 1o x 1o -> 0e (m=0)  -+  these three map to the same output
    (2, 2, 3, 1, 0),   # 1o x 1o -> 0e (m=1)   |  rows of linear_2, which performs the
    (3, 3, 3, 1, 0),   # 1o x 1o -> 0e (m=2)  -+  sum over m for free
    (0, 1, 1, 0, 1),   # 0e x 1o -> 1o (m=0)
    (1, 0, 2, 1, 1),   # 1o x 0e -> 1o (m=0)
    (0, 2, 1, 0, 2),   # 0e x 1o -> 1o (m=1)
    (2, 0, 2, 1, 2),   # 1o x 0e -> 1o (m=1)
    (0, 3, 1, 0, 3),   # 0e x 1o -> 1o (m=2)
    (3, 0, 2, 1, 3),   # 1o x 0e -> 1o (m=2)
]


# ----------------------------- fused kernel ----------------------------------
def fused_kernel(x_ref, z_ref, eattr_ref, eemb_ref, esrc_ref, edst_ref,
                 wnode_ref, psh_ref, w0_ref, w1r_ref, ez_ref, rsum_ref, w2_ref,
                 out_ref):
    f32 = jnp.float32

    # ------------- node side: fused linear_1 (path-expanded) + self-connection -----
    x = x_ref[...]                                                   # (NB, D)
    z = z_ref[...]                                                   # (NB, AP)

    # one matmul gives [sc bilinear intermediate | path-expanded linear_1 output]
    t_all = jnp.dot(x, wnode_ref[...], preferred_element_type=f32)   # (NB, A*D + TENC)
    t = t_all[:, :A * D]                                             # (NB, A*D)
    xlin_exp = t_all[:, A * D:]                                      # (NB, TENC)

    # sc = sum_v z[:, v] * (x @ Wsc_v)  ==  ((z @ Ez) * t) @ R   (0/1 matrices, MXU)
    z_exp = jnp.dot(z, ez_ref[...], preferred_element_type=f32)      # (NB, A*D)
    sc = jnp.dot(z_exp * t, rsum_ref[...], preferred_element_type=f32)   # (NB, D)

    # ------------- edge side: gather, radial MLP, path-major TP, scatter -----------
    src = esrc_ref[...]                                              # (EB, 1)  int32
    dst = edst_ref[0]                                                # (1, EB)  int32

    onehot_src = (src == jax.lax.broadcasted_iota(jnp.int32, (EB, NB), 1)).astype(f32)
    # destination one-hot built directly transposed -> scatter is a plain matmul
    onehot_dst_t = (jax.lax.broadcasted_iota(jnp.int32, (NB, EB), 0) == dst).astype(f32)

    # gather path-expanded source features on the MXU
    x_exp = jnp.dot(onehot_src, xlin_exp, preferred_element_type=f32)       # (EB, TENC)
    # expand the spherical harmonics to path-major layout (constant 0/1 matmul)
    sh_exp = jnp.dot(eattr_ref[...], psh_ref[...], preferred_element_type=f32)   # (EB, TENC)

    # radial MLP (SiLU, no bias).  1/sqrt(fan_in), the 1/sqrt(3) CG factor and the
    # path expansion are folded into the weights on the host.
    h = jnp.dot(eemb_ref[...], w0_ref[...], preferred_element_type=f32)     # (EB, H)
    h = h * jax.nn.sigmoid(h)                                               # SiLU
    ew_exp = jnp.dot(h, w1r_ref[...], preferred_element_type=f32)           # (EB, TENC)

    # whole 'uvu' tensor product: one full-width elementwise triple product
    msg = ew_exp * x_exp * sh_exp                                           # (EB, TENC)

    # scatter-add over destination nodes in natural orientation (no LHS transpose)
    mid = jnp.dot(onehot_dst_t, msg, preferred_element_type=f32)            # (NB, TENC)

    # linear_2 (sum over m of the 1o x 1o -> 0e path folded in) + self-connection
    out = jnp.dot(mid, w2_ref[...], preferred_element_type=f32) + sc        # (NB, D)
    out_ref[...] = out.astype(out_ref.dtype)


# ----------------------------- host-side weight folding ----------------------
def prepare_weights(p):
    """Build block-diagonal / path-expanded weights with every scalar norm folded in.

    Done ONCE per layer on the host (numpy) — never in the hot path.
    """
    inv_c = 1.0 / math.sqrt(C)
    inv_ca = 1.0 / math.sqrt(C * A)
    inv_2c = 1.0 / math.sqrt(2 * C)
    eye_c = np.eye(C, dtype=np.float32)

    # linear_1 (block-diagonal).  ALPHA (scatter norm, applied right after linear_1
    # in the module forward) is folded into the weight — exactly equivalent.
    w1 = np.zeros((D, D), np.float32)
    w1[:C, :C] = np.asarray(p["w1s"]) * (inv_c * ALPHA)
    for m in range(3):
        sl = slice(C + m * C, C + (m + 1) * C)
        w1[sl, sl] = np.asarray(p["w1v"]) * (inv_c * ALPHA)

    # constant 0/1 expansion matrices for the path-major layout
    px = np.zeros((D, TENC), np.float32)      # node features   -> paths
    psh = np.zeros((SHP, TENC), np.float32)   # edge attributes -> paths
    pw = np.zeros((WNUM, TENC), np.float32)   # radial weights  -> paths
    for k, (xb, shc, wb, _, _) in enumerate(_PATHS):
        px[xb * C:(xb + 1) * C, k * C:(k + 1) * C] = eye_c
        psh[shc, k * C:(k + 1) * C] = 1.0
        pw[wb * C:(wb + 1) * C, k * C:(k + 1) * C] = eye_c

    # self-connection FullyConnectedTP weights, horizontally stacked per attr channel
    wsc0 = np.asarray(p["wsc0"])
    wsc1 = np.asarray(p["wsc1"])
    wsc = np.zeros((D, A * D), np.float32)
    for v in range(A):
        wsc[:C, v * D:v * D + C] = wsc0[v] * inv_ca
        for m in range(3):
            r = slice(C + m * C, C + (m + 1) * C)
            c = slice(v * D + C + m * C, v * D + C + (m + 1) * C)
            wsc[r, c] = wsc1[v] * inv_ca

    # ONE node-side matmul: x @ [wsc | w1 @ Px]  (sc intermediate first -> 128-aligned slice)
    w_node = np.concatenate([wsc, w1 @ px], axis=1)          # (D, A*D + TENC)

    # self-connection combine: sc = ((z @ ez) * t) @ rsum
    ez = np.zeros((AP, A * D), np.float32)
    rsum = np.zeros((A * D, D), np.float32)
    for v in range(A):
        ez[v, v * D:(v + 1) * D] = 1.0
        rsum[v * D:(v + 1) * D, :] = np.eye(D, dtype=np.float32)

    # radial MLP: fold 1/sqrt(fan_in), the 1/sqrt(3) CG factor for 1o x 1o -> 0e, and
    # the path expansion Pw (second layer directly emits path-major weights)
    w0 = np.asarray(p["w0"]) * np.float32(1.0 / math.sqrt(B))
    w1r = np.asarray(p["w1"]) * np.float32(1.0 / math.sqrt(H))
    w1r[:, 3 * C:4 * C] *= np.float32(1.0 / math.sqrt(3.0))
    w1r_exp = w1r @ pw                                        # (H, TENC)

    # linear_2 on the path-major mid irreps
    w2s = np.asarray(p["w2s"]) * inv_2c
    w2v = np.asarray(p["w2v"]) * inv_2c
    w2_exp = np.zeros((TENC, D), np.float32)
    for k, (_, _, _, half, ob) in enumerate(_PATHS):
        blk = w2s if ob == 0 else w2v
        w2_exp[k * C:(k + 1) * C, ob * C:(ob + 1) * C] = blk[half * C:(half + 1) * C, :]

    return tuple(jnp.asarray(w) for w in (w_node, psh, w0, w1r_exp, ez, rsum, w2_exp))


# ----------------------------- wrapper ----------------------------------------
def _tiled(shape):
    return pl.BlockSpec(shape, lambda i: (i,) + (0,) * (len(shape) - 1))


def _bcast(shape):
    return pl.BlockSpec(shape, lambda i: (0,) * len(shape))


@jax.jit
def interaction_block(x, node_attrs_p, edge_attr_p, edge_embed, e_src, e_dst,
                      w_node, psh, w0, w1r_exp, ez, rsum, w2_exp):
    f32 = jnp.float32
    return pl.pallas_call(
        fused_kernel,
        out_shape=jax.ShapeDtypeStruct((G * N, D), f32),
        grid_spec=pltpu.PrefetchScalarGridSpec(
            num_scalar_prefetch=0,
            grid=(STEPS,),                         # one step per group of GPS graphs
            in_specs=[_tiled((NB, D)),             # node features
                      _tiled((NB, AP)),            # node attrs (padded to 8)
                      _tiled((EB, SHP)),           # edge sph. harmonics (padded to 8)
                      _tiled((EB, B)),             # radial basis (own lane-aligned input)
                      _tiled((EB, 1)),             # edge src, int32, sublane column
                      _tiled((1, 1, EB)),          # edge dst, int32, lane-major row
                      _bcast((D, A * D + TENC)),   # fused linear_1 / sc weight
                      _bcast((SHP, TENC)),         # sph-harm path expansion
                      _bcast((B, H)),              # radial MLP layer 0
                      _bcast((H, TENC)),           # radial MLP layer 1 (path-expanded)
                      _bcast((AP, A * D)),         # sc: attr broadcast matrix
                      _bcast((A * D, D)),          # sc: block-sum matrix
                      _bcast((TENC, D))],          # linear_2 (path-major)
            out_specs=_tiled((NB, D))),
        compiler_params=pltpu.CompilerParams(
            # independent graph batches -> shard across both TensorCores on v7x
            dimension_semantics=("parallel",)),
    )(x, node_attrs_p, edge_attr_p, edge_embed, e_src, e_dst,
      w_node, psh, w0, w1r_exp, ez, rsum, w2_exp)


# ----------------------------- pure-JAX reference ----------------------------
def reference(x, z, edge_embed, edge_attr, edge_dst, edge_src, p):
    n_tot = x.shape[0]
    inv_c, inv_ca = 1 / math.sqrt(C), 1 / math.sqrt(C * A)
    x0 = x[:, :C]
    x1 = [x[:, C + m * C: C + (m + 1) * C] for m in range(3)]
    xlin = jnp.concatenate([x0 @ p["w1s"] * inv_c] +
                           [x1[m] @ p["w1v"] * inv_c for m in range(3)], -1) * ALPHA
    sc0 = sum(z[:, v:v + 1] * (x0 @ p["wsc0"][v]) for v in range(A)) * inv_ca
    sc1 = [sum(z[:, v:v + 1] * (x1[m] @ p["wsc1"][v]) for v in range(A)) * inv_ca
           for m in range(3)]
    sc = jnp.concatenate([sc0] + sc1, -1)
    h = edge_embed @ p["w0"] / math.sqrt(B)
    h = h * jax.nn.sigmoid(h)
    ew = h @ p["w1"] / math.sqrt(H)
    xs = xlin[edge_src]
    xs0 = xs[:, :C]
    xs1 = [xs[:, C + m * C: C + (m + 1) * C] for m in range(3)]
    sh0 = edge_attr[:, 0:1]
    sh = [edge_attr[:, 1 + m:2 + m] for m in range(3)]
    w00, w01, w10, w11 = ew[:, :C], ew[:, C:2 * C], ew[:, 2 * C:3 * C], ew[:, 3 * C:]
    msg_a = w00 * xs0 * sh0
    msg_b = w11 * sum(xs1[m] * sh[m] for m in range(3)) / math.sqrt(3.0)
    vec = [jnp.concatenate([w01 * xs0 * sh[m], w10 * xs1[m] * sh0], -1) for m in range(3)]
    msg = jnp.concatenate([msg_a, msg_b] + vec, -1)
    mid = jnp.zeros((n_tot, MID), jnp.float32).at[edge_dst].add(msg)
    inv2c = 1 / math.sqrt(2 * C)
    y = [mid[:, :2 * C] @ p["w2s"] * inv2c]
    for m in range(3):
        y.append(mid[:, 2 * C + m * 2 * C: 2 * C + (m + 1) * 2 * C] @ p["w2v"] * inv2c)
    return jnp.concatenate(y, -1) + sc


# ----------------------------- main ------------------------------------------
if __name__ == "__main__":
    key = jax.random.PRNGKey(0)
    keys = jax.random.split(key, 16)

    params = {
        "w1s": jax.random.normal(keys[0], (C, C), jnp.float32),
        "w1v": jax.random.normal(keys[1], (C, C), jnp.float32),
        "wsc0": jax.random.normal(keys[2], (A, C, C), jnp.float32),
        "wsc1": jax.random.normal(keys[3], (A, C, C), jnp.float32),
        "w0": jax.random.normal(keys[4], (B, H), jnp.float32),
        "w1": jax.random.normal(keys[5], (H, WNUM), jnp.float32),
        "w2s": jax.random.normal(keys[6], (2 * C, C), jnp.float32),
        "w2v": jax.random.normal(keys[7], (2 * C, C), jnp.float32),
    }

    # batch of G independent small graphs, stacked along the node / edge axes
    x = jax.random.normal(keys[8], (G * N, D), jnp.float32)             # node features
    node_attrs = jax.random.normal(keys[9], (G * N, A), jnp.float32)    # node attrs (0e)
    edge_embed = jax.random.normal(keys[10], (G * E, B), jnp.float32)   # radial basis
    edge_attr = jax.random.normal(keys[11], (G * E, SH), jnp.float32)   # sph. harm. l<=1
    edge_local = jax.random.randint(keys[12], (2, G, E), 0, N, jnp.int32)

    # index plumbing (once, on the host, in numpy):
    el = np.asarray(edge_local)
    graph_off = np.arange(G, dtype=np.int32)[:, None] * N
    edge_dst_g = jnp.asarray((el[0] + graph_off).reshape(-1))           # global (reference)
    edge_src_g = jnp.asarray((el[1] + graph_off).reshape(-1))
    step_off = (np.arange(G, dtype=np.int32)[:, None] % GPS) * N        # within-step offset
    e_src_col = jnp.asarray((el[1] + step_off).reshape(G * E, 1).astype(np.int32))
    e_dst_row = jnp.asarray((el[0] + step_off).reshape(STEPS, 1, EB).astype(np.int32))

    # pad the tiny attr inputs to an 8-wide contraction (done once)
    node_attrs_p = jnp.asarray(
        np.concatenate([np.asarray(node_attrs),
                        np.zeros((G * N, AP - A), np.float32)], axis=1))
    edge_attr_p = jnp.asarray(
        np.concatenate([np.asarray(edge_attr),
                        np.zeros((G * E, SHP - SH), np.float32)], axis=1))

    # weight folding: once per layer, outside the hot path
    weights = prepare_weights(params)

    out = interaction_block(x, node_attrs_p, edge_attr_p, edge_embed,
                            e_src_col, e_dst_row, *weights)
    out = jax.block_until_ready(out)

    ref = reference(x, node_attrs, edge_embed, edge_attr, edge_dst_g, edge_src_g, params)
    if not jnp.allclose(out, ref, rtol=1e-3, atol=1e-3):
        raise AssertionError(f"mismatch: max abs err {jnp.max(jnp.abs(out - ref))}")

    print("KERNEL_OK")
</pallas_src>

<mosaic_0001>
module attributes {stable_mosaic.version = 11 : i64} {
  func.func @fused_kernel(%arg0: i32, %arg1: memref<64x128xf32, #tpu.memory_space<vmem>>, %arg2: memref<64x8xf32, #tpu.memory_space<vmem>>, %arg3: memref<256x8xf32, #tpu.memory_space<vmem>>, %arg4: memref<256x8xf32, #tpu.memory_space<vmem>>, %arg5: memref<256x1xi32, #tpu.memory_space<vmem>>, %arg6: memref<1x1x256xi32, #tpu.memory_space<vmem>>, %arg7: memref<128x832xf32, #tpu.memory_space<vmem>>, %arg8: memref<8x320xf32, #tpu.memory_space<vmem>>, %arg9: memref<8x8xf32, #tpu.memory_space<vmem>>, %arg10: memref<8x320xf32, #tpu.memory_space<vmem>>, %arg11: memref<8x512xf32, #tpu.memory_space<vmem>>, %arg12: memref<512x128xf32, #tpu.memory_space<vmem>>, %arg13: memref<320x128xf32, #tpu.memory_space<vmem>>, %arg14: memref<64x128xf32, #tpu.memory_space<vmem>>) attributes {dimension_semantics = [#tpu.dimension_semantics<parallel>], iteration_bounds = array<i64: 2>, scalar_prefetch = 0 : i64, scratch_operands = 0 : i64, tpu.core_type = #tpu.core_type<tc>, window_params = [{transform_indices = @transform_0, window_bounds = array<i64: 64, 128>}, {transform_indices = @transform_1, window_bounds = array<i64: 64, 8>}, {transform_indices = @transform_2, window_bounds = array<i64: 256, 8>}, {transform_indices = @transform_3, window_bounds = array<i64: 256, 8>}, {transform_indices = @transform_4, window_bounds = array<i64: 256, 1>}, {transform_indices = @transform_5, window_bounds = array<i64: 1, 1, 256>}, {pipeline_mode = #tpu.pipeline_mode<synchronous>, transform_indices = @transform_6, window_bounds = array<i64: 128, 832>}, {pipeline_mode = #tpu.pipeline_mode<synchronous>, transform_indices = @transform_7, window_bounds = array<i64: 8, 320>}, {pipeline_mode = #tpu.pipeline_mode<synchronous>, transform_indices = @transform_8, window_bounds = array<i64: 8, 8>}, {pipeline_mode = #tpu.pipeline_mode<synchronous>, transform_indices = @transform_9, window_bounds = array<i64: 8, 320>}, {pipeline_mode = #tpu.pipeline_mode<synchronous>, transform_indices = @transform_10, window_bounds = array<i64: 8, 512>}, {pipeline_mode = #tpu.pipeline_mode<synchronous>, transform_indices = @transform_11, window_bounds = array<i64: 512, 128>}, {pipeline_mode = #tpu.pipeline_mode<synchronous>, transform_indices = @transform_12, window_bounds = array<i64: 320, 128>}, {transform_indices = @transform_13, window_bounds = array<i64: 64, 128>}]} {
    %c0 = arith.constant 0 : index
    %c0_0 = arith.constant 0 : index
    %0 = vector.load %arg1[%c0, %c0_0] : memref<64x128xf32, #tpu.memory_space<vmem>>, vector<64x128xf32>
    %c0_1 = arith.constant 0 : index
    %c0_2 = arith.constant 0 : index
    %1 = vector.load %arg2[%c0_1, %c0_2] : memref<64x8xf32, #tpu.memory_space<vmem>>, vector<64x8xf32>
    %c0_3 = arith.constant 0 : index
    %c0_4 = arith.constant 0 : index
    %2 = vector.load %arg7[%c0_3, %c0_4] : memref<128x832xf32, #tpu.memory_space<vmem>>, vector<128x832xf32>
    %cst = arith.constant dense<0.000000e+00> : vector<64x832xf32>
    %3 = tpu.matmul %0, %2, %cst {dimension_numbers = #tpu.dot_dimension_numbers<[1], [0], [0], [1], [0, 0, 1, 1], [], []>} : vector<64x128xf32>, vector<128x832xf32>, vector<64x832xf32> -> vector<64x832xf32>
    %4 = vector.extract_strided_slice %3 {offsets = [0, 0], sizes = [64, 512], strides = [1, 1]} : vector<64x832xf32> to vector<64x512xf32>
    %5 = vector.extract_strided_slice %3 {offsets = [0, 512], sizes = [64, 320], strides = [1, 1]} : vector<64x832xf32> to vector<64x320xf32>
    %c0_5 = arith.constant 0 : index
    %c0_6 = arith.constant 0 : index
    %6 = vector.load %arg11[%c0_5, %c0_6] : memref<8x512xf32, #tpu.memory_space<vmem>>, vector<8x512xf32>
    %cst_7 = arith.constant dense<0.000000e+00> : vector<64x512xf32>
    %7 = tpu.matmul %1, %6, %cst_7 {dimension_numbers = #tpu.dot_dimension_numbers<[1], [0], [0], [1], [0, 0, 1, 1], [], []>} : vector<64x8xf32>, vector<8x512xf32>, vector<64x512xf32> -> vector<64x512xf32>
    %8 = arith.mulf %7, %4 : vector<64x512xf32>
    %c0_8 = arith.constant 0 : index
    %c0_9 = arith.constant 0 : index
    %9 = vector.load %arg12[%c0_8, %c0_9] : memref<512x128xf32, #tpu.memory_space<vmem>>, vector<512x128xf32>
    %cst_10 = arith.constant dense<0.000000e+00> : vector<64x128xf32>
    %10 = tpu.matmul %8, %9, %cst_10 {dimension_numbers = #tpu.dot_dimension_numbers<[1], [0], [0], [1], [0, 0, 1, 1], [], []>} : vector<64x512xf32>, vector<512x128xf32>, vector<64x128xf32> -> vector<64x128xf32>
    %c0_11 = arith.constant 0 : index
    %c0_12 = arith.constant 0 : index
    %11 = vector.load %arg5[%c0_11, %c0_12] : memref<256x1xi32, #tpu.memory_space<vmem>>, vector<256x1xi32>
    %c0_13 = arith.constant 0 : index
    %c0_14 = arith.constant 0 : index
    %c0_15 = arith.constant 0 : index
    %12 = vector.load %arg6[%c0_13, %c0_14, %c0_15] : memref<1x1x256xi32, #tpu.memory_space<vmem>>, vector<1x1x256xi32>
    %13 = vector.shape_cast %12 : vector<1x1x256xi32> to vector<1x256xi32>
    %14 = tpu.iota {dimensions = array<i32: 1>} : vector<256x64xi32>
    %15 = vector.broadcast %11 : vector<256x1xi32> to vector<256x64xi32>
    %16 = arith.cmpi eq, %15, %14 : vector<256x64xi32>
    %17 = arith.extui %16 : vector<256x64xi1> to vector<256x64xi32>
    %18 = arith.sitofp %17 : vector<256x64xi32> to vector<256x64xf32>
    %19 = tpu.iota {dimensions = array<i32: 0>} : vector<64x256xi32>
    %20 = vector.broadcast %13 : vector<1x256xi32> to vector<64x256xi32>
    %21 = arith.cmpi eq, %19, %20 : vector<64x256xi32>
    %22 = arith.extui %21 : vector<64x256xi1> to vector<64x256xi32>
    %23 = arith.sitofp %22 : vector<64x256xi32> to vector<64x256xf32>
    %cst_16 = arith.constant dense<0.000000e+00> : vector<256x320xf32>
    %24 = tpu.matmul %18, %5, %cst_16 {dimension_numbers = #tpu.dot_dimension_numbers<[1], [0], [0], [1], [0, 0, 1, 1], [], []>} : vector<256x64xf32>, vector<64x320xf32>, vector<256x320xf32> -> vector<256x320xf32>
    %c0_17 = arith.constant 0 : index
    %c0_18 = arith.constant 0 : index
    %25 = vector.load %arg3[%c0_17, %c0_18] : memref<256x8xf32, #tpu.memory_space<vmem>>, vector<256x8xf32>
    %c0_19 = arith.constant 0 : index
    %c0_20 = arith.constant 0 : index
    %26 = vector.load %arg8[%c0_19, %c0_20] : memref<8x320xf32, #tpu.memory_space<vmem>>, vector<8x320xf32>
    %cst_21 = arith.constant dense<0.000000e+00> : vector<256x320xf32>
    %27 = tpu.matmul %25, %26, %cst_21 {dimension_numbers = #tpu.dot_dimension_numbers<[1], [0], [0], [1], [0, 0, 1, 1], [], []>} : vector<256x8xf32>, vector<8x320xf32>, vector<256x320xf32> -> vector<256x320xf32>
    %c0_22 = arith.constant 0 : index
    %c0_23 = arith.constant 0 : index
    %28 = vector.load %arg4[%c0_22, %c0_23] : memref<256x8xf32, #tpu.memory_space<vmem>>, vector<256x8xf32>
    %c0_24 = arith.constant 0 : index
    %c0_25 = arith.constant 0 : index
    %29 = vector.load %arg9[%c0_24, %c0_25] : memref<8x8xf32, #tpu.memory_space<vmem>>, vector<8x8xf32>
    %cst_26 = arith.constant dense<0.000000e+00> : vector<256x8xf32>
    %30 = tpu.matmul %28, %29, %cst_26 {dimension_numbers = #tpu.dot_dimension_numbers<[1], [0], [0], [1], [0, 0, 1, 1], [], []>} : vector<256x8xf32>, vector<8x8xf32>, vector<256x8xf32> -> vector<256x8xf32>
    %31 = arith.negf %30 : vector<256x8xf32>
    %32 = math.exp %31 : vector<256x8xf32>
    %cst_27 = arith.constant 1.000000e+00 : f32
    %33 = vector.broadcast %cst_27 : f32 to vector<256x8xf32>
    %34 = arith.addf %33, %32 : vector<256x8xf32>
    %35 = arith.divf %33, %34 : vector<256x8xf32>
    %36 = arith.mulf %30, %35 : vector<256x8xf32>
    %c0_28 = arith.constant 0 : index
    %c0_29 = arith.constant 0 : index
    %37 = vector.load %arg10[%c0_28, %c0_29] : memref<8x320xf32, #tpu.memory_space<vmem>>, vector<8x320xf32>
    %cst_30 = arith.constant dense<0.000000e+00> : vector<256x320xf32>
    %38 = tpu.matmul %36, %37, %cst_30 {dimension_numbers = #tpu.dot_dimension_numbers<[1], [0], [0], [1], [0, 0, 1, 1], [], []>} : vector<256x8xf32>, vector<8x320xf32>, vector<256x320xf32> -> vector<256x320xf32>
    %39 = arith.mulf %38, %24 : vector<256x320xf32>
    %40 = arith.mulf %39, %27 : vector<256x320xf32>
    %cst_31 = arith.constant dense<0.000000e+00> : vector<64x320xf32>
    %41 = tpu.matmul %23, %40, %cst_31 {dimension_numbers = #tpu.dot_dimension_numbers<[1], [0], [0], [1], [0, 0, 1, 1], [], []>} : vector<64x256xf32>, vector<256x320xf32>, vector<64x320xf32> -> vector<64x320xf32>
    %c0_32 = arith.constant 0 : index
    %c0_33 = arith.constant 0 : index
    %42 = vector.load %arg13[%c0_32, %c0_33] : memref<320x128xf32, #tpu.memory_space<vmem>>, vector<320x128xf32>
    %cst_34 = arith.constant dense<0.000000e+00> : vector<64x128xf32>
    %43 = tpu.matmul %41, %42, %cst_34 {dimension_numbers = #tpu.dot_dimension_numbers<[1], [0], [0], [1], [0, 0, 1, 1], [], []>} : vector<64x320xf32>, vector<320x128xf32>, vector<64x128xf32> -> vector<64x128xf32>
    %44 = arith.addf %43, %10 : vector<64x128xf32>
    %c0_35 = arith.constant 0 : index
    %c0_36 = arith.constant 0 : index
    %45 = vector.load %arg14[%c0_35, %c0_36] : memref<64x128xf32, #tpu.memory_space<vmem>>, vector<64x128xf32>
    tpu.vector_store %arg14[%c0_35, %c0_36], %44 {strides = array<i32>} : memref<64x128xf32, #tpu.memory_space<vmem>>, vector<64x128xf32>,
    return
  }
  func.func @transform_0(%arg0: i32) -> (i32, i32) {
    %c0_i32 = arith.constant 0 : i32
    %c0_i32_0 = arith.constant 0 : i32
    return %arg0, %c0_i32 : i32, i32
  }
  func.func @transform_1(%arg0: i32) -> (i32, i32) {
    %c0_i32 = arith.constant 0 : i32
    %c0_i32_0 = arith.constant 0 : i32
    return %arg0, %c0_i32 : i32, i32
  }
  func.func @transform_2(%arg0: i32) -> (i32, i32) {
    %c0_i32 = arith.constant 0 : i32
    %c0_i32_0 = arith.constant 0 : i32
    return %arg0, %c0_i32 : i32, i32
  }
  func.func @transform_3(%arg0: i32) -> (i32, i32) {
    %c0_i32 = arith.constant 0 : i32
    %c0_i32_0 = arith.constant 0 : i32
    return %arg0, %c0_i32 : i32, i32
  }
  func.func @transform_4(%arg0: i32) -> (i32, i32) {
    %c0_i32 = arith.constant 0 : i32
    %c0_i32_0 = arith.constant 0 : i32
    return %arg0, %c0_i32 : i32, i32
  }
  func.func @transform_5(%arg0: i32) -> (i32, i32, i32) {
    %c0_i32 = arith.constant 0 : i32
    %c0_i32_0 = arith.constant 0 : i32
    %c0_i32_1 = arith.constant 0 : i32
    return %arg0, %c0_i32, %c0_i32_0 : i32, i32, i32
  }
  func.func @transform_6(%arg0: i32) -> (i32, i32) {
    %c0_i32 = arith.constant 0 : i32
    %c0_i32_0 = arith.constant 0 : i32
    %c0_i32_1 = arith.constant 0 : i32
    return %c0_i32, %c0_i32_0 : i32, i32
  }
  func.func @transform_7(%arg0: i32) -> (i32, i32) {
    %c0_i32 = arith.constant 0 : i32
    %c0_i32_0 = arith.constant 0 : i32
    %c0_i32_1 = arith.constant 0 : i32
    return %c0_i32, %c0_i32_0 : i32, i32
  }
  func.func @transform_8(%arg0: i32) -> (i32, i32) {
    %c0_i32 = arith.constant 0 : i32
    %c0_i32_0 = arith.constant 0 : i32
    %c0_i32_1 = arith.constant 0 : i32
    return %c0_i32, %c0_i32_0 : i32, i32
  }
  func.func @transform_9(%arg0: i32) -> (i32, i32) {
    %c0_i32 = arith.constant 0 : i32
    %c0_i32_0 = arith.constant 0 : i32
    %c0_i32_1 = arith.constant 0 : i32
    return %c0_i32, %c0_i32_0 : i32, i32
  }
  func.func @transform_10(%arg0: i32) -> (i32, i32) {
    %c0_i32 = arith.constant 0 : i32
    %c0_i32_0 = arith.constant 0 : i32
    %c0_i32_1 = arith.constant 0 : i32
    return %c0_i32, %c0_i32_0 : i32, i32
  }
  func.func @transform_11(%arg0: i32) -> (i32, i32) {
    %c0_i32 = arith.constant 0 : i32
    %c0_i32_0 = arith.constant 0 : i32
    %c0_i32_1 = arith.constant 0 : i32
    return %c0_i32, %c0_i32_0 : i32, i32
  }
  func.func @transform_12(%arg0: i32) -> (i32, i32) {
    %c0_i32 = arith.constant 0 : i32
    %c0_i32_0 = arith.constant 0 : i32
    %c0_i32_1 = arith.constant 0 : i32
    return %c0_i32, %c0_i32_0 : i32, i32
  }
  func.func @transform_13(%arg0: i32) -> (i32, i32) {
    %c0_i32 = arith.constant 0 : i32
    %c0_i32_0 = arith.constant 0 : i32
    return %arg0, %c0_i32 : i32, i32
  }
}

</mosaic_0001>

<llo_original>
// kernel: interaction_block.1
$region0: #{interaction_block.1}
  #allocation0 [shape = 'u32[]', space=smem, size = 0x4, offset = 0x4, fixed_abs, tag = 'smem constant byte address 0x4 - core index']
  #allocation1 [shape = 'u32[144,128]{1,0:T(1,128)}', space=vmem, size = 0x12000, scoped, tag = 'internal scratch']
  %s0 = inlined_call_operand.vmem [shape: f32[128,128], index: 0, kind: input, shape index: {}]
  %s1 = inlined_call_operand.vmem [shape: f32[128,8], index: 1, kind: input, shape index: {}]
  %s2 = inlined_call_operand.vmem [shape: f32[512,8], index: 2, kind: input, shape index: {}]
  %s3 = inlined_call_operand.vmem [shape: f32[512,8], index: 3, kind: input, shape index: {}]
  %s4 = inlined_call_operand.vmem [shape: s32[512,1], index: 4, kind: input, shape index: {}]
  %s5 = inlined_call_operand.vmem [shape: s32[2,1,256], index: 5, kind: input, shape index: {}]
  %s6 = inlined_call_operand.vmem [shape: f32[128,832], index: 6, kind: input, shape index: {}]
  %s7 = inlined_call_operand.vmem [shape: f32[8,320], index: 7, kind: input, shape index: {}]
  %s8 = inlined_call_operand.vmem [shape: f32[8,8], index: 8, kind: input, shape index: {}]
  %s9 = inlined_call_operand.vmem [shape: f32[8,320], index: 9, kind: input, shape index: {}]
  %s10 = inlined_call_operand.vmem [shape: f32[8,512], index: 10, kind: input, shape index: {}]
  %s11 = inlined_call_operand.vmem [shape: f32[512,128], index: 11, kind: input, shape index: {}]
  %s12 = inlined_call_operand.vmem [shape: f32[320,128], index: 12, kind: input, shape index: {}]
  %s13 = inlined_call_operand.hbm [shape: f32[128,128], index: 13, kind: output, shape index: {}]
  %s14 = sld [smem:[#allocation0]]
  $region85: #{interaction_block.1} parent=0
    _
  %s16 = ssub.s32 1, %s14
  %s17 = scalar_select 0, %s16, %s14
  $region1: #{interaction_block.1} parent=0
    #allocation2 [shape = 'u8[65536]{0}', space=vmem, size = 0x10000, scoped, tag = 'output window, operand 0']
    #allocation3 [shape = 's32[2]{0}', space=sflag, size = 0x8, scoped, tag = 'scoped memory for interaction_block.1']
    %18 = vsyncpa [#allocation3], 0
    %s19 = scalar_lea.sflag [#allocation3], 1
    %20 = vsyncpa %s19, 0
    loop: start=0, step=1, limit=4
    $region2: #{interaction_block.1} parent=1 // loop_pre_header
      _
    $region3: #{interaction_block.1} parent=1 // loop_header
      %s22 = sphi 0, %s26
      %p23 = scmp.ge.s32.totalorder %s22, 4
      %s32 = sphi 0, %s34
      %s35 = sphi 0, %s32
      %s36 = sphi 0, %s35
      %s52 = sphi 0, %s36
      %s58 = sphi 0, %s60
      %s61 = sphi 0, %s58
      %s62 = sphi 0, %s61
      %s78 = sphi 0, %s62
      %s84 = sphi 0, %s86
      %s87 = sphi 0, %s84
      %s88 = sphi 0, %s87
      %s104 = sphi 0, %s88
      %s110 = sphi 0, %s112
      %s113 = sphi 0, %s110
      %s114 = sphi 0, %s113
      %s130 = sphi 0, %s114
      %s136 = sphi 0, %s138
      %s139 = sphi 0, %s136
      %s140 = sphi 0, %s139
      %s156 = sphi 0, %s140
      %s162 = sphi 0, %s164
      %s165 = sphi 0, %s162
      %s166 = sphi 0, %s165
      %s182 = sphi 0, %s166
      %s186 = sphi 0, %s186
      %s188 = sphi 0, %s186
      %s189 = sphi 0, %s188
      %s203 = sphi 0, %s189
      %s207 = sphi 0, %s207
      %s209 = sphi 0, %s207
      %s210 = sphi 0, %s209
      %s224 = sphi 0, %s210
      %s228 = sphi 0, %s228
      %s230 = sphi 0, %s228
      %s231 = sphi 0, %s230
      %s245 = sphi 0, %s231
      %s249 = sphi 0, %s249
      %s251 = sphi 0, %s249
      %s252 = sphi 0, %s251
      %s266 = sphi 0, %s252
      %s270 = sphi 0, %s270
      %s272 = sphi 0, %s270
      %s273 = sphi 0, %s272
      %s287 = sphi 0, %s273
      %s291 = sphi 0, %s291
      %s293 = sphi 0, %s291
      %s294 = sphi 0, %s293
      %s308 = sphi 0, %s294
      %s312 = sphi 0, %s312
      %s314 = sphi 0, %s312
      %s315 = sphi 0, %s314
      %s329 = sphi 0, %s315
      %s335 = sphi 0, %s337
      %s338 = sphi 0, %s335
      %s339 = sphi 0, %s338
      %s355 = sphi 0, %s339
    $region4: #{interaction_block.1} parent=1 // loop_header_branch
      %25 = sbr.rel (%p23) target = $region8
    $region5: #{interaction_block.1} parent=1 // loop_body
      %s27 = ssub.s32 %s22, 1
      %s28 = ssub.s32 %s22, 2
      %s29 = sadd.s32 %s22, 1
      %s30 = ssub.s32 %s22, %s29
      %p31 = scmp.eq.s32.totalorder %s30, 0
      %s33 = sadd.s32 %s32, 1
      %s34 = scalar_select %p31, %s32, %s33
      %p37 = pneg %p31
      %p38 = scmp.eq.s32.totalorder %s22, 1
      %p39 = por %p37, %p38
      %p40 = scmp.ne.s32.totalorder %s32, %s35
      %p41 = scmp.eq.s32.totalorder %s22, 0
      %p42 = por %p40, %p41
      %p43 = scmp.ne.s32.totalorder %s32, %s35
      %p44 = scmp.eq.s32.totalorder %s27, 1
      %p45 = por %p43, %p44
      %p46 = scmp.ne.s32.totalorder %s35, %s36
      %p47 = scmp.eq.s32.totalorder %s27, 0
      %p48 = por %p46, %p47
      %p49 = scmp.ne.s32.totalorder %s35, %s36
      %p50 = scmp.eq.s32.totalorder %s28, 1
      %p51 = por %p49, %p50
      %p53 = scmp.ne.s32.totalorder %s36, %s52
      %p54 = scmp.eq.s32.totalorder %s28, 0
      %p55 = por %p53, %p54
      %s56 = ssub.s32 %s22, %s29
      %p57 = scmp.eq.s32.totalorder %s56, 0
      %s59 = sadd.s32 %s58, 1
      %s60 = scalar_select %p57, %s58, %s59
      %p63 = pneg %p57
      %p64 = scmp.eq.s32.totalorder %s22, 1
      %p65 = por %p63, %p64
      %p66 = scmp.ne.s32.totalorder %s58, %s61
      %p67 = scmp.eq.s32.totalorder %s22, 0
      %p68 = por %p66, %p67
      %p69 = scmp.ne.s32.totalorder %s58, %s61
      %p70 = scmp.eq.s32.totalorder %s27, 1
      %p71 = por %p69, %p70
      %p72 = scmp.ne.s32.totalorder %s61, %s62
      %p73 = scmp.eq.s32.totalorder %s27, 0
      %p74 = por %p72, %p73
      %p75 = scmp.ne.s32.totalorder %s61, %s62
      %p76 = scmp.eq.s32.totalorder %s28, 1
      %p77 = por %p75, %p76
      %p79 = scmp.ne.s32.totalorder %s62, %s78
      %p80 = scmp.eq.s32.totalorder %s28, 0
      %p81 = por %p79, %p80
      %s82 = ssub.s32 %s22, %s29
      %p83 = scmp.eq.s32.totalorder %s82, 0
      %s85 = sadd.s32 %s84, 1
      %s86 = scalar_select %p83, %s84, %s85
      %p89 = pneg %p83
      %p90 = scmp.eq.s32.totalorder %s22, 1
      %p91 = por %p89, %p90
      %p92 = scmp.ne.s32.totalorder %s84, %s87
      %p93 = scmp.eq.s32.totalorder %s22, 0
      %p94 = por %p92, %p93
      %p95 = scmp.ne.s32.totalorder %s84, %s87
      %p96 = scmp.eq.s32.totalorder %s27, 1
      %p97 = por %p95, %p96
      %p98 = scmp.ne.s32.totalorder %s87, %s88
      %p99 = scmp.eq.s32.totalorder %s27, 0
      %p100 = por %p98, %p99
      %p101 = scmp.ne.s32.totalorder %s87, %s88
      %p102 = scmp.eq.s32.totalorder %s28, 1
      %p103 = por %p101, %p102
      %p105 = scmp.ne.s32.totalorder %s88, %s104
      %p106 = scmp.eq.s32.totalorder %s28, 0
      %p107 = por %p105, %p106
      %s108 = ssub.s32 %s22, %s29
      %p109 = scmp.eq.s32.totalorder %s108, 0
      %s111 = sadd.s32 %s110, 1
      %s112 = scalar_select %p109, %s110, %s111
      %p115 = pneg %p109
      %p116 = scmp.eq.s32.totalorder %s22, 1
      %p117 = por %p115, %p116
      %p118 = scmp.ne.s32.totalorder %s110, %s113
      %p119 = scmp.eq.s32.totalorder %s22, 0
      %p120 = por %p118, %p119
      %p121 = scmp.ne.s32.totalorder %s110, %s113
      %p122 = scmp.eq.s32.totalorder %s27, 1
      %p123 = por %p121, %p122
      %p124 = scmp.ne.s32.totalorder %s113, %s114
      %p125 = scmp.eq.s32.totalorder %s27, 0
      %p126 = por %p124, %p125
      %p127 = scmp.ne.s32.totalorder %s113, %s114
      %p128 = scmp.eq.s32.totalorder %s28, 1
      %p129 = por %p127, %p128
      %p131 = scmp.ne.s32.totalorder %s114, %s130
      %p132 = scmp.eq.s32.totalorder %s28, 0
      %p133 = por %p131, %p132
      %s134 = ssub.s32 %s22, %s29
      %p135 = scmp.eq.s32.totalorder %s134, 0
      %s137 = sadd.s32 %s136, 1
      %s138 = scalar_select %p135, %s136, %s137
      %p141 = pneg %p135
      %p142 = scmp.eq.s32.totalorder %s22, 1
      %p143 = por %p141, %p142
      %p144 = scmp.ne.s32.totalorder %s136, %s139
      %p145 = scmp.eq.s32.totalorder %s22, 0
      %p146 = por %p144, %p145
      %p147 = scmp.ne.s32.totalorder %s136, %s139
      %p148 = scmp.eq.s32.totalorder %s27, 1
      %p149 = por %p147, %p148
      %p150 = scmp.ne.s32.totalorder %s139, %s140
      %p151 = scmp.eq.s32.totalorder %s27, 0
      %p152 = por %p150, %p151
      %p153 = scmp.ne.s32.totalorder %s139, %s140
      %p154 = scmp.eq.s32.totalorder %s28, 1
      %p155 = por %p153, %p154
      %p157 = scmp.ne.s32.totalorder %s140, %s156
      %p158 = scmp.eq.s32.totalorder %s28, 0
      %p159 = por %p157, %p158
      %s160 = ssub.s32 %s22, %s29
      %p161 = scmp.eq.s32.totalorder %s160, 0
      %s163 = sadd.s32 %s162, 1
      %s164 = scalar_select %p161, %s162, %s163
      %p167 = pneg %p161
      %p168 = scmp.eq.s32.totalorder %s22, 1
      %p169 = por %p167, %p168
      %p170 = scmp.ne.s32.totalorder %s162, %s165
      %p171 = scmp.eq.s32.totalorder %s22, 0
      %p172 = por %p170, %p171
      %p173 = scmp.ne.s32.totalorder %s162, %s165
      %p174 = scmp.eq.s32.totalorder %s27, 1
      %p175 = por %p173, %p174
      %p176 = scmp.ne.s32.totalorder %s165, %s166
      %p177 = scmp.eq.s32.totalorder %s27, 0
      %p178 = por %p176, %p177
      %p179 = scmp.ne.s32.totalorder %s165, %s166
      %p180 = scmp.eq.s32.totalorder %s28, 1
      %p181 = por %p179, %p180
      %p183 = scmp.ne.s32.totalorder %s166, %s182
      %p184 = scmp.eq.s32.totalorder %s28, 0
      %p185 = por %p183, %p184
      %s187 = sadd.s32 %s186, 1
      %p190 = scmp.eq.s32.totalorder %s22, 1
      %p191 = scmp.ne.s32.totalorder %s186, %s188
      %p192 = scmp.eq.s32.totalorder %s22, 0
      %p193 = por %p191, %p192
      %p194 = scmp.ne.s32.totalorder %s186, %s188
      %p195 = scmp.eq.s32.totalorder %s27, 1
      %p196 = por %p194, %p195
      %p197 = scmp.ne.s32.totalorder %s188, %s189
      %p198 = scmp.eq.s32.totalorder %s27, 0
      %p199 = por %p197, %p198
      %p200 = scmp.ne.s32.totalorder %s188, %s189
      %p201 = scmp.eq.s32.totalorder %s28, 1
      %p202 = por %p200, %p201
      %p204 = scmp.ne.s32.totalorder %s189, %s203
      %p205 = scmp.eq.s32.totalorder %s28, 0
      %p206 = por %p204, %p205
      %s208 = sadd.s32 %s207, 1
      %p211 = scmp.eq.s32.totalorder %s22, 1
      %p212 = scmp.ne.s32.totalorder %s207, %s209
      %p213 = scmp.eq.s32.totalorder %s22, 0
      %p214 = por %p212, %p213
      %p215 = scmp.ne.s32.totalorder %s207, %s209
      %p216 = scmp.eq.s32.totalorder %s27, 1
      %p217 = por %p215, %p216
      %p218 = scmp.ne.s32.totalorder %s209, %s210
      %p219 = scmp.eq.s32.totalorder %s27, 0
      %p220 = por %p218, %p219
      %p221 = scmp.ne.s32.totalorder %s209, %s210
      %p222 = scmp.eq.s32.totalorder %s28, 1
      %p223 = por %p221, %p222
      %p225 = scmp.ne.s32.totalorder %s210, %s224
      %p226 = scmp.eq.s32.totalorder %s28, 0
      %p227 = por %p225, %p226
      %s229 = sadd.s32 %s228, 1
      %p232 = scmp.eq.s32.totalorder %s22, 1
      %p233 = scmp.ne.s32.totalorder %s228, %s230
      %p234 = scmp.eq.s32.totalorder %s22, 0
      %p235 = por %p233, %p234
      %p236 = scmp.ne.s32.totalorder %s228, %s230
      %p237 = scmp.eq.s32.totalorder %s27, 1
      %p238 = por %p236, %p237
      %p239 = scmp.ne.s32.totalorder %s230, %s231
      %p240 = scmp.eq.s32.totalorder %s27, 0
      %p241 = por %p239, %p240
      %p242 = scmp.ne.s32.totalorder %s230, %s231
      %p243 = scmp.eq.s32.totalorder %s28, 1
      %p244 = por %p242, %p243
      %p246 = scmp.ne.s32.totalorder %s231, %s245
      %p247 = scmp.eq.s32.totalorder %s28, 0
      %p248 = por %p246, %p247
      %s250 = sadd.s32 %s249, 1
      %p253 = scmp.eq.s32.totalorder %s22, 1
      %p254 = scmp.ne.s32.totalorder %s249, %s251
      %p255 = scmp.eq.s32.totalorder %s22, 0
      %p256 = por %p254, %p255
      %p257 = scmp.ne.s32.totalorder %s249, %s251
      %p258 = scmp.eq.s32.totalorder %s27, 1
      %p259 = por %p257, %p258
      %p260 = scmp.ne.s32.totalorder %s251, %s252
      %p261 = scmp.eq.s32.totalorder %s27, 0
      %p262 = por %p260, %p261
      %p263 = scmp.ne.s32.totalorder %s251, %s252
      %p264 = scmp.eq.s32.totalorder %s28, 1
      %p265 = por %p263, %p264
      %p267 = scmp.ne.s32.totalorder %s252, %s266
      %p268 = scmp.eq.s32.totalorder %s28, 0
      %p269 = por %p267, %p268
      %s271 = sadd.s32 %s270, 1
      %p274 = scmp.eq.s32.totalorder %s22, 1
      %p275 = scmp.ne.s32.totalorder %s270, %s272
      %p276 = scmp.eq.s32.totalorder %s22, 0
      %p277 = por %p275, %p276
      %p278 = scmp.ne.s32.totalorder %s270, %s272
      %p279 = scmp.eq.s32.totalorder %s27, 1
      %p280 = por %p278, %p279
      %p281 = scmp.ne.s32.totalorder %s272, %s273
      %p282 = scmp.eq.s32.totalorder %s27, 0
      %p283 = por %p281, %p282
      %p284 = scmp.ne.s32.totalorder %s272, %s273
      %p285 = scmp.eq.s32.totalorder %s28, 1
      %p286 = por %p284, %p285
      %p288 = scmp.ne.s32.totalorder %s273, %s287
      %p289 = scmp.eq.s32.totalorder %s28, 0
      %p290 = por %p288, %p289
      %s292 = sadd.s32 %s291, 1
      %p295 = scmp.eq.s32.totalorder %s22, 1
      %p296 = scmp.ne.s32.totalorder %s291, %s293
      %p297 = scmp.eq.s32.totalorder %s22, 0
      %p298 = por %p296, %p297
      %p299 = scmp.ne.s32.totalorder %s291, %s293
      %p300 = scmp.eq.s32.totalorder %s27, 1
      %p301 = por %p299, %p300
      %p302 = scmp.ne.s32.totalorder %s293, %s294
      %p303 = scmp.eq.s32.totalorder %s27, 0
      %p304 = por %p302, %p303
      %p305 = scmp.ne.s32.totalorder %s293, %s294
      %p306 = scmp.eq.s32.totalorder %s28, 1
      %p307 = por %p305, %p306
      %p309 = scmp.ne.s32.totalorder %s294, %s308
      %p310 = scmp.eq.s32.totalorder %s28, 0
      %p311 = por %p309, %p310
      %s313 = sadd.s32 %s312, 1
      %p316 = scmp.eq.s32.totalorder %s22, 1
      %p317 = scmp.ne.s32.totalorder %s312, %s314
      %p318 = scmp.eq.s32.totalorder %s22, 0
      %p319 = por %p317, %p318
      %p320 = scmp.ne.s32.totalorder %s312, %s314
      %p321 = scmp.eq.s32.totalorder %s27, 1
      %p322 = por %p320, %p321
      %p323 = scmp.ne.s32.totalorder %s314, %s315
      %p324 = scmp.eq.s32.totalorder %s27, 0
      %p325 = por %p323, %p324
      %p326 = scmp.ne.s32.totalorder %s314, %s315
      %p327 = scmp.eq.s32.totalorder %s28, 1
      %p328 = por %p326, %p327
      %p330 = scmp.ne.s32.totalorder %s315, %s329
      %p331 = scmp.eq.s32.totalorder %s28, 0
      %p332 = por %p330, %p331
      %s333 = ssub.s32 %s22, %s29
      %p334 = scmp.eq.s32.totalorder %s333, 0
      %s336 = sadd.s32 %s335, 1
      %s337 = scalar_select %p334, %s335, %s336
      %p340 = pneg %p334
      %p341 = scmp.eq.s32.totalorder %s22, 1
      %p342 = por %p340, %p341
      %p343 = scmp.ne.s32.totalorder %s335, %s338
      %p344 = scmp.eq.s32.totalorder %s22, 0
      %p345 = por %p343, %p344
      %p346 = scmp.ne.s32.totalorder %s335, %s338
      %p347 = scmp.eq.s32.totalorder %s27, 1
      %p348 = por %p346, %p347
      %p349 = scmp.ne.s32.totalorder %s338, %s339
      %p350 = scmp.eq.s32.totalorder %s27, 0
      %p351 = por %p349, %p350
      %p352 = scmp.ne.s32.totalorder %s338, %s339
      %p353 = scmp.eq.s32.totalorder %s28, 1
      %p354 = por %p352, %p353
      %p356 = scmp.ne.s32.totalorder %s339, %s355
      %p357 = scmp.eq.s32.totalorder %s28, 0
      %p358 = por %p356, %p357
      %p359 = scmp.le.s32.totalorder 1, %s22
      %p360 = scmp.lt.s32.totalorder %s22, 3
      %p361 = pnand %p359, %p360
      %p362 = pneg %p361
      // Predicated region
      $region9: #{interaction_block.1} parent=5 // pred_check
        _
      $region10: #{interaction_block.1} parent=5 // pred_check_branch
        %364 = sbr.rel (%p361) target = $region12
      $region11: #{interaction_block.1} parent=5 // pred_region
        %s365 = ssub.s32 %s22, 1
        // Predicated region
        $region13: #{interaction_block.1} parent=11 // pred_check
          %p366 = pneg %p199
        $region14: #{interaction_block.1} parent=11 // pred_check_branch
          %368 = sbr.rel (%p366) target = $region16
        $region15: #{interaction_block.1} parent=11 // pred_region
          _
        $region16: #{interaction_block.1} parent=11 // pred_fallthru
          _
        // Predicated region
        $region17: #{interaction_block.1} parent=11 // pred_check
          %p369 = pneg %p220
        $region18: #{interaction_block.1} parent=11 // pred_check_branch
          %371 = sbr.rel (%p369) target = $region20
        $region19: #{interaction_block.1} parent=11 // pred_region
          _
        $region20: #{interaction_block.1} parent=11 // pred_fallthru
          _
        // Predicated region
        $region21: #{interaction_block.1} parent=11 // pred_check
          %p372 = pneg %p241
        $region22: #{interaction_block.1} parent=11 // pred_check_branch
          %374 = sbr.rel (%p372) target = $region24
        $region23: #{interaction_block.1} parent=11 // pred_region
          _
        $region24: #{interaction_block.1} parent=11 // pred_fallthru
          _
        // Predicated region
        $region25: #{interaction_block.1} parent=11 // pred_check
          %p375 = pneg %p262
        $region26: #{interaction_block.1} parent=11 // pred_check_branch
          %377 = sbr.rel (%p375) target = $region28
        $region27: #{interaction_block.1} parent=11 // pred_region
          _
        $region28: #{interaction_block.1} parent=11 // pred_fallthru
          _
        // Predicated region
        $region29: #{interaction_block.1} parent=11 // pred_check
          %p378 = pneg %p283
        $region30: #{interaction_block.1} parent=11 // pred_check_branch
          %380 = sbr.rel (%p378) target = $region32
        $region31: #{interaction_block.1} parent=11 // pred_region
          _
        $region32: #{interaction_block.1} parent=11 // pred_fallthru
          _
        // Predicated region
        $region33: #{interaction_block.1} parent=11 // pred_check
          %p381 = pneg %p304
        $region34: #{interaction_block.1} parent=11 // pred_check_branch
          %383 = sbr.rel (%p381) target = $region36
        $region35: #{interaction_block.1} parent=11 // pred_region
          _
        $region36: #{interaction_block.1} parent=11 // pred_fallthru
          _
        // Predicated region
        $region37: #{interaction_block.1} parent=11 // pred_check
          %p384 = pneg %p325
        $region38: #{interaction_block.1} parent=11 // pred_check_branch
          %386 = sbr.rel (%p384) target = $region40
        $region39: #{interaction_block.1} parent=11 // pred_region
          _
        $region40: #{interaction_block.1} parent=11 // pred_fallthru
          _
      $region12: #{interaction_block.1} parent=5 // pred_fallthru
        _
      %p387 = scmp.lt.s32.totalorder %s22, 2
      // Predicated region
      $region41: #{interaction_block.1} parent=5 // pred_check
        %p388 = pneg %p387
      $region42: #{interaction_block.1} parent=5 // pred_check_branch
        %390 = sbr.rel (%p388) target = $region44
      $region43: #{interaction_block.1} parent=5 // pred_region
        // Predicated region
        $region45: #{interaction_block.1} parent=43 // pred_check
          %p391 = pneg %p42
        $region46: #{interaction_block.1} parent=43 // pred_check_branch
          %393 = sbr.rel (%p391) target = $region48
        $region47: #{interaction_block.1} parent=43 // pred_region
          %s394 = smul.u32 8, %s22
          %p395 = scmp.lt.s32.totalorder %s394, 15
          %s396 = scalar_select %p395, %s394, 15
          %s397 = smul.addr %s396, 8
          %s398 = scalar_lea.vmem %s0, %s397
          %s399 = smul.u32 8, %s22
        $region48: #{interaction_block.1} parent=43 // pred_fallthru
          _
        // Predicated region
        $region49: #{interaction_block.1} parent=43 // pred_check
          %p400 = pneg %p68
        $region50: #{interaction_block.1} parent=43 // pred_check_branch
          %402 = sbr.rel (%p400) target = $region52
        $region51: #{interaction_block.1} parent=43 // pred_region
          %s403 = smul.u32 8, %s22
          %p404 = scmp.lt.s32.totalorder %s403, 15
          %s405 = scalar_select %p404, %s403, 15
          %s406 = smul.addr %s405, 8
          %s407 = scalar_lea.vmem %s1, %s406
          %s408 = smul.u32 8, %s22
        $region52: #{interaction_block.1} parent=43 // pred_fallthru
          _
        // Predicated region
        $region53: #{interaction_block.1} parent=43 // pred_check
          %p409 = pneg %p94
        $region54: #{interaction_block.1} parent=43 // pred_check_branch
          %411 = sbr.rel (%p409) target = $region56
        $region55: #{interaction_block.1} parent=43 // pred_region
          %s412 = smul.u32 32, %s22
          %p413 = scmp.lt.s32.totalorder %s412, 63
          %s414 = scalar_select %p413, %s412, 63
          %s415 = smul.addr %s414, 8
          %s416 = scalar_lea.vmem %s2, %s415
          %s417 = smul.u32 32, %s22
        $region56: #{interaction_block.1} parent=43 // pred_fallthru
          _
        // Predicated region
        $region57: #{interaction_block.1} parent=43 // pred_check
          %p418 = pneg %p120
        $region58: #{interaction_block.1} parent=43 // pred_check_branch
          %420 = sbr.rel (%p418) target = $region60
        $region59: #{interaction_block.1} parent=43 // pred_region
          %s421 = smul.u32 32, %s22
          %p422 = scmp.lt.s32.totalorder %s421, 63
          %s423 = scalar_select %p422, %s421, 63
          %s424 = smul.addr %s423, 8
          %s425 = scalar_lea.vmem %s3, %s424
          %s426 = smul.u32 32, %s22
        $region60: #{interaction_block.1} parent=43 // pred_fallthru
          _
        // Predicated region
        $region61: #{interaction_block.1} parent=43 // pred_check
          %p427 = pneg %p146
        $region62: #{interaction_block.1} parent=43 // pred_check_branch
          %429 = sbr.rel (%p427) target = $region64
        $region63: #{interaction_block.1} parent=43 // pred_region
          %s430 = smul.u32 32, %s22
          %p431 = scmp.lt.s32.totalorder %s430, 63
          %s432 = scalar_select %p431, %s430, 63
          %s433 = smul.addr %s432, 8
          %s434 = scalar_lea.vmem %s4, %s433
          %s435 = smul.u32 32, %s22
        $region64: #{interaction_block.1} parent=43 // pred_fallthru
          _
        // Predicated region
        $region65: #{interaction_block.1} parent=43 // pred_check
          %p436 = pneg %p172
        $region66: #{interaction_block.1} parent=43 // pred_check_branch
          %438 = sbr.rel (%p436) target = $region68
        $region67: #{interaction_block.1} parent=43 // pred_region
          %p439 = scmp.lt.s32.totalorder %s22, 1
          %s440 = scalar_select %p439, %s22, 1
          %s441 = smul.addr %s440, 2
          %s442 = scalar_lea.vmem %s5, %s441
        $region68: #{interaction_block.1} parent=43 // pred_fallthru
          _
      $region44: #{interaction_block.1} parent=5 // pred_fallthru
        _
      %p443 = scmp.le.s32.totalorder 1, %s22
      %p444 = scmp.lt.s32.totalorder %s22, 3
      %p445 = pnand %p443, %p444
      %p446 = pneg %p445
      // Predicated region
      $region69: #{interaction_block.1} parent=5 // pred_check
        _
      $region70: #{interaction_block.1} parent=5 // pred_check_branch
        %448 = sbr.rel (%p445) target = $region72
      $region71: #{interaction_block.1} parent=5 // pred_region
        %s449 = ssub.s32 %s22, 1
        %s450 = smul.u32 8, %s27
        %p451 = scmp.lt.s32.totalorder %s450, 15
        %s452 = scalar_select %p451, %s450, 15
        %s453 = smul.addr %s452, 8
        %s454 = scalar_lea.vmem %s0, %s453
        %p455 = pneg %p48
        %p456 = pneg %p45
        %s457 = smul.u32 8, %s27
        %p458 = scmp.lt.s32.totalorder %s457, 15
        %s459 = scalar_select %p458, %s457, 15
        %s460 = smul.addr %s459, 8
        %s461 = scalar_lea.vmem %s1, %s460
        %p462 = pneg %p74
        %p463 = pneg %p71
        %s464 = smul.u32 32, %s27
        %p465 = scmp.lt.s32.totalorder %s464, 63
        %s466 = scalar_select %p465, %s464, 63
        %s467 = smul.addr %s466, 8
        %s468 = scalar_lea.vmem %s2, %s467
        %p469 = pneg %p100
        %p470 = pneg %p97
        %s471 = smul.u32 32, %s27
        %p472 = scmp.lt.s32.totalorder %s471, 63
        %s473 = scalar_select %p472, %s471, 63
        %s474 = smul.addr %s473, 8
        %s475 = scalar_lea.vmem %s3, %s474
        %p476 = pneg %p126
        %p477 = pneg %p123
        %s478 = smul.u32 32, %s27
        %p479 = scmp.lt.s32.totalorder %s478, 63
        %s480 = scalar_select %p479, %s478, 63
        %s481 = smul.addr %s480, 8
        %s482 = scalar_lea.vmem %s4, %s481
        %p483 = pneg %p152
        %p484 = pneg %p149
        %p485 = scmp.lt.s32.totalorder %s27, 1
        %s486 = scalar_select %p485, %s27, 1
        %s487 = smul.addr %s486, 2
        %s488 = scalar_lea.vmem %s5, %s487
        %p489 = pneg %p178
        %p490 = pneg %p175
        %p491 = pneg %p199
        %p492 = pneg %p196
        %p493 = pneg %p220
        %p494 = pneg %p217
        %p495 = pneg %p241
        %p496 = pneg %p238
        %p497 = pneg %p262
        %p498 = pneg %p259
        %p499 = pneg %p283
        %p500 = pneg %p280
        %p501 = pneg %p304
        %p502 = pneg %p301
        %p503 = pneg %p325
        %p504 = pneg %p322
        %p505 = pneg %p351
        %p506 = pneg %p348
        %s507 = sand.u32 %s338, 1
        %s508 = scalar_lea.sflag [#allocation3], %s507
        %s509 = sand.u32 %s338, 1
        %s510 = smul.addr %s509, 64
        %s511 = scalar_lea.vmem [#allocation2], %s510
        %s512 = smul.u32 8, %s27
        %p513 = scmp.lt.s32.totalorder %s512, 15
        %s514 = scalar_select %p513, %s512, 15
        %s515 = smul.addr %s514, 8
        %s516 = scalar_lea.vmem %s0, %s515
        %s517 = smul.u32 8, %s27
        %s518 = smul.u32 8, %s27
        %p519 = scmp.lt.s32.totalorder %s518, 15
        %s520 = scalar_select %p519, %s518, 15
        %s521 = smul.addr %s520, 8
        %s522 = scalar_lea.vmem %s1, %s521
        %s523 = smul.u32 8, %s27
        %s524 = smul.u32 32, %s27
        %p525 = scmp.lt.s32.totalorder %s524, 63
        %s526 = scalar_select %p525, %s524, 63
        %s527 = smul.addr %s526, 8
        %s528 = scalar_lea.vmem %s2, %s527
        %s529 = smul.u32 32, %s27
        %s530 = smul.u32 32, %s27
        %p531 = scmp.lt.s32.totalorder %s530, 63
        %s532 = scalar_select %p531, %s530, 63
        %s533 = smul.addr %s532, 8
        %s534 = scalar_lea.vmem %s3, %s533
        %s535 = smul.u32 32, %s27
        %s536 = smul.u32 32, %s27
        %p537 = scmp.lt.s32.totalorder %s536, 63
        %s538 = scalar_select %p537, %s536, 63
        %s539 = smul.addr %s538, 8
        %s540 = scalar_lea.vmem %s4, %s539
        %s541 = smul.u32 32, %s27
        %p542 = scmp.lt.s32.totalorder %s27, 1
        %s543 = scalar_select %p542, %s27, 1
        %s544 = smul.addr %s543, 2
        %s545 = scalar_lea.vmem %s5, %s544
        %s546 = smul.u32 8, %s27
        %v547 = vld [vmem:[%s516] sm:$0xff]
        %v548 = vld [vmem:[%s516 + $0x8] sm:$0xff]
        %v549 = vld [vmem:[%s516 + $0x10] sm:$0xff]
        %v550 = vld [vmem:[%s516 + $0x18] sm:$0xff]
        %v551 = vld [vmem:[%s516 + $0x20] sm:$0xff]
        %v552 = vld [vmem:[%s516 + $0x28] sm:$0xff]
        %v553 = vld [vmem:[%s516 + $0x30] sm:$0xff]
        %v554 = vld [vmem:[%s516 + $0x38] sm:$0xff]
        %v555 = vld [vmem:[%s522] sm:$0xff]
        %v556 = vld [vmem:[%s522 + $0x8] sm:$0xff]
        %v557 = vld [vmem:[%s522 + $0x10] sm:$0xff]
        %v558 = vld [vmem:[%s522 + $0x18] sm:$0xff]
        %v559 = vld [vmem:[%s522 + $0x20] sm:$0xff]
        %v560 = vld [vmem:[%s522 + $0x28] sm:$0xff]
        %v561 = vld [vmem:[%s522 + $0x30] sm:$0xff]
        %v562 = vld [vmem:[%s522 + $0x38] sm:$0xff]
        %v563 = vld [vmem:[%s6] sm:$0xff]
        %v564 = vld [vmem:[%s6 + $0x8] sm:$0xff]
        %v565 = vld [vmem:[%s6 + $0x10] sm:$0xff]
        %v566 = vld [vmem:[%s6 + $0x18] sm:$0xff]
        %v567 = vld [vmem:[%s6 + $0x20] sm:$0xff]
        %v568 = vld [vmem:[%s6 + $0x28] sm:$0xff]
        %v569 = vld [vmem:[%s6 + $0x30] sm:$0xff]
        %v570 = vld [vmem:[%s6 + $0x38] sm:$0xff]
        %v571 = vld [vmem:[%s6 + $0x40] sm:$0xff]
        %v572 = vld [vmem:[%s6 + $0x48] sm:$0xff]
        %v573 = vld [vmem:[%s6 + $0x50] sm:$0xff]
        %v574 = vld [vmem:[%s6 + $0x58] sm:$0xff]
        %v575 = vld [vmem:[%s6 + $0x60] sm:$0xff]
        %v576 = vld [vmem:[%s6 + $0x68] sm:$0xff]
        %v577 = vld [vmem:[%s6 + $0x70] sm:$0xff]
        %v578 = vld [vmem:[%s6 + $0x78] sm:$0xff]
        %v579 = vld [vmem:[%s6 + $0x80] sm:$0xff]
        %v580 = vld [vmem:[%s6 + $0x88] sm:$0xff]
        %v581 = vld [vmem:[%s6 + $0x90] sm:$0xff]
        %v582 = vld [vmem:[%s6 + $0x98] sm:$0xff]
        %v583 = vld [vmem:[%s6 + $0xa0] sm:$0xff]
        %v584 = vld [vmem:[%s6 + $0xa8] sm:$0xff]
        %v585 = vld [vmem:[%s6 + $0xb0] sm:$0xff]
        %v586 = vld [vmem:[%s6 + $0xb8] sm:$0xff]
        %v587 = vld [vmem:[%s6 + $0xc0] sm:$0xff]
        %v588 = vld [vmem:[%s6 + $0xc8] sm:$0xff]
        %v589 = vld [vmem:[%s6 + $0xd0] sm:$0xff]
        %v590 = vld [vmem:[%s6 + $0xd8] sm:$0xff]
        %v591 = vld [vmem:[%s6 + $0xe0] sm:$0xff]
        %v592 = vld [vmem:[%s6 + $0xe8] sm:$0xff]
        %v593 = vld [vmem:[%s6 + $0xf0] sm:$0xff]
        %v594 = vld [vmem:[%s6 + $0xf8] sm:$0xff]
        %v595 = vld [vmem:[%s6 + $0x100] sm:$0xff]
        %v596 = vld [vmem:[%s6 + $0x108] sm:$0xff]
        %v597 = vld [vmem:[%s6 + $0x110] sm:$0xff]
        %v598 = vld [vmem:[%s6 + $0x118] sm:$0xff]
        %v599 = vld [vmem:[%s6 + $0x120] sm:$0xff]
        %v600 = vld [vmem:[%s6 + $0x128] sm:$0xff]
        %v601 = vld [vmem:[%s6 + $0x130] sm:$0xff]
        %v602 = vld [vmem:[%s6 + $0x138] sm:$0xff]
        %v603 = vld [vmem:[%s6 + $0x140] sm:$0xff]
        %v604 = vld [vmem:[%s6 + $0x148] sm:$0xff]
        %v605 = vld [vmem:[%s6 + $0x150] sm:$0xff]
        %v606 = vld [vmem:[%s6 + $0x158] sm:$0xff]
        %v607 = vld [vmem:[%s6 + $0x160] sm:$0xff]
        %v608 = vld [vmem:[%s6 + $0x168] sm:$0xff]
        %v609 = vld [vmem:[%s6 + $0x170] sm:$0xff]
        %v610 = vld [vmem:[%s6 + $0x178] sm:$0xff]
        %v611 = vld [vmem:[%s6 + $0x180] sm:$0xff]
        %v612 = vld [vmem:[%s6 + $0x188] sm:$0xff]
        %v613 = vld [vmem:[%s6 + $0x190] sm:$0xff]
        %v614 = vld [vmem:[%s6 + $0x198] sm:$0xff]
        %v615 = vld [vmem:[%s6 + $0x1a0] sm:$0xff]
        %v616 = vld [vmem:[%s6 + $0x1a8] sm:$0xff]
        %v617 = vld [vmem:[%s6 + $0x1b0] sm:$0xff]
        %v618 = vld [vmem:[%s6 + $0x1b8] sm:$0xff]
        %v619 = vld [vmem:[%s6 + $0x1c0] sm:$0xff]
        %v620 = vld [vmem:[%s6 + $0x1c8] sm:$0xff]
        %v621 = vld [vmem:[%s6 + $0x1d0] sm:$0xff]
        %v622 = vld [vmem:[%s6 + $0x1d8] sm:$0xff]
        %v623 = vld [vmem:[%s6 + $0x1e0] sm:$0xff]
        %v624 = vld [vmem:[%s6 + $0x1e8] sm:$0xff]
        %v625 = vld [vmem:[%s6 + $0x1f0] sm:$0xff]
        %v626 = vld [vmem:[%s6 + $0x1f8] sm:$0xff]
        %v627 = vld [vmem:[%s6 + $0x200] sm:$0xff]
        %v628 = vld [vmem:[%s6 + $0x208] sm:$0xff]
        %v629 = vld [vmem:[%s6 + $0x210] sm:$0xff]
        %v630 = vld [vmem:[%s6 + $0x218] sm:$0xff]
        %v631 = vld [vmem:[%s6 + $0x220] sm:$0xff]
        %v632 = vld [vmem:[%s6 + $0x228] sm:$0xff]
        %v633 = vld [vmem:[%s6 + $0x230] sm:$0xff]
        %v634 = vld [vmem:[%s6 + $0x238] sm:$0xff]
        %v635 = vld [vmem:[%s6 + $0x240] sm:$0xff]
        %v636 = vld [vmem:[%s6 + $0x248] sm:$0xff]
        %v637 = vld [vmem:[%s6 + $0x250] sm:$0xff]
        %v638 = vld [vmem:[%s6 + $0x258] sm:$0xff]
        %v639 = vld [vmem:[%s6 + $0x260] sm:$0xff]
        %v640 = vld [vmem:[%s6 + $0x268] sm:$0xff]
        %v641 = vld [vmem:[%s6 + $0x270] sm:$0xff]
        %v642 = vld [vmem:[%s6 + $0x278] sm:$0xff]
        %v643 = vld [vmem:[%s6 + $0x280] sm:$0xff]
        %v644 = vld [vmem:[%s6 + $0x288] sm:$0xff]
        %v645 = vld [vmem:[%s6 + $0x290] sm:$0xff]
        %v646 = vld [vmem:[%s6 + $0x298] sm:$0xff]
        %v647 = vld [vmem:[%s6 + $0x2a0] sm:$0xff]
        %v648 = vld [vmem:[%s6 + $0x2a8] sm:$0xff]
        %v649 = vld [vmem:[%s6 + $0x2b0] sm:$0xff]
        %v650 = vld [vmem:[%s6 + $0x2b8] sm:$0xff]
        %v651 = vld [vmem:[%s6 + $0x2c0] sm:$0xff]
        %v652 = vld [vmem:[%s6 + $0x2c8] sm:$0xff]
        %v653 = vld [vmem:[%s6 + $0x2d0] sm:$0xff]
        %v654 = vld [vmem:[%s6 + $0x2d8] sm:$0xff]
        %v655 = vld [vmem:[%s6 + $0x2e0] sm:$0xff]
        %v656 = vld [vmem:[%s6 + $0x2e8] sm:$0xff]
        %v657 = vld [vmem:[%s6 + $0x2f0] sm:$0xff]
        %v658 = vld [vmem:[%s6 + $0x2f8] sm:$0xff]
        %v659 = vld [vmem:[%s6 + $0x300] sm:$0xff]
        %v660 = vld [vmem:[%s6 + $0x308] sm:$0xff]
        %v661 = vld [vmem:[%s6 + $0x310] sm:$0xff]
        %v662 = vld [vmem:[%s6 + $0x318] sm:$0xff]
        %v663 = vld [vmem:[%s6 + $0x320] sm:$0xff]
        %v664 = vld [vmem:[%s6 + $0x328] sm:$0xff]
        %v665 = vld [vmem:[%s6 + $0x330] sm:$0xff]
        %v666 = vld [vmem:[%s6 + $0x338] sm:$0xff]
        %v667 = vld [vmem:[%s6 + $0x340] sm:$0xff]
        %v668 = vld [vmem:[%s6 + $0x348] sm:$0xff]
        %v669 = vld [vmem:[%s6 + $0x350] sm:$0xff]
        %v670 = vld [vmem:[%s6 + $0x358] sm:$0xff]
        %v671 = vld [vmem:[%s6 + $0x360] sm:$0xff]
        %v672 = vld [vmem:[%s6 + $0x368] sm:$0xff]
        %v673 = vld [vmem:[%s6 + $0x370] sm:$0xff]
        %v674 = vld [vmem:[%s6 + $0x378] sm:$0xff]
        %675 = vmatprep.subr.mxu0 %v564
        %676 = vmatpush1.msra.mxu0 %v563
        %677 = vmatprep.subr.mxu0 %v571
        %678 = vmatpush1.msra.mxu0 %v570
        %679 = vmatprep.subr.mxu0 %v578
        %680 = vmatpush1.msra.mxu0 %v577
        %681 = vmatprep.subr.mxu0 %v585
        %682 = vmatpush1.msra.mxu0 %v584
        %683 = vmatprep.subr.mxu0 %v592
        %684 = vmatpush1.msra.mxu0 %v591
        %685 = vmatprep.subr.mxu0 %v599
        %686 = vmatpush1.msra.mxu0 %v598
        %687 = vmatprep.subr.mxu0 %v606
        %688 = vmatpush1.msra.mxu0 %v605
        %689 = vmatprep.subr.mxu0 %v613
        %690 = vmatpush1.msra.mxu0 %v612
        %691 = vmatprep.subr.mxu0 %v620
        %692 = vmatpush1.msra.mxu0 %v619
        %693 = vmatprep.subr.mxu0 %v627
        %694 = vmatpush1.msra.mxu0 %v626
        %695 = vmatprep.subr.mxu0 %v634
        %696 = vmatpush1.msra.mxu0 %v633
        %697 = vmatprep.subr.mxu0 %v641
        %698 = vmatpush1.msra.mxu0 %v640
        %699 = vmatprep.subr.mxu0 %v648
        %700 = vmatpush1.msra.mxu0 %v647
        %701 = vmatprep.subr.mxu0 %v655
        %702 = vmatpush1.msra.mxu0 %v654
        %703 = vmatprep.subr.mxu0 %v662
        %704 = vmatpush1.msra.mxu0 %v661
        %705 = vmatprep.subr.mxu0 %v669
        %706 = vmatpush1.msra.mxu0 %v668
        %707 = vmatprep.subr.mxu0 0.0
        %708 = vmatpush1.msra.mxu0 0.0
        %709 = vmatprep.subr.mxu0 0.0
        %710 = vmatpush1.msra.mxu0 0.0
        %711 = vmatprep.subr.mxu0 0.0
        %712 = vmatpush1.msra.mxu0 0.0
        %713 = vmatprep.subr.mxu0 0.0
        %714 = vmatpush1.msra.mxu0 0.0
        %715 = vmatprep.subr.mxu0 0.0
        %716 = vmatpush1.msra.mxu0 0.0
        %717 = vmatprep.subr.mxu0 0.0
        %718 = vmatpush1.msra.mxu0 0.0
        %719 = vmatprep.subr.mxu0 0.0
        %720 = vmatpush1.msra.mxu0 0.0
        %721 = vmatprep.subr.mxu0 0.0
        %722 = vmatpush1.msra.mxu0 0.0
        %723 = vmatprep.subr.mxu0 0.0
        %724 = vmatpush1.msra.mxu0 0.0
        %725 = vmatprep.subr.mxu0 0.0
        %726 = vmatpush1.msra.mxu0 0.0
        %727 = vmatprep.subr.mxu0 0.0
        %728 = vmatpush1.msra.mxu0 0.0
        %729 = vmatprep.subr.mxu0 0.0
        %730 = vmatpush1.msra.mxu0 0.0
        %731 = vmatprep.subr.mxu0 0.0
        %732 = vmatpush1.msra.mxu0 0.0
        %733 = vmatprep.subr.mxu0 0.0
        %734 = vmatpush1.msra.mxu0 0.0
        %735 = vmatprep.subr.mxu0 0.0
        %736 = vmatpush1.msra.mxu0 0.0
        %737 = vmatprep.subr.mxu0 0.0
        %738 = vmatpush1.msra.mxu0 0.0
        %739 = vmatprep.mubr.f32.mxu0 0.0
        %740 = vmatmul.mubr.f32.gmra.mrb[0].mxu0 %v547
        %v741 = vpop.f32.mrb[0].mxu0
        %v742 = vadd.f32 0.0, %v741
        %v743 = vpop.f32.mrb[0].mxu0
        %v744 = vadd.f32 0.0, %v743
        %745 = vmatprep.mubr.f32.mxu0 0.0
        %746 = vmatmul.mubr.f32.gmra.mrb[0].mxu0 %v548
        %v747 = vpop.f32.mrb[0].mxu0
        %v748 = vadd.f32 0.0, %v747
        %v749 = vpop.f32.mrb[0].mxu0
        %v750 = vadd.f32 0.0, %v749
        %751 = vmatprep.mubr.f32.mxu0 0.0
        %752 = vmatmul.mubr.f32.gmra.mrb[0].mxu0 %v549
        %v753 = vpop.f32.mrb[0].mxu0
        %v754 = vadd.f32 0.0, %v753
        %v755 = vpop.f32.mrb[0].mxu0
        %v756 = vadd.f32 0.0, %v755
        %757 = vmatprep.mubr.f32.mxu0 0.0
        %758 = vmatmul.mubr.f32.gmra.mrb[0].mxu0 %v550
        %v759 = vpop.f32.mrb[0].mxu0
        %v760 = vadd.f32 0.0, %v759
        %v761 = vpop.f32.mrb[0].mxu0
        %v762 = vadd.f32 0.0, %v761
        %763 = vmatprep.mubr.f32.mxu0 0.0
        %764 = vmatmul.mubr.f32.gmra.mrb[0].mxu0 %v551
        %v765 = vpop.f32.mrb[0].mxu0
        %v766 = vadd.f32 0.0, %v765
        %v767 = vpop.f32.mrb[0].mxu0
        %v768 = vadd.f32 0.0, %v767
        %769 = vmatprep.mubr.f32.mxu0 0.0
        %770 = vmatmul.mubr.f32.gmra.mrb[0].mxu0 %v552
        %v771 = vpop.f32.mrb[0].mxu0
        %v772 = vadd.f32 0.0, %v771
        %v773 = vpop.f32.mrb[0].mxu0
        %v774 = vadd.f32 0.0, %v773
        %775 = vmatprep.mubr.f32.mxu0 0.0
        %776 = vmatmul.mubr.f32.gmra.mrb[0].mxu0 %v553
        %v777 = vpop.f32.mrb[0].mxu0
        %v778 = vadd.f32 0.0, %v777
        %v779 = vpop.f32.mrb[0].mxu0
        %v780 = vadd.f32 0.0, %v779
        %781 = vmatprep.mubr.f32.mxu0 0.0
        %782 = vmatmul.mubr.f32.gmra.mrb[0].mxu0 %v554
        %v783 = vpop.f32.mrb[0].mxu0
        %v784 = vadd.f32 0.0, %v783
        %v785 = vpop.f32.mrb[0].mxu0
        %v786 = vadd.f32 0.0, %v785
        %787 = vdwg.mxu0
        %788 = vmatprep.subr.mxu0 %v566
        %789 = vmatpush1.msra.mxu0 %v565
        %790 = vmatprep.subr.mxu0 %v573
        %791 = vmatpush1.msra.mxu0 %v572
        %792 = vmatprep.subr.mxu0 %v580
        %793 = vmatpush1.msra.mxu0 %v579
        %794 = vmatprep.subr.mxu0 %v587
        %795 = vmatpush1.msra.mxu0 %v586
        %796 = vmatprep.subr.mxu0 %v594
        %797 = vmatpush1.msra.mxu0 %v593
        %798 = vmatprep.subr.mxu0 %v601
        %799 = vmatpush1.msra.mxu0 %v600
        %800 = vmatprep.subr.mxu0 %v608
        %801 = vmatpush1.msra.mxu0 %v607
        %802 = vmatprep.subr.mxu0 %v615
        %803 = vmatpush1.msra.mxu0 %v614
        %804 = vmatprep.subr.mxu0 %v622
        %805 = vmatpush1.msra.mxu0 %v621
        %806 = vmatprep.subr.mxu0 %v629
        %807 = vmatpush1.msra.mxu0 %v628
        %808 = vmatprep.subr.mxu0 %v636
        %809 = vmatpush1.msra.mxu0 %v635
        %810 = vmatprep.subr.mxu0 %v643
        %811 = vmatpush1.msra.mxu0 %v642
        %812 = vmatprep.subr.mxu0 %v650
        %813 = vmatpush1.msra.mxu0 %v649
        %814 = vmatprep.subr.mxu0 %v657
        %815 = vmatpush1.msra.mxu0 %v656
        %816 = vmatprep.subr.mxu0 %v664
        %817 = vmatpush1.msra.mxu0 %v663
        %818 = vmatprep.subr.mxu0 %v671
        %819 = vmatpush1.msra.mxu0 %v670
        %820 = vmatprep.subr.mxu0 0.0
        %821 = vmatpush1.msra.mxu0 0.0
        %822 = vmatprep.subr.mxu0 0.0
        %823 = vmatpush1.msra.mxu0 0.0
        %824 = vmatprep.subr.mxu0 0.0
        %825 = vmatpush1.msra.mxu0 0.0
        %826 = vmatprep.subr.mxu0 0.0
        %827 = vmatpush1.msra.mxu0 0.0
        %828 = vmatprep.subr.mxu0 0.0
        %829 = vmatpush1.msra.mxu0 0.0
        %830 = vmatprep.subr.mxu0 0.0
        %831 = vmatpush1.msra.mxu0 0.0
        %832 = vmatprep.subr.mxu0 0.0
        %833 = vmatpush1.msra.mxu0 0.0
        %834 = vmatprep.subr.mxu0 0.0
        %835 = vmatpush1.msra.mxu0 0.0
        %836 = vmatprep.subr.mxu0 0.0
        %837 = vmatpush1.msra.mxu0 0.0
        %838 = vmatprep.subr.mxu0 0.0
        %839 = vmatpush1.msra.mxu0 0.0
        %840 = vmatprep.subr.mxu0 0.0
        %841 = vmatpush1.msra.mxu0 0.0
        %842 = vmatprep.subr.mxu0 0.0
        %843 = vmatpush1.msra.mxu0 0.0
        %844 = vmatprep.subr.mxu0 0.0
        %845 = vmatpush1.msra.mxu0 0.0
        %846 = vmatprep.subr.mxu0 0.0
        %847 = vmatpush1.msra.mxu0 0.0
        %848 = vmatprep.subr.mxu0 0.0
        %849 = vmatpush1.msra.mxu0 0.0
        %850 = vmatprep.subr.mxu0 0.0
        %851 = vmatpush1.msra.mxu0 0.0
        %852 = vmatprep.mubr.f32.mxu0 0.0
        %853 = vmatmul.mubr.f32.gmra.mrb[0].mxu0 %v547
        %v854 = vpop.f32.mrb[0].mxu0
        %v855 = vadd.f32 0.0, %v854
        %v856 = vpop.f32.mrb[0].mxu0
        %v857 = vadd.f32 0.0, %v856
        %858 = vmatprep.mubr.f32.mxu0 0.0
        %859 = vmatmul.mubr.f32.gmra.mrb[0].mxu0 %v548
        %v860 = vpop.f32.mrb[0].mxu0
        %v861 = vadd.f32 0.0, %v860
        %v862 = vpop.f32.mrb[0].mxu0
        %v863 = vadd.f32 0.0, %v862
        %864 = vmatprep.mubr.f32.mxu0 0.0
        %865 = vmatmul.mubr.f32.gmra.mrb[0].mxu0 %v549
        %v866 = vpop.f32.mrb[0].mxu0
        %v867 = vadd.f32 0.0, %v866
        %v868 = vpop.f32.mrb[0].mxu0
        %v869 = vadd.f32 0.0, %v868
        %870 = vmatprep.mubr.f32.mxu0 0.0
        %871 = vmatmul.mubr.f32.gmra.mrb[0].mxu0 %v550
        %v872 = vpop.f32.mrb[0].mxu0
        %v873 = vadd.f32 0.0, %v872
        %v874 = vpop.f32.mrb[0].mxu0
        %v875 = vadd.f32 0.0, %v874
        %876 = vmatprep.mubr.f32.mxu0 0.0
        %877 = vmatmul.mubr.f32.gmra.mrb[0].mxu0 %v551
        %v878 = vpop.f32.mrb[0].mxu0
        %v879 = vadd.f32 0.0, %v878
        %v880 = vpop.f32.mrb[0].mxu0
        %v881 = vadd.f32 0.0, %v880
        %882 = vmatprep.mubr.f32.mxu0 0.0
        %883 = vmatmul.mubr.f32.gmra.mrb[0].mxu0 %v552
        %v884 = vpop.f32.mrb[0].mxu0
        %v885 = vadd.f32 0.0, %v884
        %v886 = vpop.f32.mrb[0].mxu0
        %v887 = vadd.f32 0.0, %v886
        %888 = vmatprep.mubr.f32.mxu0 0.0
        %889 = vmatmul.mubr.f32.gmra.mrb[0].mxu0 %v553
        %v890 = vpop.f32.mrb[0].mxu0
        %v891 = vadd.f32 0.0, %v890
        %v892 = vpop.f32.mrb[0].mxu0
        %v893 = vadd.f32 0.0, %v892
        %894 = vmatprep.mubr.f32.mxu0 0.0
        %895 = vmatmul.mubr.f32.gmra.mrb[0].mxu0 %v554
        %v896 = vpop.f32.mrb[0].mxu0
        %v897 = vadd.f32 0.0, %v896
        %v898 = vpop.f32.mrb[0].mxu0
        %v899 = vadd.f32 0.0, %v898
        %900 = vdwg.mxu0
        %901 = vmatprep.subr.mxu0 %v568
        %902 = vmatpush1.msra.mxu0 %v567
        %903 = vmatprep.subr.mxu0 %v575
        %904 = vmatpush1.msra.mxu0 %v574
        %905 = vmatprep.subr.mxu0 %v582
        %906 = vmatpush1.msra.mxu0 %v581
        %907 = vmatprep.subr.mxu0 %v589
        %908 = vmatpush1.msra.mxu0 %v588
        %909 = vmatprep.subr.mxu0 %v596
        %910 = vmatpush1.msra.mxu0 %v595
        %911 = vmatprep.subr.mxu0 %v603
        %912 = vmatpush1.msra.mxu0 %v602
        %913 = vmatprep.subr.mxu0 %v610
        %914 = vmatpush1.msra.mxu0 %v609
        %915 = vmatprep.subr.mxu0 %v617
        %916 = vmatpush1.msra.mxu0 %v616
        %917 = vmatprep.subr.mxu0 %v624
        %918 = vmatpush1.msra.mxu0 %v623
        %919 = vmatprep.subr.mxu0 %v631
        %920 = vmatpush1.msra.mxu0 %v630
        %921 = vmatprep.subr.mxu0 %v638
        %922 = vmatpush1.msra.mxu0 %v637
        %923 = vmatprep.subr.mxu0 %v645
        %924 = vmatpush1.msra.mxu0 %v644
        %925 = vmatprep.subr.mxu0 %v652
        %926 = vmatpush1.msra.mxu0 %v651
        %927 = vmatprep.subr.mxu0 %v659
        %928 = vmatpush1.msra.mxu0 %v658
        %929 = vmatprep.subr.mxu0 %v666
        %930 = vmatpush1.msra.mxu0 %v665
        %931 = vmatprep.subr.mxu0 %v673
        %932 = vmatpush1.msra.mxu0 %v672
        %933 = vmatprep.subr.mxu0 0.0
        %934 = vmatpush1.msra.mxu0 0.0
        %935 = vmatprep.subr.mxu0 0.0
        %936 = vmatpush1.msra.mxu0 0.0
        %937 = vmatprep.subr.mxu0 0.0
        %938 = vmatpush1.msra.mxu0 0.0
        %939 = vmatprep.subr.mxu0 0.0
        %940 = vmatpush1.msra.mxu0 0.0
        %941 = vmatprep.subr.mxu0 0.0
        %942 = vmatpush1.msra.mxu0 0.0
        %943 = vmatprep.subr.mxu0 0.0
        %944 = vmatpush1.msra.mxu0 0.0
        %945 = vmatprep.subr.mxu0 0.0
        %946 = vmatpush1.msra.mxu0 0.0
        %947 = vmatprep.subr.mxu0 0.0
        %948 = vmatpush1.msra.mxu0 0.0
        %949 = vmatprep.subr.mxu0 0.0
        %950 = vmatpush1.msra.mxu0 0.0
        %951 = vmatprep.subr.mxu0 0.0
        %952 = vmatpush1.msra.mxu0 0.0
        %953 = vmatprep.subr.mxu0 0.0
        %954 = vmatpush1.msra.mxu0 0.0
        %955 = vmatprep.subr.mxu0 0.0
        %956 = vmatpush1.msra.mxu0 0.0
        %957 = vmatprep.subr.mxu0 0.0
        %958 = vmatpush1.msra.mxu0 0.0
        %959 = vmatprep.subr.mxu0 0.0
        %960 = vmatpush1.msra.mxu0 0.0
        %961 = vmatprep.subr.mxu0 0.0
        %962 = vmatpush1.msra.mxu0 0.0
        %963 = vmatprep.subr.mxu0 0.0
        %964 = vmatpush1.msra.mxu0 0.0
        %965 = vmatprep.mubr.f32.mxu0 0.0
        %966 = vmatmul.mubr.f32.gmra.mrb[0].mxu0 %v547
        %v967 = vpop.f32.mrb[0].mxu0
        %v968 = vadd.f32 0.0, %v967
        %v969 = vpop.f32.mrb[0].mxu0
        %v970 = vadd.f32 0.0, %v969
        %971 = vmatprep.mubr.f32.mxu0 0.0
        %972 = vmatmul.mubr.f32.gmra.mrb[0].mxu0 %v548
        %v973 = vpop.f32.mrb[0].mxu0
        %v974 = vadd.f32 0.0, %v973
        %v975 = vpop.f32.mrb[0].mxu0
        %v976 = vadd.f32 0.0, %v975
        %977 = vmatprep.mubr.f32.mxu0 0.0
        %978 = vmatmul.mubr.f32.gmra.mrb[0].mxu0 %v549
        %v979 = vpop.f32.mrb[0].mxu0
        %v980 = vadd.f32 0.0, %v979
        %v981 = vpop.f32.mrb[0].mxu0
        %v982 = vadd.f32 0.0, %v981
        %983 = vmatprep.mubr.f32.mxu0 0.0
        %984 = vmatmul.mubr.f32.gmra.mrb[0].mxu0 %v550
        %v985 = vpop.f32.mrb[0].mxu0
        %v986 = vadd.f32 0.0, %v985
        %v987 = vpop.f32.mrb[0].mxu0
        %v988 = vadd.f32 0.0, %v987
        %989 = vmatprep.mubr.f32.mxu0 0.0
        %990 = vmatmul.mubr.f32.gmra.mrb[0].mxu0 %v551
        %v991 = vpop.f32.mrb[0].mxu0
        %v992 = vadd.f32 0.0, %v991
        %v993 = vpop.f32.mrb[0].mxu0
        %v994 = vadd.f32 0.0, %v993
        %995 = vmatprep.mubr.f32.mxu0 0.0
        %996 = vmatmul.mubr.f32.gmra.mrb[0].mxu0 %v552
        %v997 = vpop.f32.mrb[0].mxu0
        %v998 = vadd.f32 0.0, %v997
        %v999 = vpop.f32.mrb[0].mxu0
        %v1000 = vadd.f32 0.0, %v999
        %1001 = vmatprep.mubr.f32.mxu0 0.0
        %1002 = vmatmul.mubr.f32.gmra.mrb[0].mxu0 %v553
        %v1003 = vpop.f32.mrb[0].mxu0
        %v1004 = vadd.f32 0.0, %v1003
        %v1005 = vpop.f32.mrb[0].mxu0
        %v1006 = vadd.f32 0.0, %v1005
        %1007 = vmatprep.mubr.f32.mxu0 0.0
        %1008 = vmatmul.mubr.f32.gmra.mrb[0].mxu0 %v554
        %v1009 = vpop.f32.mrb[0].mxu0
        %v1010 = vadd.f32 0.0, %v1009
        %v1011 = vpop.f32.mrb[0].mxu0
        %v1012 = vadd.f32 0.0, %v1011
        %1013 = vdwg.mxu0
        %1014 = vmatprep.subr.mxu0 0.0
        %1015 = vmatpush1.msra.mxu0 %v569
        %1016 = vmatprep.subr.mxu0 0.0
        %1017 = vmatpush1.msra.mxu0 %v576
        %1018 = vmatprep.subr.mxu0 0.0
        %1019 = vmatpush1.msra.mxu0 %v583
        %1020 = vmatprep.subr.mxu0 0.0
        %1021 = vmatpush1.msra.mxu0 %v590
        %1022 = vmatprep.subr.mxu0 0.0
        %1023 = vmatpush1.msra.mxu0 %v597
        %1024 = vmatprep.subr.mxu0 0.0
        %1025 = vmatpush1.msra.mxu0 %v604
        %1026 = vmatprep.subr.mxu0 0.0
        %1027 = vmatpush1.msra.mxu0 %v611
        %1028 = vmatprep.subr.mxu0 0.0
        %1029 = vmatpush1.msra.mxu0 %v618
        %1030 = vmatprep.subr.mxu0 0.0
        %1031 = vmatpush1.msra.mxu0 %v625
        %1032 = vmatprep.subr.mxu0 0.0
        %1033 = vmatpush1.msra.mxu0 %v632
        %1034 = vmatprep.subr.mxu0 0.0
        %1035 = vmatpush1.msra.mxu0 %v639
        %1036 = vmatprep.subr.mxu0 0.0
        %1037 = vmatpush1.msra.mxu0 %v646
        %1038 = vmatprep.subr.mxu0 0.0
        %1039 = vmatpush1.msra.mxu0 %v653
        %1040 = vmatprep.subr.mxu0 0.0
        %1041 = vmatpush1.msra.mxu0 %v660
        %1042 = vmatprep.subr.mxu0 0.0
        %1043 = vmatpush1.msra.mxu0 %v667
        %1044 = vmatprep.subr.mxu0 0.0
        %1045 = vmatpush1.msra.mxu0 %v674
        %1046 = vmatprep.subr.mxu0 0.0
        %1047 = vmatpush1.msra.mxu0 0.0
        %1048 = vmatprep.subr.mxu0 0.0
        %1049 = vmatpush1.msra.mxu0 0.0
        %1050 = vmatprep.subr.mxu0 0.0
        %1051 = vmatpush1.msra.mxu0 0.0
        %1052 = vmatprep.subr.mxu0 0.0
        %1053 = vmatpush1.msra.mxu0 0.0
        %1054 = vmatprep.subr.mxu0 0.0
        %1055 = vmatpush1.msra.mxu0 0.0
        %1056 = vmatprep.subr.mxu0 0.0
        %1057 = vmatpush1.msra.mxu0 0.0
        %1058 = vmatprep.subr.mxu0 0.0
        %1059 = vmatpush1.msra.mxu0 0.0
        %1060 = vmatprep.subr.mxu0 0.0
        %1061 = vmatpush1.msra.mxu0 0.0
        %1062 = vmatprep.subr.mxu0 0.0
        %1063 = vmatpush1.msra.mxu0 0.0
        %1064 = vmatprep.subr.mxu0 0.0
        %1065 = vmatpush1.msra.mxu0 0.0
        %1066 = vmatprep.subr.mxu0 0.0
        %1067 = vmatpush1.msra.mxu0 0.0
        %1068 = vmatprep.subr.mxu0 0.0
        %1069 = vmatpush1.msra.mxu0 0.0
        %1070 = vmatprep.subr.mxu0 0.0
        %1071 = vmatpush1.msra.mxu0 0.0
        %1072 = vmatprep.subr.mxu0 0.0
        %1073 = vmatpush1.msra.mxu0 0.0
        %1074 = vmatprep.subr.mxu0 0.0
        %1075 = vmatpush1.msra.mxu0 0.0
        %1076 = vmatprep.subr.mxu0 0.0
        %1077 = vmatpush1.msra.mxu0 0.0
        %1078 = vmatprep.mubr.f32.mxu0 0.0
        %1079 = vmatmul.mubr.f32.gmra.mrb[0].mxu0 %v547
        %v1080 = vpop.f32.mrb[0].mxu0
        %v1081 = vadd.f32 0.0, %v1080
        %v1082 = vpop.f32.mrb[0].mxu0
        %1083 = vmatprep.mubr.f32.mxu0 0.0
        %1084 = vmatmul.mubr.f32.gmra.mrb[0].mxu0 %v548
        %v1085 = vpop.f32.mrb[0].mxu0
        %v1086 = vadd.f32 0.0, %v1085
        %v1087 = vpop.f32.mrb[0].mxu0
        %1088 = vmatprep.mubr.f32.mxu0 0.0
        %1089 = vmatmul.mubr.f32.gmra.mrb[0].mxu0 %v549
        %v1090 = vpop.f32.mrb[0].mxu0
        %v1091 = vadd.f32 0.0, %v1090
        %v1092 = vpop.f32.mrb[0].mxu0
        %1093 = vmatprep.mubr.f32.mxu0 0.0
        %1094 = vmatmul.mubr.f32.gmra.mrb[0].mxu0 %v550
        %v1095 = vpop.f32.mrb[0].mxu0
        %v1096 = vadd.f32 0.0, %v1095
        %v1097 = vpop.f32.mrb[0].mxu0
        %1098 = vmatprep.mubr.f32.mxu0 0.0
        %1099 = vmatmul.mubr.f32.gmra.mrb[0].mxu0 %v551
        %v1100 = vpop.f32.mrb[0].mxu0
        %v1101 = vadd.f32 0.0, %v1100
        %v1102 = vpop.f32.mrb[0].mxu0
        %1103 = vmatprep.mubr.f32.mxu0 0.0
        %1104 = vmatmul.mubr.f32.gmra.mrb[0].mxu0 %v552
        %v1105 = vpop.f32.mrb[0].mxu0
        %v1106 = vadd.f32 0.0, %v1105
        %v1107 = vpop.f32.mrb[0].mxu0
        %1108 = vmatprep.mubr.f32.mxu0 0.0
        %1109 = vmatmul.mubr.f32.gmra.mrb[0].mxu0 %v553
        %v1110 = vpop.f32.mrb[0].mxu0
        %v1111 = vadd.f32 0.0, %v1110
        %v1112 = vpop.f32.mrb[0].mxu0
        %1113 = vmatprep.mubr.f32.mxu0 0.0
        %1114 = vmatmul.mubr.f32.gmra.mrb[0].mxu0 %v554
        %v1115 = vpop.f32.mrb[0].mxu0
        %v1116 = vadd.f32 0.0, %v1115
        %v1117 = vpop.f32.mrb[0].mxu0
        %1118 = vdwg.mxu0
        %v1119 = vld [vmem:[%s10] sm:$0xff]
        %v1120 = vld [vmem:[%s10 + $0x8] sm:$0xff]
        %v1121 = vld [vmem:[%s10 + $0x10] sm:$0xff]
        %v1122 = vld [vmem:[%s10 + $0x18] sm:$0xff]
        %vm1123 = vcmask 64512
        %v1125 = vsel %vm1123, %v555, 0
        %v1128 = vsel %vm1123, %v556, 0
        %v1131 = vsel %vm1123, %v557, 0
        %v1134 = vsel %vm1123, %v558, 0
        %v1137 = vsel %vm1123, %v559, 0
        %v1140 = vsel %vm1123, %v560, 0
        %v1143 = vsel %vm1123, %v561, 0
        %v1146 = vsel %vm1123, %v562, 0
        %1148 = vmatprep.subr.mxu0 %v1120
        %1149 = vmatpush1.msra.mxu0 %v1119
        %1150 = vmatprep.subr.mxu0 0.0
        %1151 = vmatpush1.msra.mxu0 0.0
        %1152 = vmatprep.subr.mxu0 0.0
        %1153 = vmatpush1.msra.mxu0 0.0
        %1154 = vmatprep.subr.mxu0 0.0
        %1155 = vmatpush1.msra.mxu0 0.0
        %1156 = vmatprep.subr.mxu0 0.0
        %1157 = vmatpush1.msra.mxu0 0.0
        %1158 = vmatprep.subr.mxu0 0.0
        %1159 = vmatpush1.msra.mxu0 0.0
        %1160 = vmatprep.subr.mxu0 0.0
        %1161 = vmatpush1.msra.mxu0 0.0
        %1162 = vmatprep.subr.mxu0 0.0
        %1163 = vmatpush1.msra.mxu0 0.0
        %1164 = vmatprep.subr.mxu0 0.0
        %1165 = vmatpush1.msra.mxu0 0.0
        %1166 = vmatprep.subr.mxu0 0.0
        %1167 = vmatpush1.msra.mxu0 0.0
        %1168 = vmatprep.subr.mxu0 0.0
        %1169 = vmatpush1.msra.mxu0 0.0
        %1170 = vmatprep.subr.mxu0 0.0
        %1171 = vmatpush1.msra.mxu0 0.0
        %1172 = vmatprep.subr.mxu0 0.0
        %1173 = vmatpush1.msra.mxu0 0.0
        %1174 = vmatprep.subr.mxu0 0.0
        %1175 = vmatpush1.msra.mxu0 0.0
        %1176 = vmatprep.subr.mxu0 0.0
        %1177 = vmatpush1.msra.mxu0 0.0
        %1178 = vmatprep.subr.mxu0 0.0
        %1179 = vmatpush1.msra.mxu0 0.0
        %1180 = vmatprep.subr.mxu0 0.0
        %1181 = vmatpush1.msra.mxu0 0.0
        %1182 = vmatprep.subr.mxu0 0.0
        %1183 = vmatpush1.msra.mxu0 0.0
        %1184 = vmatprep.subr.mxu0 0.0
        %1185 = vmatpush1.msra.mxu0 0.0
        %1186 = vmatprep.subr.mxu0 0.0
        %1187 = vmatpush1.msra.mxu0 0.0
        %1188 = vmatprep.subr.mxu0 0.0
        %1189 = vmatpush1.msra.mxu0 0.0
        %1190 = vmatprep.subr.mxu0 0.0
        %1191 = vmatpush1.msra.mxu0 0.0
        %1192 = vmatprep.subr.mxu0 0.0
        %1193 = vmatpush1.msra.mxu0 0.0
        %1194 = vmatprep.subr.mxu0 0.0
        %1195 = vmatpush1.msra.mxu0 0.0
        %1196 = vmatprep.subr.mxu0 0.0
        %1197 = vmatpush1.msra.mxu0 0.0
        %1198 = vmatprep.subr.mxu0 0.0
        %1199 = vmatpush1.msra.mxu0 0.0
        %1200 = vmatprep.subr.mxu0 0.0
        %1201 = vmatpush1.msra.mxu0 0.0
        %1202 = vmatprep.subr.mxu0 0.0
        %1203 = vmatpush1.msra.mxu0 0.0
        %1204 = vmatprep.subr.mxu0 0.0
        %1205 = vmatpush1.msra.mxu0 0.0
        %1206 = vmatprep.subr.mxu0 0.0
        %1207 = vmatpush1.msra.mxu0 0.0
        %1208 = vmatprep.subr.mxu0 0.0
        %1209 = vmatpush1.msra.mxu0 0.0
        %1210 = vmatprep.subr.mxu0 0.0
        %1211 = vmatpush1.msra.mxu0 0.0
        %1212 = vmatprep.mubr.f32.mxu0 0.0
        %1213 = vmatmul.mubr.f32.gmra.mrb[0].mxu0 %v1125
        %v1214 = vpop.f32.mrb[0].mxu0
        %v1215 = vadd.f32 0.0, %v1214
        %v1216 = vpop.f32.mrb[0].mxu0
        %v1217 = vadd.f32 0.0, %v1216
        %1218 = vmatprep.mubr.f32.mxu0 0.0
        %1219 = vmatmul.mubr.f32.gmra.mrb[0].mxu0 %v1128
        %v1220 = vpop.f32.mrb[0].mxu0
        %v1221 = vadd.f32 0.0, %v1220
        %v1222 = vpop.f32.mrb[0].mxu0
        %v1223 = vadd.f32 0.0, %v1222
        %1224 = vmatprep.mubr.f32.mxu0 0.0
        %1225 = vmatmul.mubr.f32.gmra.mrb[0].mxu0 %v1131
        %v1226 = vpop.f32.mrb[0].mxu0
        %v1227 = vadd.f32 0.0, %v1226
        %v1228 = vpop.f32.mrb[0].mxu0
        %v1229 = vadd.f32 0.0, %v1228
        %1230 = vmatprep.mubr.f32.mxu0 0.0
        %1231 = vmatmul.mubr.f32.gmra.mrb[0].mxu0 %v1134
        %v1232 = vpop.f32.mrb[0].mxu0
        %v1233 = vadd.f32 0.0, %v1232
        %v1234 = vpop.f32.mrb[0].mxu0
        %v1235 = vadd.f32 0.0, %v1234
        %1236 = vmatprep.mubr.f32.mxu0 0.0
        %1237 = vmatmul.mubr.f32.gmra.mrb[0].mxu0 %v1137
        %v1238 = vpop.f32.mrb[0].mxu0
        %v1239 = vadd.f32 0.0, %v1238
        %v1240 = vpop.f32.mrb[0].mxu0
        %v1241 = vadd.f32 0.0, %v1240
        %1242 = vmatprep.mubr.f32.mxu0 0.0
        %1243 = vmatmul.mubr.f32.gmra.mrb[0].mxu0 %v1140
        %v1244 = vpop.f32.mrb[0].mxu0
        %v1245 = vadd.f32 0.0, %v1244
        %v1246 = vpop.f32.mrb[0].mxu0
        %v1247 = vadd.f32 0.0, %v1246
        %1248 = vmatprep.mubr.f32.mxu0 0.0
        %1249 = vmatmul.mubr.f32.gmra.mrb[0].mxu0 %v1143
        %v1250 = vpop.f32.mrb[0].mxu0
        %v1251 = vadd.f32 0.0, %v1250
        %v1252 = vpop.f32.mrb[0].mxu0
        %v1253 = vadd.f32 0.0, %v1252
        %1254 = vmatprep.mubr.f32.mxu0 0.0
        %1255 = vmatmul.mubr.f32.gmra.mrb[0].mxu0 %v1146
        %v1256 = vpop.f32.mrb[0].mxu0
        %v1257 = vadd.f32 0.0, %v1256
        %v1258 = vpop.f32.mrb[0].mxu0
        %v1259 = vadd.f32 0.0, %v1258
        %1260 = vdwg.mxu0
        %1261 = vmatprep.subr.mxu0 %v1122
        %1262 = vmatpush1.msra.mxu0 %v1121
        %1263 = vmatprep.subr.mxu0 0.0
        %1264 = vmatpush1.msra.mxu0 0.0
        %1265 = vmatprep.subr.mxu0 0.0
        %1266 = vmatpush1.msra.mxu0 0.0
        %1267 = vmatprep.subr.mxu0 0.0
        %1268 = vmatpush1.msra.mxu0 0.0
        %1269 = vmatprep.subr.mxu0 0.0
        %1270 = vmatpush1.msra.mxu0 0.0
        %1271 = vmatprep.subr.mxu0 0.0
        %1272 = vmatpush1.msra.mxu0 0.0
        %1273 = vmatprep.subr.mxu0 0.0
        %1274 = vmatpush1.msra.mxu0 0.0
        %1275 = vmatprep.subr.mxu0 0.0
        %1276 = vmatpush1.msra.mxu0 0.0
        %1277 = vmatprep.subr.mxu0 0.0
        %1278 = vmatpush1.msra.mxu0 0.0
        %1279 = vmatprep.subr.mxu0 0.0
        %1280 = vmatpush1.msra.mxu0 0.0
        %1281 = vmatprep.subr.mxu0 0.0
        %1282 = vmatpush1.msra.mxu0 0.0
        %1283 = vmatprep.subr.mxu0 0.0
        %1284 = vmatpush1.msra.mxu0 0.0
        %1285 = vmatprep.subr.mxu0 0.0
        %1286 = vmatpush1.msra.mxu0 0.0
        %1287 = vmatprep.subr.mxu0 0.0
        %1288 = vmatpush1.msra.mxu0 0.0
        %1289 = vmatprep.subr.mxu0 0.0
        %1290 = vmatpush1.msra.mxu0 0.0
        %1291 = vmatprep.subr.mxu0 0.0
        %1292 = vmatpush1.msra.mxu0 0.0
        %1293 = vmatprep.subr.mxu0 0.0
        %1294 = vmatpush1.msra.mxu0 0.0
        %1295 = vmatprep.subr.mxu0 0.0
        %1296 = vmatpush1.msra.mxu0 0.0
        %1297 = vmatprep.subr.mxu0 0.0
        %1298 = vmatpush1.msra.mxu0 0.0
        %1299 = vmatprep.subr.mxu0 0.0
        %1300 = vmatpush1.msra.mxu0 0.0
        %1301 = vmatprep.subr.mxu0 0.0
        %1302 = vmatpush1.msra.mxu0 0.0
        %1303 = vmatprep.subr.mxu0 0.0
        %1304 = vmatpush1.msra.mxu0 0.0
        %1305 = vmatprep.subr.mxu0 0.0
        %1306 = vmatpush1.msra.mxu0 0.0
        %1307 = vmatprep.subr.mxu0 0.0
        %1308 = vmatpush1.msra.mxu0 0.0
        %1309 = vmatprep.subr.mxu0 0.0
        %1310 = vmatpush1.msra.mxu0 0.0
        %1311 = vmatprep.subr.mxu0 0.0
        %1312 = vmatpush1.msra.mxu0 0.0
        %1313 = vmatprep.subr.mxu0 0.0
        %1314 = vmatpush1.msra.mxu0 0.0
        %1315 = vmatprep.subr.mxu0 0.0
        %1316 = vmatpush1.msra.mxu0 0.0
        %1317 = vmatprep.subr.mxu0 0.0
        %1318 = vmatpush1.msra.mxu0 0.0
        %1319 = vmatprep.subr.mxu0 0.0
        %1320 = vmatpush1.msra.mxu0 0.0
        %1321 = vmatprep.subr.mxu0 0.0
        %1322 = vmatpush1.msra.mxu0 0.0
        %1323 = vmatprep.subr.mxu0 0.0
        %1324 = vmatpush1.msra.mxu0 0.0
        %1325 = vmatprep.mubr.f32.mxu0 0.0
        %1326 = vmatmul.mubr.f32.gmra.mrb[0].mxu0 %v1125
        %v1327 = vpop.f32.mrb[0].mxu0
        %v1328 = vadd.f32 0.0, %v1327
        %v1329 = vpop.f32.mrb[0].mxu0
        %v1330 = vadd.f32 0.0, %v1329
        %1331 = vmatprep.mubr.f32.mxu0 0.0
        %1332 = vmatmul.mubr.f32.gmra.mrb[0].mxu0 %v1128
        %v1333 = vpop.f32.mrb[0].mxu0
        %v1334 = vadd.f32 0.0, %v1333
        %v1335 = vpop.f32.mrb[0].mxu0
        %v1336 = vadd.f32 0.0, %v1335
        %1337 = vmatprep.mubr.f32.mxu0 0.0
        %1338 = vmatmul.mubr.f32.gmra.mrb[0].mxu0 %v1131
        %v1339 = vpop.f32.mrb[0].mxu0
        %v1340 = vadd.f32 0.0, %v1339
        %v1341 = vpop.f32.mrb[0].mxu0
        %v1342 = vadd.f32 0.0, %v1341
        %1343 = vmatprep.mubr.f32.mxu0 0.0
        %1344 = vmatmul.mubr.f32.gmra.mrb[0].mxu0 %v1134
        %v1345 = vpop.f32.mrb[0].mxu0
        %v1346 = vadd.f32 0.0, %v1345
        %v1347 = vpop.f32.mrb[0].mxu0
        %v1348 = vadd.f32 0.0, %v1347
        %1349 = vmatprep.mubr.f32.mxu0 0.0
        %1350 = vmatmul.mubr.f32.gmra.mrb[0].mxu0 %v1137
        %v1351 = vpop.f32.mrb[0].mxu0
        %v1352 = vadd.f32 0.0, %v1351
        %v1353 = vpop.f32.mrb[0].mxu0
        %v1354 = vadd.f32 0.0, %v1353
        %1355 = vmatprep.mubr.f32.mxu0 0.0
        %1356 = vmatmul.mubr.f32.gmra.mrb[0].mxu0 %v1140
        %v1357 = vpop.f32.mrb[0].mxu0
        %v1358 = vadd.f32 0.0, %v1357
        %v1359 = vpop.f32.mrb[0].mxu0
        %v1360 = vadd.f32 0.0, %v1359
        %1361 = vmatprep.mubr.f32.mxu0 0.0
        %1362 = vmatmul.mubr.f32.gmra.mrb[0].mxu0 %v1143
        %v1363 = vpop.f32.mrb[0].mxu0
        %v1364 = vadd.f32 0.0, %v1363
        %v1365 = vpop.f32.mrb[0].mxu0
        %v1366 = vadd.f32 0.0, %v1365
        %1367 = vmatprep.mubr.f32.mxu0 0.0
        %1368 = vmatmul.mubr.f32.gmra.mrb[0].mxu0 %v1146
        %v1369 = vpop.f32.mrb[0].mxu0
        %v1370 = vadd.f32 0.0, %v1369
        %v1371 = vpop.f32.mrb[0].mxu0
        %v1372 = vadd.f32 0.0, %v1371
        %1373 = vdwg.mxu0
        %v1374 = vmul.f32 %v1215, %v742
        %v1375 = vmul.f32 %v1217, %v744
        %v1376 = vmul.f32 %v1328, %v855
        %v1377 = vmul.f32 %v1330, %v857
        %v1378 = vmul.f32 %v1221, %v748
        %v1379 = vmul.f32 %v1223, %v750
        %v1380 = vmul.f32 %v1334, %v861
        %v1381 = vmul.f32 %v1336, %v863
        %v1382 = vmul.f32 %v1227, %v754
        %v1383 = vmul.f32 %v1229, %v756
        %v1384 = vmul.f32 %v1340, %v867
        %v1385 = vmul.f32 %v1342, %v869
        %v1386 = vmul.f32 %v1233, %v760
        %v1387 = vmul.f32 %v1235, %v762
        %v1388 = vmul.f32 %v1346, %v873
        %v1389 = vmul.f32 %v1348, %v875
        %v1390 = vmul.f32 %v1239, %v766
        %v1391 = vmul.f32 %v1241, %v768
        %v1392 = vmul.f32 %v1352, %v879
        %v1393 = vmul.f32 %v1354, %v881
        %v1394 = vmul.f32 %v1245, %v772
        %v1395 = vmul.f32 %v1247, %v774
        %v1396 = vmul.f32 %v1358, %v885
        %v1397 = vmul.f32 %v1360, %v887
        %v1398 = vmul.f32 %v1251, %v778
        %v1399 = vmul.f32 %v1253, %v780
        %v1400 = vmul.f32 %v1364, %v891
        %v1401 = vmul.f32 %v1366, %v893
        %v1402 = vmul.f32 %v1257, %v784
        %v1403 = vmul.f32 %v1259, %v786
        %v1404 = vmul.f32 %v1370, %v897
        %v1405 = vmul.f32 %v1372, %v899
        %v1406 = vld [vmem:[%s11] sm:$0xff]
        %v1407 = vld [vmem:[%s11 + $0x8] sm:$0xff]
        %v1408 = vld [vmem:[%s11 + $0x10] sm:$0xff]
        %v1409 = vld [vmem:[%s11 + $0x18] sm:$0xff]
        %v1410 = vld [vmem:[%s11 + $0x20] sm:$0xff]
        %v1411 = vld [vmem:[%s11 + $0x28] sm:$0xff]
        %v1412 = vld [vmem:[%s11 + $0x30] sm:$0xff]
        %v1413 = vld [vmem:[%s11 + $0x38] sm:$0xff]
        %v1414 = vld [vmem:[%s11 + $0x40] sm:$0xff]
        %v1415 = vld [vmem:[%s11 + $0x48] sm:$0xff]
        %v1416 = vld [vmem:[%s11 + $0x50] sm:$0xff]
        %v1417 = vld [vmem:[%s11 + $0x58] sm:$0xff]
        %v1418 = vld [vmem:[%s11 + $0x60] sm:$0xff]
        %v1419 = vld [vmem:[%s11 + $0x68] sm:$0xff]
        %v1420 = vld [vmem:[%s11 + $0x70] sm:$0xff]
        %v1421 = vld [vmem:[%s11 + $0x78] sm:$0xff]
        %v1422 = vld [vmem:[%s11 + $0x80] sm:$0xff]
        %v1423 = vld [vmem:[%s11 + $0x88] sm:$0xff]
        %v1424 = vld [vmem:[%s11 + $0x90] sm:$0xff]
        %v1425 = vld [vmem:[%s11 + $0x98] sm:$0xff]
        %v1426 = vld [vmem:[%s11 + $0xa0] sm:$0xff]
        %v1427 = vld [vmem:[%s11 + $0xa8] sm:$0xff]
        %v1428 = vld [vmem:[%s11 + $0xb0] sm:$0xff]
        %v1429 = vld [vmem:[%s11 + $0xb8] sm:$0xff]
        %v1430 = vld [vmem:[%s11 + $0xc0] sm:$0xff]
        %v1431 = vld [vmem:[%s11 + $0xc8] sm:$0xff]
        %v1432 = vld [vmem:[%s11 + $0xd0] sm:$0xff]
        %v1433 = vld [vmem:[%s11 + $0xd8] sm:$0xff]
        %v1434 = vld [vmem:[%s11 + $0xe0] sm:$0xff]
        %v1435 = vld [vmem:[%s11 + $0xe8] sm:$0xff]
        %v1436 = vld [vmem:[%s11 + $0xf0] sm:$0xff]
        %v1437 = vld [vmem:[%s11 + $0xf8] sm:$0xff]
        %v1438 = vld [vmem:[%s11 + $0x100] sm:$0xff]
        %v1439 = vld [vmem:[%s11 + $0x108] sm:$0xff]
        %v1440 = vld [vmem:[%s11 + $0x110] sm:$0xff]
        %v1441 = vld [vmem:[%s11 + $0x118] sm:$0xff]
        %v1442 = vld [vmem:[%s11 + $0x120] sm:$0xff]
        %v1443 = vld [vmem:[%s11 + $0x128] sm:$0xff]
        %v1444 = vld [vmem:[%s11 + $0x130] sm:$0xff]
        %v1445 = vld [vmem:[%s11 + $0x138] sm:$0xff]
        %v1446 = vld [vmem:[%s11 + $0x140] sm:$0xff]
        %v1447 = vld [vmem:[%s11 + $0x148] sm:$0xff]
        %v1448 = vld [vmem:[%s11 + $0x150] sm:$0xff]
        %v1449 = vld [vmem:[%s11 + $0x158] sm:$0xff]
        %v1450 = vld [vmem:[%s11 + $0x160] sm:$0xff]
        %v1451 = vld [vmem:[%s11 + $0x168] sm:$0xff]
        %v1452 = vld [vmem:[%s11 + $0x170] sm:$0xff]
        %v1453 = vld [vmem:[%s11 + $0x178] sm:$0xff]
        %v1454 = vld [vmem:[%s11 + $0x180] sm:$0xff]
        %v1455 = vld [vmem:[%s11 + $0x188] sm:$0xff]
        %v1456 = vld [vmem:[%s11 + $0x190] sm:$0xff]
        %v1457 = vld [vmem:[%s11 + $0x198] sm:$0xff]
        %v1458 = vld [vmem:[%s11 + $0x1a0] sm:$0xff]
        %v1459 = vld [vmem:[%s11 + $0x1a8] sm:$0xff]
        %v1460 = vld [vmem:[%s11 + $0x1b0] sm:$0xff]
        %v1461 = vld [vmem:[%s11 + $0x1b8] sm:$0xff]
        %v1462 = vld [vmem:[%s11 + $0x1c0] sm:$0xff]
        %v1463 = vld [vmem:[%s11 + $0x1c8] sm:$0xff]
        %v1464 = vld [vmem:[%s11 + $0x1d0] sm:$0xff]
        %v1465 = vld [vmem:[%s11 + $0x1d8] sm:$0xff]
        %v1466 = vld [vmem:[%s11 + $0x1e0] sm:$0xff]
        %v1467 = vld [vmem:[%s11 + $0x1e8] sm:$0xff]
        %v1468 = vld [vmem:[%s11 + $0x1f0] sm:$0xff]
        %v1469 = vld [vmem:[%s11 + $0x1f8] sm:$0xff]
        %1470 = vmatprep.subr.mxu0 0.0
        %1471 = vmatpush1.msra.mxu0 %v1406
        %1472 = vmatprep.subr.mxu0 0.0
        %1473 = vmatpush1.msra.mxu0 %v1407
        %1474 = vmatprep.subr.mxu0 0.0
        %1475 = vmatpush1.msra.mxu0 %v1408
        %1476 = vmatprep.subr.mxu0 0.0
        %1477 = vmatpush1.msra.mxu0 %v1409
        %1478 = vmatprep.subr.mxu0 0.0
        %1479 = vmatpush1.msra.mxu0 %v1410
        %1480 = vmatprep.subr.mxu0 0.0
        %1481 = vmatpush1.msra.mxu0 %v1411
        %1482 = vmatprep.subr.mxu0 0.0
        %1483 = vmatpush1.msra.mxu0 %v1412
        %1484 = vmatprep.subr.mxu0 0.0
        %1485 = vmatpush1.msra.mxu0 %v1413
        %1486 = vmatprep.subr.mxu0 0.0
        %1487 = vmatpush1.msra.mxu0 %v1414
        %1488 = vmatprep.subr.mxu0 0.0
        %1489 = vmatpush1.msra.mxu0 %v1415
        %1490 = vmatprep.subr.mxu0 0.0
        %1491 = vmatpush1.msra.mxu0 %v1416
        %1492 = vmatprep.subr.mxu0 0.0
        %1493 = vmatpush1.msra.mxu0 %v1417
        %1494 = vmatprep.subr.mxu0 0.0
        %1495 = vmatpush1.msra.mxu0 %v1418
        %1496 = vmatprep.subr.mxu0 0.0
        %1497 = vmatpush1.msra.mxu0 %v1419
        %1498 = vmatprep.subr.mxu0 0.0
        %1499 = vmatpush1.msra.mxu0 %v1420
        %1500 = vmatprep.subr.mxu0 0.0
        %1501 = vmatpush1.msra.mxu0 %v1421
        %1502 = vmatprep.subr.mxu0 0.0
        %1503 = vmatpush1.msra.mxu0 %v1422
        %1504 = vmatprep.subr.mxu0 0.0
        %1505 = vmatpush1.msra.mxu0 %v1423
        %1506 = vmatprep.subr.mxu0 0.0
        %1507 = vmatpush1.msra.mxu0 %v1424
        %1508 = vmatprep.subr.mxu0 0.0
        %1509 = vmatpush1.msra.mxu0 %v1425
        %1510 = vmatprep.subr.mxu0 0.0
        %1511 = vmatpush1.msra.mxu0 %v1426
        %1512 = vmatprep.subr.mxu0 0.0
        %1513 = vmatpush1.msra.mxu0 %v1427
        %1514 = vmatprep.subr.mxu0 0.0
        %1515 = vmatpush1.msra.mxu0 %v1428
        %1516 = vmatprep.subr.mxu0 0.0
        %1517 = vmatpush1.msra.mxu0 %v1429
        %1518 = vmatprep.subr.mxu0 0.0
        %1519 = vmatpush1.msra.mxu0 %v1430
        %1520 = vmatprep.subr.mxu0 0.0
        %1521 = vmatpush1.msra.mxu0 %v1431
        %1522 = vmatprep.subr.mxu0 0.0
        %1523 = vmatpush1.msra.mxu0 %v1432
        %1524 = vmatprep.subr.mxu0 0.0
        %1525 = vmatpush1.msra.mxu0 %v1433
        %1526 = vmatprep.subr.mxu0 0.0
        %1527 = vmatpush1.msra.mxu0 %v1434
        %1528 = vmatprep.subr.mxu0 0.0
        %1529 = vmatpush1.msra.mxu0 %v1435
        %1530 = vmatprep.subr.mxu0 0.0
        %1531 = vmatpush1.msra.mxu0 %v1436
        %1532 = vmatprep.subr.mxu0 0.0
        %1533 = vmatpush1.msra.mxu0 %v1437
        %1534 = vmatprep.mubr.f32.mxu0 %v1375
        %1535 = vmatmul.mubr.f32.gmra.mrb[0].mxu0 %v1374
        %v1536 = vpop.f32.mrb[0].mxu0
        %v1537 = vadd.f32 0.0, %v1536
        %v1538 = vpop.f32.mrb[0].mxu0
        %1539 = vmatprep.mubr.f32.mxu0 %v1379
        %1540 = vmatmul.mubr.f32.gmra.mrb[0].mxu0 %v1378
        %v1541 = vpop.f32.mrb[0].mxu0
        %v1542 = vadd.f32 0.0, %v1541
        %v1543 = vpop.f32.mrb[0].mxu0
        %1544 = vmatprep.mubr.f32.mxu0 %v1383
        %1545 = vmatmul.mubr.f32.gmra.mrb[0].mxu0 %v1382
        %v1546 = vpop.f32.mrb[0].mxu0
        %v1547 = vadd.f32 0.0, %v1546
        %v1548 = vpop.f32.mrb[0].mxu0
        %1549 = vmatprep.mubr.f32.mxu0 %v1387
        %1550 = vmatmul.mubr.f32.gmra.mrb[0].mxu0 %v1386
        %v1551 = vpop.f32.mrb[0].mxu0
        %v1552 = vadd.f32 0.0, %v1551
        %v1553 = vpop.f32.mrb[0].mxu0
        %1554 = vmatprep.mubr.f32.mxu0 %v1391
        %1555 = vmatmul.mubr.f32.gmra.mrb[0].mxu0 %v1390
        %v1556 = vpop.f32.mrb[0].mxu0
        %v1557 = vadd.f32 0.0, %v1556
        %v1558 = vpop.f32.mrb[0].mxu0
        %1559 = vmatprep.mubr.f32.mxu0 %v1395
        %1560 = vmatmul.mubr.f32.gmra.mrb[0].mxu0 %v1394
        %v1561 = vpop.f32.mrb[0].mxu0
        %v1562 = vadd.f32 0.0, %v1561
        %v1563 = vpop.f32.mrb[0].mxu0
        %1564 = vmatprep.mubr.f32.mxu0 %v1399
        %1565 = vmatmul.mubr.f32.gmra.mrb[0].mxu0 %v1398
        %v1566 = vpop.f32.mrb[0].mxu0
        %v1567 = vadd.f32 0.0, %v1566
        %v1568 = vpop.f32.mrb[0].mxu0
        %1569 = vmatprep.mubr.f32.mxu0 %v1403
        %1570 = vmatmul.mubr.f32.gmra.mrb[0].mxu0 %v1402
        %v1571 = vpop.f32.mrb[0].mxu0
        %v1572 = vadd.f32 0.0, %v1571
        %v1573 = vpop.f32.mrb[0].mxu0
        %1574 = vdwg.mxu0
        %1575 = vmatprep.subr.mxu0 0.0
        %1576 = vmatpush1.msra.mxu0 %v1438
        %1577 = vmatprep.subr.mxu0 0.0
        %1578 = vmatpush1.msra.mxu0 %v1439
        %1579 = vmatprep.subr.mxu0 0.0
        %1580 = vmatpush1.msra.mxu0 %v1440
        %1581 = vmatprep.subr.mxu0 0.0
        %1582 = vmatpush1.msra.mxu0 %v1441
        %1583 = vmatprep.subr.mxu0 0.0
        %1584 = vmatpush1.msra.mxu0 %v1442
        %1585 = vmatprep.subr.mxu0 0.0
        %1586 = vmatpush1.msra.mxu0 %v1443
        %1587 = vmatprep.subr.mxu0 0.0
        %1588 = vmatpush1.msra.mxu0 %v1444
        %1589 = vmatprep.subr.mxu0 0.0
        %1590 = vmatpush1.msra.mxu0 %v1445
        %1591 = vmatprep.subr.mxu0 0.0
        %1592 = vmatpush1.msra.mxu0 %v1446
        %1593 = vmatprep.subr.mxu0 0.0
        %1594 = vmatpush1.msra.mxu0 %v1447
        %1595 = vmatprep.subr.mxu0 0.0
        %1596 = vmatpush1.msra.mxu0 %v1448
        %1597 = vmatprep.subr.mxu0 0.0
        %1598 = vmatpush1.msra.mxu0 %v1449
        %1599 = vmatprep.subr.mxu0 0.0
        %1600 = vmatpush1.msra.mxu0 %v1450
        %1601 = vmatprep.subr.mxu0 0.0
        %1602 = vmatpush1.msra.mxu0 %v1451
        %1603 = vmatprep.subr.mxu0 0.0
        %1604 = vmatpush1.msra.mxu0 %v1452
        %1605 = vmatprep.subr.mxu0 0.0
        %1606 = vmatpush1.msra.mxu0 %v1453
        %1607 = vmatprep.subr.mxu0 0.0
        %1608 = vmatpush1.msra.mxu0 %v1454
        %1609 = vmatprep.subr.mxu0 0.0
        %1610 = vmatpush1.msra.mxu0 %v1455
        %1611 = vmatprep.subr.mxu0 0.0
        %1612 = vmatpush1.msra.mxu0 %v1456
        %1613 = vmatprep.subr.mxu0 0.0
        %1614 = vmatpush1.msra.mxu0 %v1457
        %1615 = vmatprep.subr.mxu0 0.0
        %1616 = vmatpush1.msra.mxu0 %v1458
        %1617 = vmatprep.subr.mxu0 0.0
        %1618 = vmatpush1.msra.mxu0 %v1459
        %1619 = vmatprep.subr.mxu0 0.0
        %1620 = vmatpush1.msra.mxu0 %v1460
        %1621 = vmatprep.subr.mxu0 0.0
        %1622 = vmatpush1.msra.mxu0 %v1461
        %1623 = vmatprep.subr.mxu0 0.0
        %1624 = vmatpush1.msra.mxu0 %v1462
        %1625 = vmatprep.subr.mxu0 0.0
        %1626 = vmatpush1.msra.mxu0 %v1463
        %1627 = vmatprep.subr.mxu0 0.0
        %1628 = vmatpush1.msra.mxu0 %v1464
        %1629 = vmatprep.subr.mxu0 0.0
        %1630 = vmatpush1.msra.mxu0 %v1465
        %1631 = vmatprep.subr.mxu0 0.0
        %1632 = vmatpush1.msra.mxu0 %v1466
        %1633 = vmatprep.subr.mxu0 0.0
        %1634 = vmatpush1.msra.mxu0 %v1467
        %1635 = vmatprep.subr.mxu0 0.0
        %1636 = vmatpush1.msra.mxu0 %v1468
        %1637 = vmatprep.subr.mxu0 0.0
        %1638 = vmatpush1.msra.mxu0 %v1469
        %1639 = vmatprep.mubr.f32.mxu0 %v1377
        %1640 = vmatmul.mubr.f32.gmra.mrb[0].mxu0 %v1376
        %v1641 = vpop.f32.mrb[0].mxu0
        %v1642 = vadd.f32 %v1537, %v1641
        %v1643 = vpop.f32.mrb[0].mxu0
        %1644 = vmatprep.mubr.f32.mxu0 %v1381
        %1645 = vmatmul.mubr.f32.gmra.mrb[0].mxu0 %v1380
        %v1646 = vpop.f32.mrb[0].mxu0
        %v1647 = vadd.f32 %v1542, %v1646
        %v1648 = vpop.f32.mrb[0].mxu0
        %1649 = vmatprep.mubr.f32.mxu0 %v1385
        %1650 = vmatmul.mubr.f32.gmra.mrb[0].mxu0 %v1384
        %v1651 = vpop.f32.mrb[0].mxu0
        %v1652 = vadd.f32 %v1547, %v1651
        %v1653 = vpop.f32.mrb[0].mxu0
        %1654 = vmatprep.mubr.f32.mxu0 %v1389
        %1655 = vmatmul.mubr.f32.gmra.mrb[0].mxu0 %v1388
        %v1656 = vpop.f32.mrb[0].mxu0
        %v1657 = vadd.f32 %v1552, %v1656
        %v1658 = vpop.f32.mrb[0].mxu0
        %1659 = vmatprep.mubr.f32.mxu0 %v1393
        %1660 = vmatmul.mubr.f32.gmra.mrb[0].mxu0 %v1392
        %v1661 = vpop.f32.mrb[0].mxu0
        %v1662 = vadd.f32 %v1557, %v1661
        %v1663 = vpop.f32.mrb[0].mxu0
        %1664 = vmatprep.mubr.f32.mxu0 %v1397
        %1665 = vmatmul.mubr.f32.gmra.mrb[0].mxu0 %v1396
        %v1666 = vpop.f32.mrb[0].mxu0
        %v1667 = vadd.f32 %v1562, %v1666
        %v1668 = vpop.f32.mrb[0].mxu0
        %1669 = vmatprep.mubr.f32.mxu0 %v1401
        %1670 = vmatmul.mubr.f32.gmra.mrb[0].mxu0 %v1400
        %v1671 = vpop.f32.mrb[0].mxu0
        %v1672 = vadd.f32 %v1567, %v1671
        %v1673 = vpop.f32.mrb[0].mxu0
        %1674 = vmatprep.mubr.f32.mxu0 %v1405
        %1675 = vmatmul.mubr.f32.gmra.mrb[0].mxu0 %v1404
        %v1676 = vpop.f32.mrb[0].mxu0
        %v1677 = vadd.f32 %v1572, %v1676
        %v1678 = vpop.f32.mrb[0].mxu0
        %1679 = vdwg.mxu0
        %v1680 = vld [vmem:[%s540] sm:$0xff]
        %v1681 = vld [vmem:[%s540 + $0x8] sm:$0xff]
        %v1682 = vld [vmem:[%s540 + $0x10] sm:$0xff]
        %v1683 = vld [vmem:[%s540 + $0x18] sm:$0xff]
        %v1684 = vld [vmem:[%s540 + $0x20] sm:$0xff]
        %v1685 = vld [vmem:[%s540 + $0x28] sm:$0xff]
        %v1686 = vld [vmem:[%s540 + $0x30] sm:$0xff]
        %v1687 = vld [vmem:[%s540 + $0x38] sm:$0xff]
        %v1688 = vld [vmem:[%s540 + $0x40] sm:$0xff]
        %v1689 = vld [vmem:[%s540 + $0x48] sm:$0xff]
        %v1690 = vld [vmem:[%s540 + $0x50] sm:$0xff]
        %v1691 = vld [vmem:[%s540 + $0x58] sm:$0xff]
        %v1692 = vld [vmem:[%s540 + $0x60] sm:$0xff]
        %v1693 = vld [vmem:[%s540 + $0x68] sm:$0xff]
        %v1694 = vld [vmem:[%s540 + $0x70] sm:$0xff]
        %v1695 = vld [vmem:[%s540 + $0x78] sm:$0xff]
        %v1696 = vld [vmem:[%s540 + $0x80] sm:$0xff]
        %v1697 = vld [vmem:[%s540 + $0x88] sm:$0xff]
        %v1698 = vld [vmem:[%s540 + $0x90] sm:$0xff]
        %v1699 = vld [vmem:[%s540 + $0x98] sm:$0xff]
        %v1700 = vld [vmem:[%s540 + $0xa0] sm:$0xff]
        %v1701 = vld [vmem:[%s540 + $0xa8] sm:$0xff]
        %v1702 = vld [vmem:[%s540 + $0xb0] sm:$0xff]
        %v1703 = vld [vmem:[%s540 + $0xb8] sm:$0xff]
        %v1704 = vld [vmem:[%s540 + $0xc0] sm:$0xff]
        %v1705 = vld [vmem:[%s540 + $0xc8] sm:$0xff]
        %v1706 = vld [vmem:[%s540 + $0xd0] sm:$0xff]
        %v1707 = vld [vmem:[%s540 + $0xd8] sm:$0xff]
        %v1708 = vld [vmem:[%s540 + $0xe0] sm:$0xff]
        %v1709 = vld [vmem:[%s540 + $0xe8] sm:$0xff]
        %v1710 = vld [vmem:[%s540 + $0xf0] sm:$0xff]
        %v1711 = vld [vmem:[%s540 + $0xf8] sm:$0xff]
        %v1712 = vld [vmem:[%s545] sm:$0x3]
        %v1713 = vlaneseq
        %v1714 = vand.u32 %v1713, 127
        %1715 = vset.pattern.permute.xlu0 0
        %1716 = vperm.xlu0 %1715, %v1680
        %v1717 = vpop.permute.xlu0 %1716
        %1718 = vset.pattern.permute.xlu0 0
        %1719 = vperm.xlu0 %1718, %v1681
        %v1720 = vpop.permute.xlu0 %1719
        %1721 = vset.pattern.permute.xlu0 0
        %1722 = vperm.xlu0 %1721, %v1682
        %v1723 = vpop.permute.xlu0 %1722
        %1724 = vset.pattern.permute.xlu0 0
        %1725 = vperm.xlu0 %1724, %v1683
        %v1726 = vpop.permute.xlu0 %1725
        %1727 = vset.pattern.permute.xlu0 0
        %1728 = vperm.xlu0 %1727, %v1684
        %v1729 = vpop.permute.xlu0 %1728
        %1730 = vset.pattern.permute.xlu0 0
        %1731 = vperm.xlu0 %1730, %v1685
        %v1732 = vpop.permute.xlu0 %1731
        %1733 = vset.pattern.permute.xlu0 0
        %1734 = vperm.xlu0 %1733, %v1686
        %v1735 = vpop.permute.xlu0 %1734
        %1736 = vset.pattern.permute.xlu0 0
        %1737 = vperm.xlu0 %1736, %v1687
        %v1738 = vpop.permute.xlu0 %1737
        %1739 = vset.pattern.permute.xlu0 0
        %1740 = vperm.xlu0 %1739, %v1688
        %v1741 = vpop.permute.xlu0 %1740
        %1742 = vset.pattern.permute.xlu0 0
        %1743 = vperm.xlu0 %1742, %v1689
        %v1744 = vpop.permute.xlu0 %1743
        %1745 = vset.pattern.permute.xlu0 0
        %1746 = vperm.xlu0 %1745, %v1690
        %v1747 = vpop.permute.xlu0 %1746
        %1748 = vset.pattern.permute.xlu0 0
        %1749 = vperm.xlu0 %1748, %v1691
        %v1750 = vpop.permute.xlu0 %1749
        %1751 = vset.pattern.permute.xlu0 0
        %1752 = vperm.xlu0 %1751, %v1692
        %v1753 = vpop.permute.xlu0 %1752
        %1754 = vset.pattern.permute.xlu0 0
        %1755 = vperm.xlu0 %1754, %v1693
        %v1756 = vpop.permute.xlu0 %1755
        %1757 = vset.pattern.permute.xlu0 0
        %1758 = vperm.xlu0 %1757, %v1694
        %v1759 = vpop.permute.xlu0 %1758
        %1760 = vset.pattern.permute.xlu0 0
        %1761 = vperm.xlu0 %1760, %v1695
        %v1762 = vpop.permute.xlu0 %1761
        %1763 = vset.pattern.permute.xlu0 0
        %1764 = vperm.xlu0 %1763, %v1696
        %v1765 = vpop.permute.xlu0 %1764
        %1766 = vset.pattern.permute.xlu0 0
        %1767 = vperm.xlu0 %1766, %v1697
        %v1768 = vpop.permute.xlu0 %1767
        %1769 = vset.pattern.permute.xlu0 0
        %1770 = vperm.xlu0 %1769, %v1698
        %v1771 = vpop.permute.xlu0 %1770
        %1772 = vset.pattern.permute.xlu0 0
        %1773 = vperm.xlu0 %1772, %v1699
        %v1774 = vpop.permute.xlu0 %1773
        %1775 = vset.pattern.permute.xlu0 0
        %1776 = vperm.xlu0 %1775, %v1700
        %v1777 = vpop.permute.xlu0 %1776
        %1778 = vset.pattern.permute.xlu0 0
        %1779 = vperm.xlu0 %1778, %v1701
        %v1780 = vpop.permute.xlu0 %1779
        %1781 = vset.pattern.permute.xlu0 0
        %1782 = vperm.xlu0 %1781, %v1702
        %v1783 = vpop.permute.xlu0 %1782
        %1784 = vset.pattern.permute.xlu0 0
        %1785 = vperm.xlu0 %1784, %v1703
        %v1786 = vpop.permute.xlu0 %1785
        %1787 = vset.pattern.permute.xlu0 0
        %1788 = vperm.xlu0 %1787, %v1704
        %v1789 = vpop.permute.xlu0 %1788
        %1790 = vset.pattern.permute.xlu0 0
        %1791 = vperm.xlu0 %1790, %v1705
        %v1792 = vpop.permute.xlu0 %1791
        %1793 = vset.pattern.permute.xlu0 0
        %1794 = vperm.xlu0 %1793, %v1706
        %v1795 = vpop.permute.xlu0 %1794
        %1796 = vset.pattern.permute.xlu0 0
        %1797 = vperm.xlu0 %1796, %v1707
        %v1798 = vpop.permute.xlu0 %1797
        %1799 = vset.pattern.permute.xlu0 0
        %1800 = vperm.xlu0 %1799, %v1708
        %v1801 = vpop.permute.xlu0 %1800
        %1802 = vset.pattern.permute.xlu0 0
        %1803 = vperm.xlu0 %1802, %v1709
        %v1804 = vpop.permute.xlu0 %1803
        %1805 = vset.pattern.permute.xlu0 0
        %1806 = vperm.xlu0 %1805, %v1710
        %v1807 = vpop.permute.xlu0 %1806
        %1808 = vset.pattern.permute.xlu0 0
        %1809 = vperm.xlu0 %1808, %v1711
        %v1810 = vpop.permute.xlu0 %1809
        %vm1811 = vcmp.eq.s32.totalorder %v1717, %v1714
        %vm1812 = vcmp.eq.s32.totalorder %v1720, %v1714
        %vm1813 = vcmp.eq.s32.totalorder %v1723, %v1714
        %vm1814 = vcmp.eq.s32.totalorder %v1726, %v1714
        %vm1815 = vcmp.eq.s32.totalorder %v1729, %v1714
        %vm1816 = vcmp.eq.s32.totalorder %v1732, %v1714
        %vm1817 = vcmp.eq.s32.totalorder %v1735, %v1714
        %vm1818 = vcmp.eq.s32.totalorder %v1738, %v1714
        %vm1819 = vcmp.eq.s32.totalorder %v1741, %v1714
        %vm1820 = vcmp.eq.s32.totalorder %v1744, %v1714
        %vm1821 = vcmp.eq.s32.totalorder %v1747, %v1714
        %vm1822 = vcmp.eq.s32.totalorder %v1750, %v1714
        %vm1823 = vcmp.eq.s32.totalorder %v1753, %v1714
        %vm1824 = vcmp.eq.s32.totalorder %v1756, %v1714
        %vm1825 = vcmp.eq.s32.totalorder %v1759, %v1714
        %vm1826 = vcmp.eq.s32.totalorder %v1762, %v1714
        %vm1827 = vcmp.eq.s32.totalorder %v1765, %v1714
        %vm1828 = vcmp.eq.s32.totalorder %v1768, %v1714
        %vm1829 = vcmp.eq.s32.totalorder %v1771, %v1714
        %vm1830 = vcmp.eq.s32.totalorder %v1774, %v1714
        %vm1831 = vcmp.eq.s32.totalorder %v1777, %v1714
        %vm1832 = vcmp.eq.s32.totalorder %v1780, %v1714
        %vm1833 = vcmp.eq.s32.totalorder %v1783, %v1714
        %vm1834 = vcmp.eq.s32.totalorder %v1786, %v1714
        %vm1835 = vcmp.eq.s32.totalorder %v1789, %v1714
        %vm1836 = vcmp.eq.s32.totalorder %v1792, %v1714
        %vm1837 = vcmp.eq.s32.totalorder %v1795, %v1714
        %vm1838 = vcmp.eq.s32.totalorder %v1798, %v1714
        %vm1839 = vcmp.eq.s32.totalorder %v1801, %v1714
        %vm1840 = vcmp.eq.s32.totalorder %v1804, %v1714
        %vm1841 = vcmp.eq.s32.totalorder %v1807, %v1714
        %vm1842 = vcmp.eq.s32.totalorder %v1810, %v1714
        %v1843 = vsel %vm1811, 1, 0
        %v1844 = vsel %vm1812, 1, 0
        %v1845 = vsel %vm1813, 1, 0
        %v1846 = vsel %vm1814, 1, 0
        %v1847 = vsel %vm1815, 1, 0
        %v1848 = vsel %vm1816, 1, 0
        %v1849 = vsel %vm1817, 1, 0
        %v1850 = vsel %vm1818, 1, 0
        %v1851 = vsel %vm1819, 1, 0
        %v1852 = vsel %vm1820, 1, 0
        %v1853 = vsel %vm1821, 1, 0
        %v1854 = vsel %vm1822, 1, 0
        %v1855 = vsel %vm1823, 1, 0
        %v1856 = vsel %vm1824, 1, 0
        %v1857 = vsel %vm1825, 1, 0
        %v1858 = vsel %vm1826, 1, 0
        %v1859 = vsel %vm1827, 1, 0
        %v1860 = vsel %vm1828, 1, 0
        %v1861 = vsel %vm1829, 1, 0
        %v1862 = vsel %vm1830, 1, 0
        %v1863 = vsel %vm1831, 1, 0
        %v1864 = vsel %vm1832, 1, 0
        %v1865 = vsel %vm1833, 1, 0
        %v1866 = vsel %vm1834, 1, 0
        %v1867 = vsel %vm1835, 1, 0
        %v1868 = vsel %vm1836, 1, 0
        %v1869 = vsel %vm1837, 1, 0
        %v1870 = vsel %vm1838, 1, 0
        %v1871 = vsel %vm1839, 1, 0
        %v1872 = vsel %vm1840, 1, 0
        %v1873 = vsel %vm1841, 1, 0
        %v1874 = vsel %vm1842, 1, 0
        %v1875 = vcvt.s32.f32 %v1843
        %v1876 = vcvt.s32.f32 %v1844
        %v1877 = vcvt.s32.f32 %v1845
        %v1878 = vcvt.s32.f32 %v1846
        %v1879 = vcvt.s32.f32 %v1847
        %v1880 = vcvt.s32.f32 %v1848
        %v1881 = vcvt.s32.f32 %v1849
        %v1882 = vcvt.s32.f32 %v1850
        %v1883 = vcvt.s32.f32 %v1851
        %v1884 = vcvt.s32.f32 %v1852
        %v1885 = vcvt.s32.f32 %v1853
        %v1886 = vcvt.s32.f32 %v1854
        %v1887 = vcvt.s32.f32 %v1855
        %v1888 = vcvt.s32.f32 %v1856
        %v1889 = vcvt.s32.f32 %v1857
        %v1890 = vcvt.s32.f32 %v1858
        %v1891 = vcvt.s32.f32 %v1859
        %v1892 = vcvt.s32.f32 %v1860
        %v1893 = vcvt.s32.f32 %v1861
        %v1894 = vcvt.s32.f32 %v1862
        %v1895 = vcvt.s32.f32 %v1863
        %v1896 = vcvt.s32.f32 %v1864
        %v1897 = vcvt.s32.f32 %v1865
        %v1898 = vcvt.s32.f32 %v1866
        %v1899 = vcvt.s32.f32 %v1867
        %v1900 = vcvt.s32.f32 %v1868
        %v1901 = vcvt.s32.f32 %v1869
        %v1902 = vcvt.s32.f32 %v1870
        %v1903 = vcvt.s32.f32 %v1871
        %v1904 = vcvt.s32.f32 %v1872
        %v1905 = vcvt.s32.f32 %v1873
        %v1906 = vcvt.s32.f32 %v1874
        %v1907 = vlaneseq
        %v1908 = vshrl.u32 %v1907, 7
        %v1909 = vadd.s32 %v1908, 8
        %v1910 = vadd.s32 %v1908, 16
        %v1911 = vadd.s32 %v1908, 24
        %v1912 = vadd.s32 %v1908, 32
        %v1913 = vadd.s32 %v1908, 40
        %v1914 = vadd.s32 %v1908, 48
        %v1915 = vadd.s32 %v1908, 56
        %v1916 = vlaneseq
        %v1917 = vshrl.u32 %v1916, 7
        %v1918 = vsub.s32 0, %v1917
        %v1919 = vrot.slane %v1712, %v1918
        %v1920 = vlaneseq
        %v1921 = vshrl.u32 %v1920, 7
        %v1922 = vsub.s32 1, %v1921
        %v1923 = vrot.slane %v1712, %v1922
        %vm1924 = vcmp.eq.s32.totalorder %v1908, %v1919
        %vm1925 = vcmp.eq.s32.totalorder %v1908, %v1923
        %vm1926 = vcmp.eq.s32.totalorder %v1909, %v1919
        %vm1927 = vcmp.eq.s32.totalorder %v1909, %v1923
        %vm1928 = vcmp.eq.s32.totalorder %v1910, %v1919
        %vm1929 = vcmp.eq.s32.totalorder %v1910, %v1923
        %vm1930 = vcmp.eq.s32.totalorder %v1911, %v1919
        %vm1931 = vcmp.eq.s32.totalorder %v1911, %v1923
        %vm1932 = vcmp.eq.s32.totalorder %v1912, %v1919
        %vm1933 = vcmp.eq.s32.totalorder %v1912, %v1923
        %vm1934 = vcmp.eq.s32.totalorder %v1913, %v1919
        %vm1935 = vcmp.eq.s32.totalorder %v1913, %v1923
        %vm1936 = vcmp.eq.s32.totalorder %v1914, %v1919
        %vm1937 = vcmp.eq.s32.totalorder %v1914, %v1923
        %vm1938 = vcmp.eq.s32.totalorder %v1915, %v1919
        %vm1939 = vcmp.eq.s32.totalorder %v1915, %v1923
        %v1940 = vsel %vm1924, 1, 0
        %v1941 = vsel %vm1925, 1, 0
        %v1942 = vsel %vm1926, 1, 0
        %v1943 = vsel %vm1927, 1, 0
        %v1944 = vsel %vm1928, 1, 0
        %v1945 = vsel %vm1929, 1, 0
        %v1946 = vsel %vm1930, 1, 0
        %v1947 = vsel %vm1931, 1, 0
        %v1948 = vsel %vm1932, 1, 0
        %v1949 = vsel %vm1933, 1, 0
        %v1950 = vsel %vm1934, 1, 0
        %v1951 = vsel %vm1935, 1, 0
        %v1952 = vsel %vm1936, 1, 0
        %v1953 = vsel %vm1937, 1, 0
        %v1954 = vsel %vm1938, 1, 0
        %v1955 = vsel %vm1939, 1, 0
        %v1956 = vcvt.s32.f32 %v1940
        %v1957 = vcvt.s32.f32 %v1941
        %v1958 = vcvt.s32.f32 %v1942
        %v1959 = vcvt.s32.f32 %v1943
        %v1960 = vcvt.s32.f32 %v1944
        %v1961 = vcvt.s32.f32 %v1945
        %v1962 = vcvt.s32.f32 %v1946
        %v1963 = vcvt.s32.f32 %v1947
        %v1964 = vcvt.s32.f32 %v1948
        %v1965 = vcvt.s32.f32 %v1949
        %v1966 = vcvt.s32.f32 %v1950
        %v1967 = vcvt.s32.f32 %v1951
        %v1968 = vcvt.s32.f32 %v1952
        %v1969 = vcvt.s32.f32 %v1953
        %v1970 = vcvt.s32.f32 %v1954
        %v1971 = vcvt.s32.f32 %v1955
        %vm1972 = vcmask 523264
        %v1974 = vsel %vm1972, %v1875, 0
        %v1977 = vsel %vm1972, %v1876, 0
        %v1980 = vsel %vm1972, %v1877, 0
        %v1983 = vsel %vm1972, %v1878, 0
        %v1986 = vsel %vm1972, %v1879, 0
        %v1989 = vsel %vm1972, %v1880, 0
        %v1992 = vsel %vm1972, %v1881, 0
        %v1995 = vsel %vm1972, %v1882, 0
        %v1998 = vsel %vm1972, %v1883, 0
        %v2001 = vsel %vm1972, %v1884, 0
        %v2004 = vsel %vm1972, %v1885, 0
        %v2007 = vsel %vm1972, %v1886, 0
        %v2010 = vsel %vm1972, %v1887, 0
        %v2013 = vsel %vm1972, %v1888, 0
        %v2016 = vsel %vm1972, %v1889, 0
        %v2019 = vsel %vm1972, %v1890, 0
        %v2022 = vsel %vm1972, %v1891, 0
        %v2025 = vsel %vm1972, %v1892, 0
        %v2028 = vsel %vm1972, %v1893, 0
        %v2031 = vsel %vm1972, %v1894, 0
        %v2034 = vsel %vm1972, %v1895, 0
        %v2037 = vsel %vm1972, %v1896, 0
        %v2040 = vsel %vm1972, %v1897, 0
        %v2043 = vsel %vm1972, %v1898, 0
        %v2046 = vsel %vm1972, %v1899, 0
        %v2049 = vsel %vm1972, %v1900, 0
        %v2052 = vsel %vm1972, %v1901, 0
        %v2055 = vsel %vm1972, %v1902, 0
        %v2058 = vsel %vm1972, %v1903, 0
        %v2061 = vsel %vm1972, %v1904, 0
        %v2064 = vsel %vm1972, %v1905, 0
        %v2067 = vsel %vm1972, %v1906, 0
        %2069 = vmatprep.subr.mxu0 %v970
        %2070 = vmatpush1.msra.mxu0 %v968
        %2071 = vmatprep.subr.mxu0 %v976
        %2072 = vmatpush1.msra.mxu0 %v974
        %2073 = vmatprep.subr.mxu0 %v982
        %2074 = vmatpush1.msra.mxu0 %v980
        %2075 = vmatprep.subr.mxu0 %v988
        %2076 = vmatpush1.msra.mxu0 %v986
        %2077 = vmatprep.subr.mxu0 %v994
        %2078 = vmatpush1.msra.mxu0 %v992
        %2079 = vmatprep.subr.mxu0 %v1000
        %2080 = vmatpush1.msra.mxu0 %v998
        %2081 = vmatprep.subr.mxu0 %v1006
        %2082 = vmatpush1.msra.mxu0 %v1004
        %2083 = vmatprep.subr.mxu0 %v1012
        %2084 = vmatpush1.msra.mxu0 %v1010
        %2085 = vmatprep.subr.mxu0 0.0
        %2086 = vmatpush1.msra.mxu0 0.0
        %2087 = vmatprep.subr.mxu0 0.0
        %2088 = vmatpush1.msra.mxu0 0.0
        %2089 = vmatprep.subr.mxu0 0.0
        %2090 = vmatpush1.msra.mxu0 0.0
        %2091 = vmatprep.subr.mxu0 0.0
        %2092 = vmatpush1.msra.mxu0 0.0
        %2093 = vmatprep.subr.mxu0 0.0
        %2094 = vmatpush1.msra.mxu0 0.0
        %2095 = vmatprep.subr.mxu0 0.0
        %2096 = vmatpush1.msra.mxu0 0.0
        %2097 = vmatprep.subr.mxu0 0.0
        %2098 = vmatpush1.msra.mxu0 0.0
        %2099 = vmatprep.subr.mxu0 0.0
        %2100 = vmatpush1.msra.mxu0 0.0
        %2101 = vmatprep.subr.mxu0 0.0
        %2102 = vmatpush1.msra.mxu0 0.0
        %2103 = vmatprep.subr.mxu0 0.0
        %2104 = vmatpush1.msra.mxu0 0.0
        %2105 = vmatprep.subr.mxu0 0.0
        %2106 = vmatpush1.msra.mxu0 0.0
        %2107 = vmatprep.subr.mxu0 0.0
        %2108 = vmatpush1.msra.mxu0 0.0
        %2109 = vmatprep.subr.mxu0 0.0
        %2110 = vmatpush1.msra.mxu0 0.0
        %2111 = vmatprep.subr.mxu0 0.0
        %2112 = vmatpush1.msra.mxu0 0.0
        %2113 = vmatprep.subr.mxu0 0.0
        %2114 = vmatpush1.msra.mxu0 0.0
        %2115 = vmatprep.subr.mxu0 0.0
        %2116 = vmatpush1.msra.mxu0 0.0
        %2117 = vmatprep.subr.mxu0 0.0
        %2118 = vmatpush1.msra.mxu0 0.0
        %2119 = vmatprep.subr.mxu0 0.0
        %2120 = vmatpush1.msra.mxu0 0.0
        %2121 = vmatprep.subr.mxu0 0.0
        %2122 = vmatpush1.msra.mxu0 0.0
        %2123 = vmatprep.subr.mxu0 0.0
        %2124 = vmatpush1.msra.mxu0 0.0
        %2125 = vmatprep.subr.mxu0 0.0
        %2126 = vmatpush1.msra.mxu0 0.0
        %2127 = vmatprep.subr.mxu0 0.0
        %2128 = vmatpush1.msra.mxu0 0.0
        %2129 = vmatprep.subr.mxu0 0.0
        %2130 = vmatpush1.msra.mxu0 0.0
        %2131 = vmatprep.subr.mxu0 0.0
        %2132 = vmatpush1.msra.mxu0 0.0
        %2133 = vmatprep.mubr.f32.mxu0 0.0
        %2134 = vmatmul.mubr.f32.gmra.mrb[0].mxu0 %v1974
        %v2135 = vpop.f32.mrb[0].mxu0
        %v2136 = vadd.f32 0.0, %v2135
        %v2137 = vpop.f32.mrb[0].mxu0
        %v2138 = vadd.f32 0.0, %v2137
        %2139 = vmatprep.mubr.f32.mxu0 0.0
        %2140 = vmatmul.mubr.f32.gmra.mrb[0].mxu0 %v1977
        %v2141 = vpop.f32.mrb[0].mxu0
        %v2142 = vadd.f32 0.0, %v2141
        %v2143 = vpop.f32.mrb[0].mxu0
        %v2144 = vadd.f32 0.0, %v2143
        %2145 = vmatprep.mubr.f32.mxu0 0.0
        %2146 = vmatmul.mubr.f32.gmra.mrb[0].mxu0 %v1980
        %v2147 = vpop.f32.mrb[0].mxu0
        %v2148 = vadd.f32 0.0, %v2147
        %v2149 = vpop.f32.mrb[0].mxu0
        %v2150 = vadd.f32 0.0, %v2149
        %2151 = vmatprep.mubr.f32.mxu0 0.0
        %2152 = vmatmul.mubr.f32.gmra.mrb[0].mxu0 %v1983
        %v2153 = vpop.f32.mrb[0].mxu0
        %v2154 = vadd.f32 0.0, %v2153
        %v2155 = vpop.f32.mrb[0].mxu0
        %v2156 = vadd.f32 0.0, %v2155
        %2157 = vmatprep.mubr.f32.mxu0 0.0
        %2158 = vmatmul.mubr.f32.gmra.mrb[0].mxu0 %v1986
        %v2159 = vpop.f32.mrb[0].mxu0
        %v2160 = vadd.f32 0.0, %v2159
        %v2161 = vpop.f32.mrb[0].mxu0
        %v2162 = vadd.f32 0.0, %v2161
        %2163 = vmatprep.mubr.f32.mxu0 0.0
        %2164 = vmatmul.mubr.f32.gmra.mrb[0].mxu0 %v1989
        %v2165 = vpop.f32.mrb[0].mxu0
        %v2166 = vadd.f32 0.0, %v2165
        %v2167 = vpop.f32.mrb[0].mxu0
        %v2168 = vadd.f32 0.0, %v2167
        %2169 = vmatprep.mubr.f32.mxu0 0.0
        %2170 = vmatmul.mubr.f32.gmra.mrb[0].mxu0 %v1992
        %v2171 = vpop.f32.mrb[0].mxu0
        %v2172 = vadd.f32 0.0, %v2171
        %v2173 = vpop.f32.mrb[0].mxu0
        %v2174 = vadd.f32 0.0, %v2173
        %2175 = vmatprep.mubr.f32.mxu0 0.0
        %2176 = vmatmul.mubr.f32.gmra.mrb[0].mxu0 %v1995
        %v2177 = vpop.f32.mrb[0].mxu0
        %v2178 = vadd.f32 0.0, %v2177
        %v2179 = vpop.f32.mrb[0].mxu0
        %v2180 = vadd.f32 0.0, %v2179
        %2181 = vmatprep.mubr.f32.mxu0 0.0
        %2182 = vmatmul.mubr.f32.gmra.mrb[0].mxu0 %v1998
        %v2183 = vpop.f32.mrb[0].mxu0
        %v2184 = vadd.f32 0.0, %v2183
        %v2185 = vpop.f32.mrb[0].mxu0
        %v2186 = vadd.f32 0.0, %v2185
        %2187 = vmatprep.mubr.f32.mxu0 0.0
        %2188 = vmatmul.mubr.f32.gmra.mrb[0].mxu0 %v2001
        %v2189 = vpop.f32.mrb[0].mxu0
        %v2190 = vadd.f32 0.0, %v2189
        %v2191 = vpop.f32.mrb[0].mxu0
        %v2192 = vadd.f32 0.0, %v2191
        %2193 = vmatprep.mubr.f32.mxu0 0.0
        %2194 = vmatmul.mubr.f32.gmra.mrb[0].mxu0 %v2004
        %v2195 = vpop.f32.mrb[0].mxu0
        %v2196 = vadd.f32 0.0, %v2195
        %v2197 = vpop.f32.mrb[0].mxu0
        %v2198 = vadd.f32 0.0, %v2197
        %2199 = vmatprep.mubr.f32.mxu0 0.0
        %2200 = vmatmul.mubr.f32.gmra.mrb[0].mxu0 %v2007
        %v2201 = vpop.f32.mrb[0].mxu0
        %v2202 = vadd.f32 0.0, %v2201
        %v2203 = vpop.f32.mrb[0].mxu0
        %v2204 = vadd.f32 0.0, %v2203
        %2205 = vmatprep.mubr.f32.mxu0 0.0
        %2206 = vmatmul.mubr.f32.gmra.mrb[0].mxu0 %v2010
        %v2207 = vpop.f32.mrb[0].mxu0
        %v2208 = vadd.f32 0.0, %v2207
        %v2209 = vpop.f32.mrb[0].mxu0
        %v2210 = vadd.f32 0.0, %v2209
        %2211 = vmatprep.mubr.f32.mxu0 0.0
        %2212 = vmatmul.mubr.f32.gmra.mrb[0].mxu0 %v2013
        %v2213 = vpop.f32.mrb[0].mxu0
        %v2214 = vadd.f32 0.0, %v2213
        %v2215 = vpop.f32.mrb[0].mxu0
        %v2216 = vadd.f32 0.0, %v2215
        %2217 = vmatprep.mubr.f32.mxu0 0.0
        %2218 = vmatmul.mubr.f32.gmra.mrb[0].mxu0 %v2016
        %v2219 = vpop.f32.mrb[0].mxu0
        %v2220 = vadd.f32 0.0, %v2219
        %v2221 = vpop.f32.mrb[0].mxu0
        %v2222 = vadd.f32 0.0, %v2221
        %2223 = vmatprep.mubr.f32.mxu0 0.0
        %2224 = vmatmul.mubr.f32.gmra.mrb[0].mxu0 %v2019
        %v2225 = vpop.f32.mrb[0].mxu0
        %v2226 = vadd.f32 0.0, %v2225
        %v2227 = vpop.f32.mrb[0].mxu0
        %v2228 = vadd.f32 0.0, %v2227
        %2229 = vmatprep.mubr.f32.mxu0 0.0
        %2230 = vmatmul.mubr.f32.gmra.mrb[0].mxu0 %v2022
        %v2231 = vpop.f32.mrb[0].mxu0
        %v2232 = vadd.f32 0.0, %v2231
        %v2233 = vpop.f32.mrb[0].mxu0
        %v2234 = vadd.f32 0.0, %v2233
        %2235 = vmatprep.mubr.f32.mxu0 0.0
        %2236 = vmatmul.mubr.f32.gmra.mrb[0].mxu0 %v2025
        %v2237 = vpop.f32.mrb[0].mxu0
        %v2238 = vadd.f32 0.0, %v2237
        %v2239 = vpop.f32.mrb[0].mxu0
        %v2240 = vadd.f32 0.0, %v2239
        %2241 = vmatprep.mubr.f32.mxu0 0.0
        %2242 = vmatmul.mubr.f32.gmra.mrb[0].mxu0 %v2028
        %v2243 = vpop.f32.mrb[0].mxu0
        %v2244 = vadd.f32 0.0, %v2243
        %v2245 = vpop.f32.mrb[0].mxu0
        %v2246 = vadd.f32 0.0, %v2245
        %2247 = vmatprep.mubr.f32.mxu0 0.0
        %2248 = vmatmul.mubr.f32.gmra.mrb[0].mxu0 %v2031
        %v2249 = vpop.f32.mrb[0].mxu0
        %v2250 = vadd.f32 0.0, %v2249
        %v2251 = vpop.f32.mrb[0].mxu0
        %v2252 = vadd.f32 0.0, %v2251
        %2253 = vmatprep.mubr.f32.mxu0 0.0
        %2254 = vmatmul.mubr.f32.gmra.mrb[0].mxu0 %v2034
        %v2255 = vpop.f32.mrb[0].mxu0
        %v2256 = vadd.f32 0.0, %v2255
        %v2257 = vpop.f32.mrb[0].mxu0
        %v2258 = vadd.f32 0.0, %v2257
        %2259 = vmatprep.mubr.f32.mxu0 0.0
        %2260 = vmatmul.mubr.f32.gmra.mrb[0].mxu0 %v2037
        %v2261 = vpop.f32.mrb[0].mxu0
        %v2262 = vadd.f32 0.0, %v2261
        %v2263 = vpop.f32.mrb[0].mxu0
        %v2264 = vadd.f32 0.0, %v2263
        %2265 = vmatprep.mubr.f32.mxu0 0.0
        %2266 = vmatmul.mubr.f32.gmra.mrb[0].mxu0 %v2040
        %v2267 = vpop.f32.mrb[0].mxu0
        %v2268 = vadd.f32 0.0, %v2267
        %v2269 = vpop.f32.mrb[0].mxu0
        %v2270 = vadd.f32 0.0, %v2269
        %2271 = vmatprep.mubr.f32.mxu0 0.0
        %2272 = vmatmul.mubr.f32.gmra.mrb[0].mxu0 %v2043
        %v2273 = vpop.f32.mrb[0].mxu0
        %v2274 = vadd.f32 0.0, %v2273
        %v2275 = vpop.f32.mrb[0].mxu0
        %v2276 = vadd.f32 0.0, %v2275
        %2277 = vmatprep.mubr.f32.mxu0 0.0
        %2278 = vmatmul.mubr.f32.gmra.mrb[0].mxu0 %v2046
        %v2279 = vpop.f32.mrb[0].mxu0
        %v2280 = vadd.f32 0.0, %v2279
        %v2281 = vpop.f32.mrb[0].mxu0
        %v2282 = vadd.f32 0.0, %v2281
        %2283 = vmatprep.mubr.f32.mxu0 0.0
        %2284 = vmatmul.mubr.f32.gmra.mrb[0].mxu0 %v2049
        %v2285 = vpop.f32.mrb[0].mxu0
        %v2286 = vadd.f32 0.0, %v2285
        %v2287 = vpop.f32.mrb[0].mxu0
        %v2288 = vadd.f32 0.0, %v2287
        %2289 = vmatprep.mubr.f32.mxu0 0.0
        %2290 = vmatmul.mubr.f32.gmra.mrb[0].mxu0 %v2052
        %v2291 = vpop.f32.mrb[0].mxu0
        %v2292 = vadd.f32 0.0, %v2291
        %v2293 = vpop.f32.mrb[0].mxu0
        %v2294 = vadd.f32 0.0, %v2293
        %2295 = vmatprep.mubr.f32.mxu0 0.0
        %2296 = vmatmul.mubr.f32.gmra.mrb[0].mxu0 %v2055
        %v2297 = vpop.f32.mrb[0].mxu0
        %v2298 = vadd.f32 0.0, %v2297
        %v2299 = vpop.f32.mrb[0].mxu0
        %v2300 = vadd.f32 0.0, %v2299
        %2301 = vmatprep.mubr.f32.mxu0 0.0
        %2302 = vmatmul.mubr.f32.gmra.mrb[0].mxu0 %v2058
        %v2303 = vpop.f32.mrb[0].mxu0
        %v2304 = vadd.f32 0.0, %v2303
        %v2305 = vpop.f32.mrb[0].mxu0
        %v2306 = vadd.f32 0.0, %v2305
        %2307 = vmatprep.mubr.f32.mxu0 0.0
        %2308 = vmatmul.mubr.f32.gmra.mrb[0].mxu0 %v2061
        %v2309 = vpop.f32.mrb[0].mxu0
        %v2310 = vadd.f32 0.0, %v2309
        %v2311 = vpop.f32.mrb[0].mxu0
        %v2312 = vadd.f32 0.0, %v2311
        %2313 = vmatprep.mubr.f32.mxu0 0.0
        %2314 = vmatmul.mubr.f32.gmra.mrb[0].mxu0 %v2064
        %v2315 = vpop.f32.mrb[0].mxu0
        %v2316 = vadd.f32 0.0, %v2315
        %v2317 = vpop.f32.mrb[0].mxu0
        %v2318 = vadd.f32 0.0, %v2317
        %2319 = vmatprep.mubr.f32.mxu0 0.0
        %2320 = vmatmul.mubr.f32.gmra.mrb[0].mxu0 %v2067
        %v2321 = vpop.f32.mrb[0].mxu0
        %v2322 = vadd.f32 0.0, %v2321
        %v2323 = vpop.f32.mrb[0].mxu0
        %v2324 = vadd.f32 0.0, %v2323
        %2325 = vdwg.mxu0
        %2326 = vmatprep.subr.mxu0 0.0
        %2327 = vmatpush1.msra.mxu0 %v1081
        %2328 = vmatprep.subr.mxu0 0.0
        %2329 = vmatpush1.msra.mxu0 %v1086
        %2330 = vmatprep.subr.mxu0 0.0
        %2331 = vmatpush1.msra.mxu0 %v1091
        %2332 = vmatprep.subr.mxu0 0.0
        %2333 = vmatpush1.msra.mxu0 %v1096
        %2334 = vmatprep.subr.mxu0 0.0
        %2335 = vmatpush1.msra.mxu0 %v1101
        %2336 = vmatprep.subr.mxu0 0.0
        %2337 = vmatpush1.msra.mxu0 %v1106
        %2338 = vmatprep.subr.mxu0 0.0
        %2339 = vmatpush1.msra.mxu0 %v1111
        %2340 = vmatprep.subr.mxu0 0.0
        %2341 = vmatpush1.msra.mxu0 %v1116
        %2342 = vmatprep.subr.mxu0 0.0
        %2343 = vmatpush1.msra.mxu0 0.0
        %2344 = vmatprep.subr.mxu0 0.0
        %2345 = vmatpush1.msra.mxu0 0.0
        %2346 = vmatprep.subr.mxu0 0.0
        %2347 = vmatpush1.msra.mxu0 0.0
        %2348 = vmatprep.subr.mxu0 0.0
        %2349 = vmatpush1.msra.mxu0 0.0
        %2350 = vmatprep.subr.mxu0 0.0
        %2351 = vmatpush1.msra.mxu0 0.0
        %2352 = vmatprep.subr.mxu0 0.0
        %2353 = vmatpush1.msra.mxu0 0.0
        %2354 = vmatprep.subr.mxu0 0.0
        %2355 = vmatpush1.msra.mxu0 0.0
        %2356 = vmatprep.subr.mxu0 0.0
        %2357 = vmatpush1.msra.mxu0 0.0
        %2358 = vmatprep.subr.mxu0 0.0
        %2359 = vmatpush1.msra.mxu0 0.0
        %2360 = vmatprep.subr.mxu0 0.0
        %2361 = vmatpush1.msra.mxu0 0.0
        %2362 = vmatprep.subr.mxu0 0.0
        %2363 = vmatpush1.msra.mxu0 0.0
        %2364 = vmatprep.subr.mxu0 0.0
        %2365 = vmatpush1.msra.mxu0 0.0
        %2366 = vmatprep.subr.mxu0 0.0
        %2367 = vmatpush1.msra.mxu0 0.0
        %2368 = vmatprep.subr.mxu0 0.0
        %2369 = vmatpush1.msra.mxu0 0.0
        %2370 = vmatprep.subr.mxu0 0.0
        %2371 = vmatpush1.msra.mxu0 0.0
        %2372 = vmatprep.subr.mxu0 0.0
        %2373 = vmatpush1.msra.mxu0 0.0
        %2374 = vmatprep.subr.mxu0 0.0
        %2375 = vmatpush1.msra.mxu0 0.0
        %2376 = vmatprep.subr.mxu0 0.0
        %2377 = vmatpush1.msra.mxu0 0.0
        %2378 = vmatprep.subr.mxu0 0.0
        %2379 = vmatpush1.msra.mxu0 0.0
        %2380 = vmatprep.subr.mxu0 0.0
        %2381 = vmatpush1.msra.mxu0 0.0
        %2382 = vmatprep.subr.mxu0 0.0
        %2383 = vmatpush1.msra.mxu0 0.0
        %2384 = vmatprep.subr.mxu0 0.0
        %2385 = vmatpush1.msra.mxu0 0.0
        %2386 = vmatprep.subr.mxu0 0.0
        %2387 = vmatpush1.msra.mxu0 0.0
        %2388 = vmatprep.subr.mxu0 0.0
        %2389 = vmatpush1.msra.mxu0 0.0
        %2390 = vmatprep.mubr.f32.mxu0 0.0
        %2391 = vmatmul.mubr.f32.gmra.mrb[0].mxu0 %v1974
        %v2392 = vpop.f32.mrb[0].mxu0
        %v2393 = vadd.f32 0.0, %v2392
        %v2394 = vpop.f32.mrb[0].mxu0
        %2395 = vmatprep.mubr.f32.mxu0 0.0
        %2396 = vmatmul.mubr.f32.gmra.mrb[0].mxu0 %v1977
        %v2397 = vpop.f32.mrb[0].mxu0
        %v2398 = vadd.f32 0.0, %v2397
        %v2399 = vpop.f32.mrb[0].mxu0
        %2400 = vmatprep.mubr.f32.mxu0 0.0
        %2401 = vmatmul.mubr.f32.gmra.mrb[0].mxu0 %v1980
        %v2402 = vpop.f32.mrb[0].mxu0
        %v2403 = vadd.f32 0.0, %v2402
        %v2404 = vpop.f32.mrb[0].mxu0
        %2405 = vmatprep.mubr.f32.mxu0 0.0
        %2406 = vmatmul.mubr.f32.gmra.mrb[0].mxu0 %v1983
        %v2407 = vpop.f32.mrb[0].mxu0
        %v2408 = vadd.f32 0.0, %v2407
        %v2409 = vpop.f32.mrb[0].mxu0
        %2410 = vmatprep.mubr.f32.mxu0 0.0
        %2411 = vmatmul.mubr.f32.gmra.mrb[0].mxu0 %v1986
        %v2412 = vpop.f32.mrb[0].mxu0
        %v2413 = vadd.f32 0.0, %v2412
        %v2414 = vpop.f32.mrb[0].mxu0
        %2415 = vmatprep.mubr.f32.mxu0 0.0
        %2416 = vmatmul.mubr.f32.gmra.mrb[0].mxu0 %v1989
        %v2417 = vpop.f32.mrb[0].mxu0
        %v2418 = vadd.f32 0.0, %v2417
        %v2419 = vpop.f32.mrb[0].mxu0
        %2420 = vmatprep.mubr.f32.mxu0 0.0
        %2421 = vmatmul.mubr.f32.gmra.mrb[0].mxu0 %v1992
        %v2422 = vpop.f32.mrb[0].mxu0
        %v2423 = vadd.f32 0.0, %v2422
        %v2424 = vpop.f32.mrb[0].mxu0
        %2425 = vmatprep.mubr.f32.mxu0 0.0
        %2426 = vmatmul.mubr.f32.gmra.mrb[0].mxu0 %v1995
        %v2427 = vpop.f32.mrb[0].mxu0
        %v2428 = vadd.f32 0.0, %v2427
        %v2429 = vpop.f32.mrb[0].mxu0
        %2430 = vmatprep.mubr.f32.mxu0 0.0
        %2431 = vmatmul.mubr.f32.gmra.mrb[0].mxu0 %v1998
        %v2432 = vpop.f32.mrb[0].mxu0
        %v2433 = vadd.f32 0.0, %v2432
        %v2434 = vpop.f32.mrb[0].mxu0
        %2435 = vmatprep.mubr.f32.mxu0 0.0
        %2436 = vmatmul.mubr.f32.gmra.mrb[0].mxu0 %v2001
        %v2437 = vpop.f32.mrb[0].mxu0
        %v2438 = vadd.f32 0.0, %v2437
        %v2439 = vpop.f32.mrb[0].mxu0
        %2440 = vmatprep.mubr.f32.mxu0 0.0
        %2441 = vmatmul.mubr.f32.gmra.mrb[0].mxu0 %v2004
        %v2442 = vpop.f32.mrb[0].mxu0
        %v2443 = vadd.f32 0.0, %v2442
        %v2444 = vpop.f32.mrb[0].mxu0
        %2445 = vmatprep.mubr.f32.mxu0 0.0
        %2446 = vmatmul.mubr.f32.gmra.mrb[0].mxu0 %v2007
        %v2447 = vpop.f32.mrb[0].mxu0
        %v2448 = vadd.f32 0.0, %v2447
        %v2449 = vpop.f32.mrb[0].mxu0
        %2450 = vmatprep.mubr.f32.mxu0 0.0
        %2451 = vmatmul.mubr.f32.gmra.mrb[0].mxu0 %v2010
        %v2452 = vpop.f32.mrb[0].mxu0
        %v2453 = vadd.f32 0.0, %v2452
        %v2454 = vpop.f32.mrb[0].mxu0
        %2455 = vmatprep.mubr.f32.mxu0 0.0
        %2456 = vmatmul.mubr.f32.gmra.mrb[0].mxu0 %v2013
        %v2457 = vpop.f32.mrb[0].mxu0
        %v2458 = vadd.f32 0.0, %v2457
        %v2459 = vpop.f32.mrb[0].mxu0
        %2460 = vmatprep.mubr.f32.mxu0 0.0
        %2461 = vmatmul.mubr.f32.gmra.mrb[0].mxu0 %v2016
        %v2462 = vpop.f32.mrb[0].mxu0
        %v2463 = vadd.f32 0.0, %v2462
        %v2464 = vpop.f32.mrb[0].mxu0
        %2465 = vmatprep.mubr.f32.mxu0 0.0
        %2466 = vmatmul.mubr.f32.gmra.mrb[0].mxu0 %v2019
        %v2467 = vpop.f32.mrb[0].mxu0
        %v2468 = vadd.f32 0.0, %v2467
        %v2469 = vpop.f32.mrb[0].mxu0
        %2470 = vmatprep.mubr.f32.mxu0 0.0
        %2471 = vmatmul.mubr.f32.gmra.mrb[0].mxu0 %v2022
        %v2472 = vpop.f32.mrb[0].mxu0
        %v2473 = vadd.f32 0.0, %v2472
        %v2474 = vpop.f32.mrb[0].mxu0
        %2475 = vmatprep.mubr.f32.mxu0 0.0
        %2476 = vmatmul.mubr.f32.gmra.mrb[0].mxu0 %v2025
        %v2477 = vpop.f32.mrb[0].mxu0
        %v2478 = vadd.f32 0.0, %v2477
        %v2479 = vpop.f32.mrb[0].mxu0
        %2480 = vmatprep.mubr.f32.mxu0 0.0
        %2481 = vmatmul.mubr.f32.gmra.mrb[0].mxu0 %v2028
        %v2482 = vpop.f32.mrb[0].mxu0
        %v2483 = vadd.f32 0.0, %v2482
        %v2484 = vpop.f32.mrb[0].mxu0
        %2485 = vmatprep.mubr.f32.mxu0 0.0
        %2486 = vmatmul.mubr.f32.gmra.mrb[0].mxu0 %v2031
        %v2487 = vpop.f32.mrb[0].mxu0
        %v2488 = vadd.f32 0.0, %v2487
        %v2489 = vpop.f32.mrb[0].mxu0
        %2490 = vmatprep.mubr.f32.mxu0 0.0
        %2491 = vmatmul.mubr.f32.gmra.mrb[0].mxu0 %v2034
        %v2492 = vpop.f32.mrb[0].mxu0
        %v2493 = vadd.f32 0.0, %v2492
        %v2494 = vpop.f32.mrb[0].mxu0
        %2495 = vmatprep.mubr.f32.mxu0 0.0
        %2496 = vmatmul.mubr.f32.gmra.mrb[0].mxu0 %v2037
        %v2497 = vpop.f32.mrb[0].mxu0
        %v2498 = vadd.f32 0.0, %v2497
        %v2499 = vpop.f32.mrb[0].mxu0
        %2500 = vmatprep.mubr.f32.mxu0 0.0
        %2501 = vmatmul.mubr.f32.gmra.mrb[0].mxu0 %v2040
        %v2502 = vpop.f32.mrb[0].mxu0
        %v2503 = vadd.f32 0.0, %v2502
        %v2504 = vpop.f32.mrb[0].mxu0
        %2505 = vmatprep.mubr.f32.mxu0 0.0
        %2506 = vmatmul.mubr.f32.gmra.mrb[0].mxu0 %v2043
        %v2507 = vpop.f32.mrb[0].mxu0
        %v2508 = vadd.f32 0.0, %v2507
        %v2509 = vpop.f32.mrb[0].mxu0
        %2510 = vmatprep.mubr.f32.mxu0 0.0
        %2511 = vmatmul.mubr.f32.gmra.mrb[0].mxu0 %v2046
        %v2512 = vpop.f32.mrb[0].mxu0
        %v2513 = vadd.f32 0.0, %v2512
        %v2514 = vpop.f32.mrb[0].mxu0
        %2515 = vmatprep.mubr.f32.mxu0 0.0
        %2516 = vmatmul.mubr.f32.gmra.mrb[0].mxu0 %v2049
        %v2517 = vpop.f32.mrb[0].mxu0
        %v2518 = vadd.f32 0.0, %v2517
        %v2519 = vpop.f32.mrb[0].mxu0
        %2520 = vmatprep.mubr.f32.mxu0 0.0
        %2521 = vmatmul.mubr.f32.gmra.mrb[0].mxu0 %v2052
        %v2522 = vpop.f32.mrb[0].mxu0
        %v2523 = vadd.f32 0.0, %v2522
        %v2524 = vpop.f32.mrb[0].mxu0
        %2525 = vmatprep.mubr.f32.mxu0 0.0
        %2526 = vmatmul.mubr.f32.gmra.mrb[0].mxu0 %v2055
        %v2527 = vpop.f32.mrb[0].mxu0
        %v2528 = vadd.f32 0.0, %v2527
        %v2529 = vpop.f32.mrb[0].mxu0
        %2530 = vmatprep.mubr.f32.mxu0 0.0
        %2531 = vmatmul.mubr.f32.gmra.mrb[0].mxu0 %v2058
        %v2532 = vpop.f32.mrb[0].mxu0
        %v2533 = vadd.f32 0.0, %v2532
        %v2534 = vpop.f32.mrb[0].mxu0
        %2535 = vmatprep.mubr.f32.mxu0 0.0
        %2536 = vmatmul.mubr.f32.gmra.mrb[0].mxu0 %v2061
        %v2537 = vpop.f32.mrb[0].mxu0
        %v2538 = vadd.f32 0.0, %v2537
        %v2539 = vpop.f32.mrb[0].mxu0
        %2540 = vmatprep.mubr.f32.mxu0 0.0
        %2541 = vmatmul.mubr.f32.gmra.mrb[0].mxu0 %v2064
        %v2542 = vpop.f32.mrb[0].mxu0
        %v2543 = vadd.f32 0.0, %v2542
        %v2544 = vpop.f32.mrb[0].mxu0
        %2545 = vmatprep.mubr.f32.mxu0 0.0
        %2546 = vmatmul.mubr.f32.gmra.mrb[0].mxu0 %v2067
        %v2547 = vpop.f32.mrb[0].mxu0
        %v2548 = vadd.f32 0.0, %v2547
        %v2549 = vpop.f32.mrb[0].mxu0
        %2550 = vdwg.mxu0
        %v2551 = vld [vmem:[%s528] sm:$0xff]
        %v2552 = vld [vmem:[%s528 + $0x8] sm:$0xff]
        %v2553 = vld [vmem:[%s528 + $0x10] sm:$0xff]
        %v2554 = vld [vmem:[%s528 + $0x18] sm:$0xff]
        %v2555 = vld [vmem:[%s528 + $0x20] sm:$0xff]
        %v2556 = vld [vmem:[%s528 + $0x28] sm:$0xff]
        %v2557 = vld [vmem:[%s528 + $0x30] sm:$0xff]
        %v2558 = vld [vmem:[%s528 + $0x38] sm:$0xff]
        %v2559 = vld [vmem:[%s528 + $0x40] sm:$0xff]
        %v2560 = vld [vmem:[%s528 + $0x48] sm:$0xff]
        %v2561 = vld [vmem:[%s528 + $0x50] sm:$0xff]
        %v2562 = vld [vmem:[%s528 + $0x58] sm:$0xff]
        %v2563 = vld [vmem:[%s528 + $0x60] sm:$0xff]
        %v2564 = vld [vmem:[%s528 + $0x68] sm:$0xff]
        %v2565 = vld [vmem:[%s528 + $0x70] sm:$0xff]
        %v2566 = vld [vmem:[%s528 + $0x78] sm:$0xff]
        %v2567 = vld [vmem:[%s528 + $0x80] sm:$0xff]
        %v2568 = vld [vmem:[%s528 + $0x88] sm:$0xff]
        %v2569 = vld [vmem:[%s528 + $0x90] sm:$0xff]
        %v2570 = vld [vmem:[%s528 + $0x98] sm:$0xff]
        %v2571 = vld [vmem:[%s528 + $0xa0] sm:$0xff]
        %v2572 = vld [vmem:[%s528 + $0xa8] sm:$0xff]
        %v2573 = vld [vmem:[%s528 + $0xb0] sm:$0xff]
        %v2574 = vld [vmem:[%s528 + $0xb8] sm:$0xff]
        %v2575 = vld [vmem:[%s528 + $0xc0] sm:$0xff]
        %v2576 = vld [vmem:[%s528 + $0xc8] sm:$0xff]
        %v2577 = vld [vmem:[%s528 + $0xd0] sm:$0xff]
        %v2578 = vld [vmem:[%s528 + $0xd8] sm:$0xff]
        %v2579 = vld [vmem:[%s528 + $0xe0] sm:$0xff]
        %v2580 = vld [vmem:[%s528 + $0xe8] sm:$0xff]
        %v2581 = vld [vmem:[%s528 + $0xf0] sm:$0xff]
        %v2582 = vld [vmem:[%s528 + $0xf8] sm:$0xff]
        %v2583 = vld [vmem:[%s7] sm:$0xff]
        %v2584 = vld [vmem:[%s7 + $0x8] sm:$0xff]
        %v2585 = vld [vmem:[%s7 + $0x10] sm:$0xff]
        %v2587 = vsel %vm1123, %v2551, 0
        %v2590 = vsel %vm1123, %v2552, 0
        %v2593 = vsel %vm1123, %v2553, 0
        %v2596 = vsel %vm1123, %v2554, 0
        %v2599 = vsel %vm1123, %v2555, 0
        %v2602 = vsel %vm1123, %v2556, 0
        %v2605 = vsel %vm1123, %v2557, 0
        %v2608 = vsel %vm1123, %v2558, 0
        %v2611 = vsel %vm1123, %v2559, 0
        %v2614 = vsel %vm1123, %v2560, 0
        %v2617 = vsel %vm1123, %v2561, 0
        %v2620 = vsel %vm1123, %v2562, 0
        %v2623 = vsel %vm1123, %v2563, 0
        %v2626 = vsel %vm1123, %v2564, 0
        %v2629 = vsel %vm1123, %v2565, 0
        %v2632 = vsel %vm1123, %v2566, 0
        %v2635 = vsel %vm1123, %v2567, 0
        %v2638 = vsel %vm1123, %v2568, 0
        %v2641 = vsel %vm1123, %v2569, 0
        %v2644 = vsel %vm1123, %v2570, 0
        %v2647 = vsel %vm1123, %v2571, 0
        %v2650 = vsel %vm1123, %v2572, 0
        %v2653 = vsel %vm1123, %v2573, 0
        %v2656 = vsel %vm1123, %v2574, 0
        %v2659 = vsel %vm1123, %v2575, 0
        %v2662 = vsel %vm1123, %v2576, 0
        %v2665 = vsel %vm1123, %v2577, 0
        %v2668 = vsel %vm1123, %v2578, 0
        %v2671 = vsel %vm1123, %v2579, 0
        %v2674 = vsel %vm1123, %v2580, 0
        %v2677 = vsel %vm1123, %v2581, 0
        %v2680 = vsel %vm1123, %v2582, 0
        %2682 = vmatprep.subr.mxu0 %v2584
        %2683 = vmatpush1.msra.mxu0 %v2583
        %2684 = vmatprep.subr.mxu0 0.0
        %2685 = vmatpush1.msra.mxu0 0.0
        %2686 = vmatprep.subr.mxu0 0.0
        %2687 = vmatpush1.msra.mxu0 0.0
        %2688 = vmatprep.subr.mxu0 0.0
        %2689 = vmatpush1.msra.mxu0 0.0
        %2690 = vmatprep.subr.mxu0 0.0
        %2691 = vmatpush1.msra.mxu0 0.0
        %2692 = vmatprep.subr.mxu0 0.0
        %2693 = vmatpush1.msra.mxu0 0.0
        %2694 = vmatprep.subr.mxu0 0.0
        %2695 = vmatpush1.msra.mxu0 0.0
        %2696 = vmatprep.subr.mxu0 0.0
        %2697 = vmatpush1.msra.mxu0 0.0
        %2698 = vmatprep.subr.mxu0 0.0
        %2699 = vmatpush1.msra.mxu0 0.0
        %2700 = vmatprep.subr.mxu0 0.0
        %2701 = vmatpush1.msra.mxu0 0.0
        %2702 = vmatprep.subr.mxu0 0.0
        %2703 = vmatpush1.msra.mxu0 0.0
        %2704 = vmatprep.subr.mxu0 0.0
        %2705 = vmatpush1.msra.mxu0 0.0
        %2706 = vmatprep.subr.mxu0 0.0
        %2707 = vmatpush1.msra.mxu0 0.0
        %2708 = vmatprep.subr.mxu0 0.0
        %2709 = vmatpush1.msra.mxu0 0.0
        %2710 = vmatprep.subr.mxu0 0.0
        %2711 = vmatpush1.msra.mxu0 0.0
        %2712 = vmatprep.subr.mxu0 0.0
        %2713 = vmatpush1.msra.mxu0 0.0
        %2714 = vmatprep.subr.mxu0 0.0
        %2715 = vmatpush1.msra.mxu0 0.0
        %2716 = vmatprep.subr.mxu0 0.0
        %2717 = vmatpush1.msra.mxu0 0.0
        %2718 = vmatprep.subr.mxu0 0.0
        %2719 = vmatpush1.msra.mxu0 0.0
        %2720 = vmatprep.subr.mxu0 0.0
        %2721 = vmatpush1.msra.mxu0 0.0
        %2722 = vmatprep.subr.mxu0 0.0
        %2723 = vmatpush1.msra.mxu0 0.0
        %2724 = vmatprep.subr.mxu0 0.0
        %2725 = vmatpush1.msra.mxu0 0.0
        %2726 = vmatprep.subr.mxu0 0.0
        %2727 = vmatpush1.msra.mxu0 0.0
        %2728 = vmatprep.subr.mxu0 0.0
        %2729 = vmatpush1.msra.mxu0 0.0
        %2730 = vmatprep.subr.mxu0 0.0
        %2731 = vmatpush1.msra.mxu0 0.0
        %2732 = vmatprep.subr.mxu0 0.0
        %2733 = vmatpush1.msra.mxu0 0.0
        %2734 = vmatprep.subr.mxu0 0.0
        %2735 = vmatpush1.msra.mxu0 0.0
        %2736 = vmatprep.subr.mxu0 0.0
        %2737 = vmatpush1.msra.mxu0 0.0
        %2738 = vmatprep.subr.mxu0 0.0
        %2739 = vmatpush1.msra.mxu0 0.0
        %2740 = vmatprep.subr.mxu0 0.0
        %2741 = vmatpush1.msra.mxu0 0.0
        %2742 = vmatprep.subr.mxu0 0.0
        %2743 = vmatpush1.msra.mxu0 0.0
        %2744 = vmatprep.subr.mxu0 0.0
        %2745 = vmatpush1.msra.mxu0 0.0
        %2746 = vmatprep.mubr.f32.mxu0 0.0
        %2747 = vmatmul.mubr.f32.gmra.mrb[0].mxu0 %v2587
        %v2748 = vpop.f32.mrb[0].mxu0
        %v2749 = vadd.f32 0.0, %v2748
        %v2750 = vpop.f32.mrb[0].mxu0
        %v2751 = vadd.f32 0.0, %v2750
        %2752 = vmatprep.mubr.f32.mxu0 0.0
        %2753 = vmatmul.mubr.f32.gmra.mrb[0].mxu0 %v2590
        %v2754 = vpop.f32.mrb[0].mxu0
        %v2755 = vadd.f32 0.0, %v2754
        %v2756 = vpop.f32.mrb[0].mxu0
        %v2757 = vadd.f32 0.0, %v2756
        %2758 = vmatprep.mubr.f32.mxu0 0.0
        %2759 = vmatmul.mubr.f32.gmra.mrb[0].mxu0 %v2593
        %v2760 = vpop.f32.mrb[0].mxu0
        %v2761 = vadd.f32 0.0, %v2760
        %v2762 = vpop.f32.mrb[0].mxu0
        %v2763 = vadd.f32 0.0, %v2762
        %2764 = vmatprep.mubr.f32.mxu0 0.0
        %2765 = vmatmul.mubr.f32.gmra.mrb[0].mxu0 %v2596
        %v2766 = vpop.f32.mrb[0].mxu0
        %v2767 = vadd.f32 0.0, %v2766
        %v2768 = vpop.f32.mrb[0].mxu0
        %v2769 = vadd.f32 0.0, %v2768
        %2770 = vmatprep.mubr.f32.mxu0 0.0
        %2771 = vmatmul.mubr.f32.gmra.mrb[0].mxu0 %v2599
        %v2772 = vpop.f32.mrb[0].mxu0
        %v2773 = vadd.f32 0.0, %v2772
        %v2774 = vpop.f32.mrb[0].mxu0
        %v2775 = vadd.f32 0.0, %v2774
        %2776 = vmatprep.mubr.f32.mxu0 0.0
        %2777 = vmatmul.mubr.f32.gmra.mrb[0].mxu0 %v2602
        %v2778 = vpop.f32.mrb[0].mxu0
        %v2779 = vadd.f32 0.0, %v2778
        %v2780 = vpop.f32.mrb[0].mxu0
        %v2781 = vadd.f32 0.0, %v2780
        %2782 = vmatprep.mubr.f32.mxu0 0.0
        %2783 = vmatmul.mubr.f32.gmra.mrb[0].mxu0 %v2605
        %v2784 = vpop.f32.mrb[0].mxu0
        %v2785 = vadd.f32 0.0, %v2784
        %v2786 = vpop.f32.mrb[0].mxu0
        %v2787 = vadd.f32 0.0, %v2786
        %2788 = vmatprep.mubr.f32.mxu0 0.0
        %2789 = vmatmul.mubr.f32.gmra.mrb[0].mxu0 %v2608
        %v2790 = vpop.f32.mrb[0].mxu0
        %v2791 = vadd.f32 0.0, %v2790
        %v2792 = vpop.f32.mrb[0].mxu0
        %v2793 = vadd.f32 0.0, %v2792
        %2794 = vmatprep.mubr.f32.mxu0 0.0
        %2795 = vmatmul.mubr.f32.gmra.mrb[0].mxu0 %v2611
        %v2796 = vpop.f32.mrb[0].mxu0
        %v2797 = vadd.f32 0.0, %v2796
        %v2798 = vpop.f32.mrb[0].mxu0
        %v2799 = vadd.f32 0.0, %v2798
        %2800 = vmatprep.mubr.f32.mxu0 0.0
        %2801 = vmatmul.mubr.f32.gmra.mrb[0].mxu0 %v2614
        %v2802 = vpop.f32.mrb[0].mxu0
        %v2803 = vadd.f32 0.0, %v2802
        %v2804 = vpop.f32.mrb[0].mxu0
        %v2805 = vadd.f32 0.0, %v2804
        %2806 = vmatprep.mubr.f32.mxu0 0.0
        %2807 = vmatmul.mubr.f32.gmra.mrb[0].mxu0 %v2617
        %v2808 = vpop.f32.mrb[0].mxu0
        %v2809 = vadd.f32 0.0, %v2808
        %v2810 = vpop.f32.mrb[0].mxu0
        %v2811 = vadd.f32 0.0, %v2810
        %2812 = vmatprep.mubr.f32.mxu0 0.0
        %2813 = vmatmul.mubr.f32.gmra.mrb[0].mxu0 %v2620
        %v2814 = vpop.f32.mrb[0].mxu0
        %v2815 = vadd.f32 0.0, %v2814
        %v2816 = vpop.f32.mrb[0].mxu0
        %v2817 = vadd.f32 0.0, %v2816
        %2818 = vmatprep.mubr.f32.mxu0 0.0
        %2819 = vmatmul.mubr.f32.gmra.mrb[0].mxu0 %v2623
        %v2820 = vpop.f32.mrb[0].mxu0
        %v2821 = vadd.f32 0.0, %v2820
        %v2822 = vpop.f32.mrb[0].mxu0
        %v2823 = vadd.f32 0.0, %v2822
        %2824 = vmatprep.mubr.f32.mxu0 0.0
        %2825 = vmatmul.mubr.f32.gmra.mrb[0].mxu0 %v2626
        %v2826 = vpop.f32.mrb[0].mxu0
        %v2827 = vadd.f32 0.0, %v2826
        %v2828 = vpop.f32.mrb[0].mxu0
        %v2829 = vadd.f32 0.0, %v2828
        %2830 = vmatprep.mubr.f32.mxu0 0.0
        %2831 = vmatmul.mubr.f32.gmra.mrb[0].mxu0 %v2629
        %v2832 = vpop.f32.mrb[0].mxu0
        %v2833 = vadd.f32 0.0, %v2832
        %v2834 = vpop.f32.mrb[0].mxu0
        %v2835 = vadd.f32 0.0, %v2834
        %2836 = vmatprep.mubr.f32.mxu0 0.0
        %2837 = vmatmul.mubr.f32.gmra.mrb[0].mxu0 %v2632
        %v2838 = vpop.f32.mrb[0].mxu0
        %v2839 = vadd.f32 0.0, %v2838
        %v2840 = vpop.f32.mrb[0].mxu0
        %v2841 = vadd.f32 0.0, %v2840
        %2842 = vmatprep.mubr.f32.mxu0 0.0
        %2843 = vmatmul.mubr.f32.gmra.mrb[0].mxu0 %v2635
        %v2844 = vpop.f32.mrb[0].mxu0
        %v2845 = vadd.f32 0.0, %v2844
        %v2846 = vpop.f32.mrb[0].mxu0
        %v2847 = vadd.f32 0.0, %v2846
        %2848 = vmatprep.mubr.f32.mxu0 0.0
        %2849 = vmatmul.mubr.f32.gmra.mrb[0].mxu0 %v2638
        %v2850 = vpop.f32.mrb[0].mxu0
        %v2851 = vadd.f32 0.0, %v2850
        %v2852 = vpop.f32.mrb[0].mxu0
        %v2853 = vadd.f32 0.0, %v2852
        %2854 = vmatprep.mubr.f32.mxu0 0.0
        %2855 = vmatmul.mubr.f32.gmra.mrb[0].mxu0 %v2641
        %v2856 = vpop.f32.mrb[0].mxu0
        %v2857 = vadd.f32 0.0, %v2856
        %v2858 = vpop.f32.mrb[0].mxu0
        %v2859 = vadd.f32 0.0, %v2858
        %2860 = vmatprep.mubr.f32.mxu0 0.0
        %2861 = vmatmul.mubr.f32.gmra.mrb[0].mxu0 %v2644
        %v2862 = vpop.f32.mrb[0].mxu0
        %v2863 = vadd.f32 0.0, %v2862
        %v2864 = vpop.f32.mrb[0].mxu0
        %v2865 = vadd.f32 0.0, %v2864
        %2866 = vmatprep.mubr.f32.mxu0 0.0
        %2867 = vmatmul.mubr.f32.gmra.mrb[0].mxu0 %v2647
        %v2868 = vpop.f32.mrb[0].mxu0
        %v2869 = vadd.f32 0.0, %v2868
        %v2870 = vpop.f32.mrb[0].mxu0
        %v2871 = vadd.f32 0.0, %v2870
        %2872 = vmatprep.mubr.f32.mxu0 0.0
        %2873 = vmatmul.mubr.f32.gmra.mrb[0].mxu0 %v2650
        %v2874 = vpop.f32.mrb[0].mxu0
        %v2875 = vadd.f32 0.0, %v2874
        %v2876 = vpop.f32.mrb[0].mxu0
        %v2877 = vadd.f32 0.0, %v2876
        %2878 = vmatprep.mubr.f32.mxu0 0.0
        %2879 = vmatmul.mubr.f32.gmra.mrb[0].mxu0 %v2653
        %v2880 = vpop.f32.mrb[0].mxu0
        %v2881 = vadd.f32 0.0, %v2880
        %v2882 = vpop.f32.mrb[0].mxu0
        %v2883 = vadd.f32 0.0, %v2882
        %2884 = vmatprep.mubr.f32.mxu0 0.0
        %2885 = vmatmul.mubr.f32.gmra.mrb[0].mxu0 %v2656
        %v2886 = vpop.f32.mrb[0].mxu0
        %v2887 = vadd.f32 0.0, %v2886
        %v2888 = vpop.f32.mrb[0].mxu0
        %v2889 = vadd.f32 0.0, %v2888
        %2890 = vmatprep.mubr.f32.mxu0 0.0
        %2891 = vmatmul.mubr.f32.gmra.mrb[0].mxu0 %v2659
        %v2892 = vpop.f32.mrb[0].mxu0
        %v2893 = vadd.f32 0.0, %v2892
        %v2894 = vpop.f32.mrb[0].mxu0
        %v2895 = vadd.f32 0.0, %v2894
        %2896 = vmatprep.mubr.f32.mxu0 0.0
        %2897 = vmatmul.mubr.f32.gmra.mrb[0].mxu0 %v2662
        %v2898 = vpop.f32.mrb[0].mxu0
        %v2899 = vadd.f32 0.0, %v2898
        %v2900 = vpop.f32.mrb[0].mxu0
        %v2901 = vadd.f32 0.0, %v2900
        %2902 = vmatprep.mubr.f32.mxu0 0.0
        %2903 = vmatmul.mubr.f32.gmra.mrb[0].mxu0 %v2665
        %v2904 = vpop.f32.mrb[0].mxu0
        %v2905 = vadd.f32 0.0, %v2904
        %v2906 = vpop.f32.mrb[0].mxu0
        %v2907 = vadd.f32 0.0, %v2906
        %2908 = vmatprep.mubr.f32.mxu0 0.0
        %2909 = vmatmul.mubr.f32.gmra.mrb[0].mxu0 %v2668
        %v2910 = vpop.f32.mrb[0].mxu0
        %v2911 = vadd.f32 0.0, %v2910
        %v2912 = vpop.f32.mrb[0].mxu0
        %v2913 = vadd.f32 0.0, %v2912
        %2914 = vmatprep.mubr.f32.mxu0 0.0
        %2915 = vmatmul.mubr.f32.gmra.mrb[0].mxu0 %v2671
        %v2916 = vpop.f32.mrb[0].mxu0
        %v2917 = vadd.f32 0.0, %v2916
        %v2918 = vpop.f32.mrb[0].mxu0
        %v2919 = vadd.f32 0.0, %v2918
        %2920 = vmatprep.mubr.f32.mxu0 0.0
        %2921 = vmatmul.mubr.f32.gmra.mrb[0].mxu0 %v2674
        %v2922 = vpop.f32.mrb[0].mxu0
        %v2923 = vadd.f32 0.0, %v2922
        %v2924 = vpop.f32.mrb[0].mxu0
        %v2925 = vadd.f32 0.0, %v2924
        %2926 = vmatprep.mubr.f32.mxu0 0.0
        %2927 = vmatmul.mubr.f32.gmra.mrb[0].mxu0 %v2677
        %v2928 = vpop.f32.mrb[0].mxu0
        %v2929 = vadd.f32 0.0, %v2928
        %v2930 = vpop.f32.mrb[0].mxu0
        %v2931 = vadd.f32 0.0, %v2930
        %2932 = vmatprep.mubr.f32.mxu0 0.0
        %2933 = vmatmul.mubr.f32.gmra.mrb[0].mxu0 %v2680
        %v2934 = vpop.f32.mrb[0].mxu0
        %v2935 = vadd.f32 0.0, %v2934
        %v2936 = vpop.f32.mrb[0].mxu0
        %v2937 = vadd.f32 0.0, %v2936
        %2938 = vdwg.mxu0
        %2939 = vmatprep.subr.mxu0 0.0
        %2940 = vmatpush1.msra.mxu0 %v2585
        %2941 = vmatprep.subr.mxu0 0.0
        %2942 = vmatpush1.msra.mxu0 0.0
        %2943 = vmatprep.subr.mxu0 0.0
        %2944 = vmatpush1.msra.mxu0 0.0
        %2945 = vmatprep.subr.mxu0 0.0
        %2946 = vmatpush1.msra.mxu0 0.0
        %2947 = vmatprep.subr.mxu0 0.0
        %2948 = vmatpush1.msra.mxu0 0.0
        %2949 = vmatprep.subr.mxu0 0.0
        %2950 = vmatpush1.msra.mxu0 0.0
        %2951 = vmatprep.subr.mxu0 0.0
        %2952 = vmatpush1.msra.mxu0 0.0
        %2953 = vmatprep.subr.mxu0 0.0
        %2954 = vmatpush1.msra.mxu0 0.0
        %2955 = vmatprep.subr.mxu0 0.0
        %2956 = vmatpush1.msra.mxu0 0.0
        %2957 = vmatprep.subr.mxu0 0.0
        %2958 = vmatpush1.msra.mxu0 0.0
        %2959 = vmatprep.subr.mxu0 0.0
        %2960 = vmatpush1.msra.mxu0 0.0
        %2961 = vmatprep.subr.mxu0 0.0
        %2962 = vmatpush1.msra.mxu0 0.0
        %2963 = vmatprep.subr.mxu0 0.0
        %2964 = vmatpush1.msra.mxu0 0.0
        %2965 = vmatprep.subr.mxu0 0.0
        %2966 = vmatpush1.msra.mxu0 0.0
        %2967 = vmatprep.subr.mxu0 0.0
        %2968 = vmatpush1.msra.mxu0 0.0
        %2969 = vmatprep.subr.mxu0 0.0
        %2970 = vmatpush1.msra.mxu0 0.0
        %2971 = vmatprep.subr.mxu0 0.0
        %2972 = vmatpush1.msra.mxu0 0.0
        %2973 = vmatprep.subr.mxu0 0.0
        %2974 = vmatpush1.msra.mxu0 0.0
        %2975 = vmatprep.subr.mxu0 0.0
        %2976 = vmatpush1.msra.mxu0 0.0
        %2977 = vmatprep.subr.mxu0 0.0
        %2978 = vmatpush1.msra.mxu0 0.0
        %2979 = vmatprep.subr.mxu0 0.0
        %2980 = vmatpush1.msra.mxu0 0.0
        %2981 = vmatprep.subr.mxu0 0.0
        %2982 = vmatpush1.msra.mxu0 0.0
        %2983 = vmatprep.subr.mxu0 0.0
        %2984 = vmatpush1.msra.mxu0 0.0
        %2985 = vmatprep.subr.mxu0 0.0
        %2986 = vmatpush1.msra.mxu0 0.0
        %2987 = vmatprep.subr.mxu0 0.0
        %2988 = vmatpush1.msra.mxu0 0.0
        %2989 = vmatprep.subr.mxu0 0.0
        %2990 = vmatpush1.msra.mxu0 0.0
        %2991 = vmatprep.subr.mxu0 0.0
        %2992 = vmatpush1.msra.mxu0 0.0
        %2993 = vmatprep.subr.mxu0 0.0
        %2994 = vmatpush1.msra.mxu0 0.0
        %2995 = vmatprep.subr.mxu0 0.0
        %2996 = vmatpush1.msra.mxu0 0.0
        %2997 = vmatprep.subr.mxu0 0.0
        %2998 = vmatpush1.msra.mxu0 0.0
        %2999 = vmatprep.subr.mxu0 0.0
        %3000 = vmatpush1.msra.mxu0 0.0
        %3001 = vmatprep.subr.mxu0 0.0
        %3002 = vmatpush1.msra.mxu0 0.0
        %3003 = vmatprep.mubr.f32.mxu0 0.0
        %3004 = vmatmul.mubr.f32.gmra.mrb[0].mxu0 %v2587
        %v3005 = vpop.f32.mrb[0].mxu0
        %v3006 = vadd.f32 0.0, %v3005
        %v3007 = vpop.f32.mrb[0].mxu0
        %3008 = vmatprep.mubr.f32.mxu0 0.0
        %3009 = vmatmul.mubr.f32.gmra.mrb[0].mxu0 %v2590
        %v3010 = vpop.f32.mrb[0].mxu0
        %v3011 = vadd.f32 0.0, %v3010
        %v3012 = vpop.f32.mrb[0].mxu0
        %3013 = vmatprep.mubr.f32.mxu0 0.0
        %3014 = vmatmul.mubr.f32.gmra.mrb[0].mxu0 %v2593
        %v3015 = vpop.f32.mrb[0].mxu0
        %v3016 = vadd.f32 0.0, %v3015
        %v3017 = vpop.f32.mrb[0].mxu0
        %3018 = vmatprep.mubr.f32.mxu0 0.0
        %3019 = vmatmul.mubr.f32.gmra.mrb[0].mxu0 %v2596
        %v3020 = vpop.f32.mrb[0].mxu0
        %v3021 = vadd.f32 0.0, %v3020
        %v3022 = vpop.f32.mrb[0].mxu0
        %3023 = vmatprep.mubr.f32.mxu0 0.0
        %3024 = vmatmul.mubr.f32.gmra.mrb[0].mxu0 %v2599
        %v3025 = vpop.f32.mrb[0].mxu0
        %v3026 = vadd.f32 0.0, %v3025
        %v3027 = vpop.f32.mrb[0].mxu0
        %3028 = vmatprep.mubr.f32.mxu0 0.0
        %3029 = vmatmul.mubr.f32.gmra.mrb[0].mxu0 %v2602
        %v3030 = vpop.f32.mrb[0].mxu0
        %v3031 = vadd.f32 0.0, %v3030
        %v3032 = vpop.f32.mrb[0].mxu0
        %3033 = vmatprep.mubr.f32.mxu0 0.0
        %3034 = vmatmul.mubr.f32.gmra.mrb[0].mxu0 %v2605
        %v3035 = vpop.f32.mrb[0].mxu0
        %v3036 = vadd.f32 0.0, %v3035
        %v3037 = vpop.f32.mrb[0].mxu0
        %3038 = vmatprep.mubr.f32.mxu0 0.0
        %3039 = vmatmul.mubr.f32.gmra.mrb[0].mxu0 %v2608
        %v3040 = vpop.f32.mrb[0].mxu0
        %v3041 = vadd.f32 0.0, %v3040
        %v3042 = vpop.f32.mrb[0].mxu0
        %3043 = vmatprep.mubr.f32.mxu0 0.0
        %3044 = vmatmul.mubr.f32.gmra.mrb[0].mxu0 %v2611
        %v3045 = vpop.f32.mrb[0].mxu0
        %v3046 = vadd.f32 0.0, %v3045
        %v3047 = vpop.f32.mrb[0].mxu0
        %3048 = vmatprep.mubr.f32.mxu0 0.0
        %3049 = vmatmul.mubr.f32.gmra.mrb[0].mxu0 %v2614
        %v3050 = vpop.f32.mrb[0].mxu0
        %v3051 = vadd.f32 0.0, %v3050
        %v3052 = vpop.f32.mrb[0].mxu0
        %3053 = vmatprep.mubr.f32.mxu0 0.0
        %3054 = vmatmul.mubr.f32.gmra.mrb[0].mxu0 %v2617
        %v3055 = vpop.f32.mrb[0].mxu0
        %v3056 = vadd.f32 0.0, %v3055
        %v3057 = vpop.f32.mrb[0].mxu0
        %3058 = vmatprep.mubr.f32.mxu0 0.0
        %3059 = vmatmul.mubr.f32.gmra.mrb[0].mxu0 %v2620
        %v3060 = vpop.f32.mrb[0].mxu0
        %v3061 = vadd.f32 0.0, %v3060
        %v3062 = vpop.f32.mrb[0].mxu0
        %3063 = vmatprep.mubr.f32.mxu0 0.0
        %3064 = vmatmul.mubr.f32.gmra.mrb[0].mxu0 %v2623
        %v3065 = vpop.f32.mrb[0].mxu0
        %v3066 = vadd.f32 0.0, %v3065
        %v3067 = vpop.f32.mrb[0].mxu0
        %3068 = vmatprep.mubr.f32.mxu0 0.0
        %3069 = vmatmul.mubr.f32.gmra.mrb[0].mxu0 %v2626
        %v3070 = vpop.f32.mrb[0].mxu0
        %v3071 = vadd.f32 0.0, %v3070
        %v3072 = vpop.f32.mrb[0].mxu0
        %3073 = vmatprep.mubr.f32.mxu0 0.0
        %3074 = vmatmul.mubr.f32.gmra.mrb[0].mxu0 %v2629
        %v3075 = vpop.f32.mrb[0].mxu0
        %v3076 = vadd.f32 0.0, %v3075
        %v3077 = vpop.f32.mrb[0].mxu0
        %3078 = vmatprep.mubr.f32.mxu0 0.0
        %3079 = vmatmul.mubr.f32.gmra.mrb[0].mxu0 %v2632
        %v3080 = vpop.f32.mrb[0].mxu0
        %v3081 = vadd.f32 0.0, %v3080
        %v3082 = vpop.f32.mrb[0].mxu0
        %3083 = vmatprep.mubr.f32.mxu0 0.0
        %3084 = vmatmul.mubr.f32.gmra.mrb[0].mxu0 %v2635
        %v3085 = vpop.f32.mrb[0].mxu0
        %v3086 = vadd.f32 0.0, %v3085
        %v3087 = vpop.f32.mrb[0].mxu0
        %3088 = vmatprep.mubr.f32.mxu0 0.0
        %3089 = vmatmul.mubr.f32.gmra.mrb[0].mxu0 %v2638
        %v3090 = vpop.f32.mrb[0].mxu0
        %v3091 = vadd.f32 0.0, %v3090
        %v3092 = vpop.f32.mrb[0].mxu0
        %3093 = vmatprep.mubr.f32.mxu0 0.0
        %3094 = vmatmul.mubr.f32.gmra.mrb[0].mxu0 %v2641
        %v3095 = vpop.f32.mrb[0].mxu0
        %v3096 = vadd.f32 0.0, %v3095
        %v3097 = vpop.f32.mrb[0].mxu0
        %3098 = vmatprep.mubr.f32.mxu0 0.0
        %3099 = vmatmul.mubr.f32.gmra.mrb[0].mxu0 %v2644
        %v3100 = vpop.f32.mrb[0].mxu0
        %v3101 = vadd.f32 0.0, %v3100
        %v3102 = vpop.f32.mrb[0].mxu0
        %3103 = vmatprep.mubr.f32.mxu0 0.0
        %3104 = vmatmul.mubr.f32.gmra.mrb[0].mxu0 %v2647
        %v3105 = vpop.f32.mrb[0].mxu0
        %v3106 = vadd.f32 0.0, %v3105
        %v3107 = vpop.f32.mrb[0].mxu0
        %3108 = vmatprep.mubr.f32.mxu0 0.0
        %3109 = vmatmul.mubr.f32.gmra.mrb[0].mxu0 %v2650
        %v3110 = vpop.f32.mrb[0].mxu0
        %v3111 = vadd.f32 0.0, %v3110
        %v3112 = vpop.f32.mrb[0].mxu0
        %3113 = vmatprep.mubr.f32.mxu0 0.0
        %3114 = vmatmul.mubr.f32.gmra.mrb[0].mxu0 %v2653
        %v3115 = vpop.f32.mrb[0].mxu0
        %v3116 = vadd.f32 0.0, %v3115
        %v3117 = vpop.f32.mrb[0].mxu0
        %3118 = vmatprep.mubr.f32.mxu0 0.0
        %3119 = vmatmul.mubr.f32.gmra.mrb[0].mxu0 %v2656
        %v3120 = vpop.f32.mrb[0].mxu0
        %v3121 = vadd.f32 0.0, %v3120
        %v3122 = vpop.f32.mrb[0].mxu0
        %3123 = vmatprep.mubr.f32.mxu0 0.0
        %3124 = vmatmul.mubr.f32.gmra.mrb[0].mxu0 %v2659
        %v3125 = vpop.f32.mrb[0].mxu0
        %v3126 = vadd.f32 0.0, %v3125
        %v3127 = vpop.f32.mrb[0].mxu0
        %3128 = vmatprep.mubr.f32.mxu0 0.0
        %3129 = vmatmul.mubr.f32.gmra.mrb[0].mxu0 %v2662
        %v3130 = vpop.f32.mrb[0].mxu0
        %v3131 = vadd.f32 0.0, %v3130
        %v3132 = vpop.f32.mrb[0].mxu0
        %3133 = vmatprep.mubr.f32.mxu0 0.0
        %3134 = vmatmul.mubr.f32.gmra.mrb[0].mxu0 %v2665
        %v3135 = vpop.f32.mrb[0].mxu0
        %v3136 = vadd.f32 0.0, %v3135
        %v3137 = vpop.f32.mrb[0].mxu0
        %3138 = vmatprep.mubr.f32.mxu0 0.0
        %3139 = vmatmul.mubr.f32.gmra.mrb[0].mxu0 %v2668
        %v3140 = vpop.f32.mrb[0].mxu0
        %v3141 = vadd.f32 0.0, %v3140
        %v3142 = vpop.f32.mrb[0].mxu0
        %3143 = vmatprep.mubr.f32.mxu0 0.0
        %3144 = vmatmul.mubr.f32.gmra.mrb[0].mxu0 %v2671
        %v3145 = vpop.f32.mrb[0].mxu0
        %v3146 = vadd.f32 0.0, %v3145
        %v3147 = vpop.f32.mrb[0].mxu0
        %3148 = vmatprep.mubr.f32.mxu0 0.0
        %3149 = vmatmul.mubr.f32.gmra.mrb[0].mxu0 %v2674
        %v3150 = vpop.f32.mrb[0].mxu0
        %v3151 = vadd.f32 0.0, %v3150
        %v3152 = vpop.f32.mrb[0].mxu0
        %3153 = vmatprep.mubr.f32.mxu0 0.0
        %3154 = vmatmul.mubr.f32.gmra.mrb[0].mxu0 %v2677
        %v3155 = vpop.f32.mrb[0].mxu0
        %v3156 = vadd.f32 0.0, %v3155
        %v3157 = vpop.f32.mrb[0].mxu0
        %3158 = vmatprep.mubr.f32.mxu0 0.0
        %3159 = vmatmul.mubr.f32.gmra.mrb[0].mxu0 %v2680
        %v3160 = vpop.f32.mrb[0].mxu0
        %v3161 = vadd.f32 0.0, %v3160
        %v3162 = vpop.f32.mrb[0].mxu0
        %3163 = vdwg.mxu0
        %v3164 = vld [vmem:[%s534] sm:$0xff]
        %v3165 = vld [vmem:[%s534 + $0x8] sm:$0xff]
        %v3166 = vld [vmem:[%s534 + $0x10] sm:$0xff]
        %v3167 = vld [vmem:[%s534 + $0x18] sm:$0xff]
        %v3168 = vld [vmem:[%s534 + $0x20] sm:$0xff]
        %v3169 = vld [vmem:[%s534 + $0x28] sm:$0xff]
        %v3170 = vld [vmem:[%s534 + $0x30] sm:$0xff]
        %v3171 = vld [vmem:[%s534 + $0x38] sm:$0xff]
        %v3172 = vld [vmem:[%s534 + $0x40] sm:$0xff]
        %v3173 = vld [vmem:[%s534 + $0x48] sm:$0xff]
        %v3174 = vld [vmem:[%s534 + $0x50] sm:$0xff]
        %v3175 = vld [vmem:[%s534 + $0x58] sm:$0xff]
        %v3176 = vld [vmem:[%s534 + $0x60] sm:$0xff]
        %v3177 = vld [vmem:[%s534 + $0x68] sm:$0xff]
        %v3178 = vld [vmem:[%s534 + $0x70] sm:$0xff]
        %v3179 = vld [vmem:[%s534 + $0x78] sm:$0xff]
        %v3180 = vld [vmem:[%s534 + $0x80] sm:$0xff]
        %v3181 = vld [vmem:[%s534 + $0x88] sm:$0xff]
        %v3182 = vld [vmem:[%s534 + $0x90] sm:$0xff]
        %v3183 = vld [vmem:[%s534 + $0x98] sm:$0xff]
        %v3184 = vld [vmem:[%s534 + $0xa0] sm:$0xff]
        %v3185 = vld [vmem:[%s534 + $0xa8] sm:$0xff]
        %v3186 = vld [vmem:[%s534 + $0xb0] sm:$0xff]
        %v3187 = vld [vmem:[%s534 + $0xb8] sm:$0xff]
        %v3188 = vld [vmem:[%s534 + $0xc0] sm:$0xff]
        %v3189 = vld [vmem:[%s534 + $0xc8] sm:$0xff]
        %v3190 = vld [vmem:[%s534 + $0xd0] sm:$0xff]
        %v3191 = vld [vmem:[%s534 + $0xd8] sm:$0xff]
        %v3192 = vld [vmem:[%s534 + $0xe0] sm:$0xff]
        %v3193 = vld [vmem:[%s534 + $0xe8] sm:$0xff]
        %v3194 = vld [vmem:[%s534 + $0xf0] sm:$0xff]
        %v3195 = vld [vmem:[%s534 + $0xf8] sm:$0xff]
        %v3196 = vld [vmem:[%s8] sm:$0xff]
        %v3198 = vsel %vm1123, %v3164, 0
        %v3201 = vsel %vm1123, %v3165, 0
        %v3204 = vsel %vm1123, %v3166, 0
        %v3207 = vsel %vm1123, %v3167, 0
        %v3210 = vsel %vm1123, %v3168, 0
        %v3213 = vsel %vm1123, %v3169, 0
        %v3216 = vsel %vm1123, %v3170, 0
        %v3219 = vsel %vm1123, %v3171, 0
        %v3222 = vsel %vm1123, %v3172, 0
        %v3225 = vsel %vm1123, %v3173, 0
        %v3228 = vsel %vm1123, %v3174, 0
        %v3231 = vsel %vm1123, %v3175, 0
        %v3234 = vsel %vm1123, %v3176, 0
        %v3237 = vsel %vm1123, %v3177, 0
        %v3240 = vsel %vm1123, %v3178, 0
        %v3243 = vsel %vm1123, %v3179, 0
        %v3246 = vsel %vm1123, %v3180, 0
        %v3249 = vsel %vm1123, %v3181, 0
        %v3252 = vsel %vm1123, %v3182, 0
        %v3255 = vsel %vm1123, %v3183, 0
        %v3258 = vsel %vm1123, %v3184, 0
        %v3261 = vsel %vm1123, %v3185, 0
        %v3264 = vsel %vm1123, %v3186, 0
        %v3267 = vsel %vm1123, %v3187, 0
        %v3270 = vsel %vm1123, %v3188, 0
        %v3273 = vsel %vm1123, %v3189, 0
        %v3276 = vsel %vm1123, %v3190, 0
        %v3279 = vsel %vm1123, %v3191, 0
        %v3282 = vsel %vm1123, %v3192, 0
        %v3285 = vsel %vm1123, %v3193, 0
        %v3288 = vsel %vm1123, %v3194, 0
        %v3291 = vsel %vm1123, %v3195, 0
        %3293 = vmatprep.subr.mxu0 0.0
        %3294 = vmatpush1.msra.mxu0 %v3196
        %3295 = vmatprep.subr.mxu0 0.0
        %3296 = vmatpush1.msra.mxu0 0.0
        %3297 = vmatprep.subr.mxu0 0.0
        %3298 = vmatpush1.msra.mxu0 0.0
        %3299 = vmatprep.subr.mxu0 0.0
        %3300 = vmatpush1.msra.mxu0 0.0
        %3301 = vmatprep.subr.mxu0 0.0
        %3302 = vmatpush1.msra.mxu0 0.0
        %3303 = vmatprep.subr.mxu0 0.0
        %3304 = vmatpush1.msra.mxu0 0.0
        %3305 = vmatprep.subr.mxu0 0.0
        %3306 = vmatpush1.msra.mxu0 0.0
        %3307 = vmatprep.subr.mxu0 0.0
        %3308 = vmatpush1.msra.mxu0 0.0
        %3309 = vmatprep.subr.mxu0 0.0
        %3310 = vmatpush1.msra.mxu0 0.0
        %3311 = vmatprep.subr.mxu0 0.0
        %3312 = vmatpush1.msra.mxu0 0.0
        %3313 = vmatprep.subr.mxu0 0.0
        %3314 = vmatpush1.msra.mxu0 0.0
        %3315 = vmatprep.subr.mxu0 0.0
        %3316 = vmatpush1.msra.mxu0 0.0
        %3317 = vmatprep.subr.mxu0 0.0
        %3318 = vmatpush1.msra.mxu0 0.0
        %3319 = vmatprep.subr.mxu0 0.0
        %3320 = vmatpush1.msra.mxu0 0.0
        %3321 = vmatprep.subr.mxu0 0.0
        %3322 = vmatpush1.msra.mxu0 0.0
        %3323 = vmatprep.subr.mxu0 0.0
        %3324 = vmatpush1.msra.mxu0 0.0
        %3325 = vmatprep.subr.mxu0 0.0
        %3326 = vmatpush1.msra.mxu0 0.0
        %3327 = vmatprep.subr.mxu0 0.0
        %3328 = vmatpush1.msra.mxu0 0.0
        %3329 = vmatprep.subr.mxu0 0.0
        %3330 = vmatpush1.msra.mxu0 0.0
        %3331 = vmatprep.subr.mxu0 0.0
        %3332 = vmatpush1.msra.mxu0 0.0
        %3333 = vmatprep.subr.mxu0 0.0
        %3334 = vmatpush1.msra.mxu0 0.0
        %3335 = vmatprep.subr.mxu0 0.0
        %3336 = vmatpush1.msra.mxu0 0.0
        %3337 = vmatprep.subr.mxu0 0.0
        %3338 = vmatpush1.msra.mxu0 0.0
        %3339 = vmatprep.subr.mxu0 0.0
        %3340 = vmatpush1.msra.mxu0 0.0
        %3341 = vmatprep.subr.mxu0 0.0
        %3342 = vmatpush1.msra.mxu0 0.0
        %3343 = vmatprep.subr.mxu0 0.0
        %3344 = vmatpush1.msra.mxu0 0.0
        %3345 = vmatprep.subr.mxu0 0.0
        %3346 = vmatpush1.msra.mxu0 0.0
        %3347 = vmatprep.subr.mxu0 0.0
        %3348 = vmatpush1.msra.mxu0 0.0
        %3349 = vmatprep.subr.mxu0 0.0
        %3350 = vmatpush1.msra.mxu0 0.0
        %3351 = vmatprep.subr.mxu0 0.0
        %3352 = vmatpush1.msra.mxu0 0.0
        %3353 = vmatprep.subr.mxu0 0.0
        %3354 = vmatpush1.msra.mxu0 0.0
        %3355 = vmatprep.subr.mxu0 0.0
        %3356 = vmatpush1.msra.mxu0 0.0
        %3357 = vmatprep.mubr.f32.mxu0 0.0
        %3358 = vmatmul.mubr.f32.gmra.mrb[0].mxu0 %v3198
        %v3359 = vpop.f32.mrb[0].mxu0
        %v3360 = vadd.f32 0.0, %v3359
        %v3361 = vpop.f32.mrb[0].mxu0
        %3362 = vmatprep.mubr.f32.mxu0 0.0
        %3363 = vmatmul.mubr.f32.gmra.mrb[0].mxu0 %v3201
        %v3364 = vpop.f32.mrb[0].mxu0
        %v3365 = vadd.f32 0.0, %v3364
        %v3366 = vpop.f32.mrb[0].mxu0
        %3367 = vmatprep.mubr.f32.mxu0 0.0
        %3368 = vmatmul.mubr.f32.gmra.mrb[0].mxu0 %v3204
        %v3369 = vpop.f32.mrb[0].mxu0
        %v3370 = vadd.f32 0.0, %v3369
        %v3371 = vpop.f32.mrb[0].mxu0
        %3372 = vmatprep.mubr.f32.mxu0 0.0
        %3373 = vmatmul.mubr.f32.gmra.mrb[0].mxu0 %v3207
        %v3374 = vpop.f32.mrb[0].mxu0
        %v3375 = vadd.f32 0.0, %v3374
        %v3376 = vpop.f32.mrb[0].mxu0
        %3377 = vmatprep.mubr.f32.mxu0 0.0
        %3378 = vmatmul.mubr.f32.gmra.mrb[0].mxu0 %v3210
        %v3379 = vpop.f32.mrb[0].mxu0
        %v3380 = vadd.f32 0.0, %v3379
        %v3381 = vpop.f32.mrb[0].mxu0
        %3382 = vmatprep.mubr.f32.mxu0 0.0
        %3383 = vmatmul.mubr.f32.gmra.mrb[0].mxu0 %v3213
        %v3384 = vpop.f32.mrb[0].mxu0
        %v3385 = vadd.f32 0.0, %v3384
        %v3386 = vpop.f32.mrb[0].mxu0
        %3387 = vmatprep.mubr.f32.mxu0 0.0
        %3388 = vmatmul.mubr.f32.gmra.mrb[0].mxu0 %v3216
        %v3389 = vpop.f32.mrb[0].mxu0
        %v3390 = vadd.f32 0.0, %v3389
        %v3391 = vpop.f32.mrb[0].mxu0
        %3392 = vmatprep.mubr.f32.mxu0 0.0
        %3393 = vmatmul.mubr.f32.gmra.mrb[0].mxu0 %v3219
        %v3394 = vpop.f32.mrb[0].mxu0
        %v3395 = vadd.f32 0.0, %v3394
        %v3396 = vpop.f32.mrb[0].mxu0
        %3397 = vmatprep.mubr.f32.mxu0 0.0
        %3398 = vmatmul.mubr.f32.gmra.mrb[0].mxu0 %v3222
        %v3399 = vpop.f32.mrb[0].mxu0
        %v3400 = vadd.f32 0.0, %v3399
        %v3401 = vpop.f32.mrb[0].mxu0
        %3402 = vmatprep.mubr.f32.mxu0 0.0
        %3403 = vmatmul.mubr.f32.gmra.mrb[0].mxu0 %v3225
        %v3404 = vpop.f32.mrb[0].mxu0
        %v3405 = vadd.f32 0.0, %v3404
        %v3406 = vpop.f32.mrb[0].mxu0
        %3407 = vmatprep.mubr.f32.mxu0 0.0
        %3408 = vmatmul.mubr.f32.gmra.mrb[0].mxu0 %v3228
        %v3409 = vpop.f32.mrb[0].mxu0
        %v3410 = vadd.f32 0.0, %v3409
        %v3411 = vpop.f32.mrb[0].mxu0
        %3412 = vmatprep.mubr.f32.mxu0 0.0
        %3413 = vmatmul.mubr.f32.gmra.mrb[0].mxu0 %v3231
        %v3414 = vpop.f32.mrb[0].mxu0
        %v3415 = vadd.f32 0.0, %v3414
        %v3416 = vpop.f32.mrb[0].mxu0
        %3417 = vmatprep.mubr.f32.mxu0 0.0
        %3418 = vmatmul.mubr.f32.gmra.mrb[0].mxu0 %v3234
        %v3419 = vpop.f32.mrb[0].mxu0
        %v3420 = vadd.f32 0.0, %v3419
        %v3421 = vpop.f32.mrb[0].mxu0
        %3422 = vmatprep.mubr.f32.mxu0 0.0
        %3423 = vmatmul.mubr.f32.gmra.mrb[0].mxu0 %v3237
        %v3424 = vpop.f32.mrb[0].mxu0
        %v3425 = vadd.f32 0.0, %v3424
        %v3426 = vpop.f32.mrb[0].mxu0
        %3427 = vmatprep.mubr.f32.mxu0 0.0
        %3428 = vmatmul.mubr.f32.gmra.mrb[0].mxu0 %v3240
        %v3429 = vpop.f32.mrb[0].mxu0
        %v3430 = vadd.f32 0.0, %v3429
        %v3431 = vpop.f32.mrb[0].mxu0
        %3432 = vmatprep.mubr.f32.mxu0 0.0
        %3433 = vmatmul.mubr.f32.gmra.mrb[0].mxu0 %v3243
        %v3434 = vpop.f32.mrb[0].mxu0
        %v3435 = vadd.f32 0.0, %v3434
        %v3436 = vpop.f32.mrb[0].mxu0
        %3437 = vmatprep.mubr.f32.mxu0 0.0
        %3438 = vmatmul.mubr.f32.gmra.mrb[0].mxu0 %v3246
        %v3439 = vpop.f32.mrb[0].mxu0
        %v3440 = vadd.f32 0.0, %v3439
        %v3441 = vpop.f32.mrb[0].mxu0
        %3442 = vmatprep.mubr.f32.mxu0 0.0
        %3443 = vmatmul.mubr.f32.gmra.mrb[0].mxu0 %v3249
        %v3444 = vpop.f32.mrb[0].mxu0
        %v3445 = vadd.f32 0.0, %v3444
        %v3446 = vpop.f32.mrb[0].mxu0
        %3447 = vmatprep.mubr.f32.mxu0 0.0
        %3448 = vmatmul.mubr.f32.gmra.mrb[0].mxu0 %v3252
        %v3449 = vpop.f32.mrb[0].mxu0
        %v3450 = vadd.f32 0.0, %v3449
        %v3451 = vpop.f32.mrb[0].mxu0
        %3452 = vmatprep.mubr.f32.mxu0 0.0
        %3453 = vmatmul.mubr.f32.gmra.mrb[0].mxu0 %v3255
        %v3454 = vpop.f32.mrb[0].mxu0
        %v3455 = vadd.f32 0.0, %v3454
        %v3456 = vpop.f32.mrb[0].mxu0
        %3457 = vmatprep.mubr.f32.mxu0 0.0
        %3458 = vmatmul.mubr.f32.gmra.mrb[0].mxu0 %v3258
        %v3459 = vpop.f32.mrb[0].mxu0
        %v3460 = vadd.f32 0.0, %v3459
        %v3461 = vpop.f32.mrb[0].mxu0
        %3462 = vmatprep.mubr.f32.mxu0 0.0
        %3463 = vmatmul.mubr.f32.gmra.mrb[0].mxu0 %v3261
        %v3464 = vpop.f32.mrb[0].mxu0
        %v3465 = vadd.f32 0.0, %v3464
        %v3466 = vpop.f32.mrb[0].mxu0
        %3467 = vmatprep.mubr.f32.mxu0 0.0
        %3468 = vmatmul.mubr.f32.gmra.mrb[0].mxu0 %v3264
        %v3469 = vpop.f32.mrb[0].mxu0
        %v3470 = vadd.f32 0.0, %v3469
        %v3471 = vpop.f32.mrb[0].mxu0
        %3472 = vmatprep.mubr.f32.mxu0 0.0
        %3473 = vmatmul.mubr.f32.gmra.mrb[0].mxu0 %v3267
        %v3474 = vpop.f32.mrb[0].mxu0
        %v3475 = vadd.f32 0.0, %v3474
        %v3476 = vpop.f32.mrb[0].mxu0
        %3477 = vmatprep.mubr.f32.mxu0 0.0
        %3478 = vmatmul.mubr.f32.gmra.mrb[0].mxu0 %v3270
        %v3479 = vpop.f32.mrb[0].mxu0
        %v3480 = vadd.f32 0.0, %v3479
        %v3481 = vpop.f32.mrb[0].mxu0
        %3482 = vmatprep.mubr.f32.mxu0 0.0
        %3483 = vmatmul.mubr.f32.gmra.mrb[0].mxu0 %v3273
        %v3484 = vpop.f32.mrb[0].mxu0
        %v3485 = vadd.f32 0.0, %v3484
        %v3486 = vpop.f32.mrb[0].mxu0
        %3487 = vmatprep.mubr.f32.mxu0 0.0
        %3488 = vmatmul.mubr.f32.gmra.mrb[0].mxu0 %v3276
        %v3489 = vpop.f32.mrb[0].mxu0
        %v3490 = vadd.f32 0.0, %v3489
        %v3491 = vpop.f32.mrb[0].mxu0
        %3492 = vmatprep.mubr.f32.mxu0 0.0
        %3493 = vmatmul.mubr.f32.gmra.mrb[0].mxu0 %v3279
        %v3494 = vpop.f32.mrb[0].mxu0
        %v3495 = vadd.f32 0.0, %v3494
        %v3496 = vpop.f32.mrb[0].mxu0
        %3497 = vmatprep.mubr.f32.mxu0 0.0
        %3498 = vmatmul.mubr.f32.gmra.mrb[0].mxu0 %v3282
        %v3499 = vpop.f32.mrb[0].mxu0
        %v3500 = vadd.f32 0.0, %v3499
        %v3501 = vpop.f32.mrb[0].mxu0
        %3502 = vmatprep.mubr.f32.mxu0 0.0
        %3503 = vmatmul.mubr.f32.gmra.mrb[0].mxu0 %v3285
        %v3504 = vpop.f32.mrb[0].mxu0
        %v3505 = vadd.f32 0.0, %v3504
        %v3506 = vpop.f32.mrb[0].mxu0
        %3507 = vmatprep.mubr.f32.mxu0 0.0
        %3508 = vmatmul.mubr.f32.gmra.mrb[0].mxu0 %v3288
        %v3509 = vpop.f32.mrb[0].mxu0
        %v3510 = vadd.f32 0.0, %v3509
        %v3511 = vpop.f32.mrb[0].mxu0
        %3512 = vmatprep.mubr.f32.mxu0 0.0
        %3513 = vmatmul.mubr.f32.gmra.mrb[0].mxu0 %v3291
        %v3514 = vpop.f32.mrb[0].mxu0
        %v3515 = vadd.f32 0.0, %v3514
        %v3516 = vpop.f32.mrb[0].mxu0
        %3517 = vdwg.mxu0
        %v3518 = vxor.u32 %v3360, 2147483648
        %v3519 = vxor.u32 %v3365, 2147483648
        %v3520 = vxor.u32 %v3370, 2147483648
        %v3521 = vxor.u32 %v3375, 2147483648
        %v3522 = vxor.u32 %v3380, 2147483648
        %v3523 = vxor.u32 %v3385, 2147483648
        %v3524 = vxor.u32 %v3390, 2147483648
        %v3525 = vxor.u32 %v3395, 2147483648
        %v3526 = vxor.u32 %v3400, 2147483648
        %v3527 = vxor.u32 %v3405, 2147483648
        %v3528 = vxor.u32 %v3410, 2147483648
        %v3529 = vxor.u32 %v3415, 2147483648
        %v3530 = vxor.u32 %v3420, 2147483648
        %v3531 = vxor.u32 %v3425, 2147483648
        %v3532 = vxor.u32 %v3430, 2147483648
        %v3533 = vxor.u32 %v3435, 2147483648
        %v3534 = vxor.u32 %v3440, 2147483648
        %v3535 = vxor.u32 %v3445, 2147483648
        %v3536 = vxor.u32 %v3450, 2147483648
        %v3537 = vxor.u32 %v3455, 2147483648
        %v3538 = vxor.u32 %v3460, 2147483648
        %v3539 = vxor.u32 %v3465, 2147483648
        %v3540 = vxor.u32 %v3470, 2147483648
        %v3541 = vxor.u32 %v3475, 2147483648
        %v3542 = vxor.u32 %v3480, 2147483648
        %v3543 = vxor.u32 %v3485, 2147483648
        %v3544 = vxor.u32 %v3490, 2147483648
        %v3545 = vxor.u32 %v3495, 2147483648
        %v3546 = vxor.u32 %v3500, 2147483648
        %v3547 = vxor.u32 %v3505, 2147483648
        %v3548 = vxor.u32 %v3510, 2147483648
        %v3549 = vxor.u32 %v3515, 2147483648
        %v3550 = vmul.f32 %v3518, 1.442695
        %v3551 = vpow.pop %v3550
        %v3552 = vmul.f32 %v3519, 1.442695
        %v3553 = vpow.pop %v3552
        %v3554 = vmul.f32 %v3520, 1.442695
        %v3555 = vpow.pop %v3554
        %v3556 = vmul.f32 %v3521, 1.442695
        %v3557 = vpow.pop %v3556
        %v3558 = vmul.f32 %v3522, 1.442695
        %v3559 = vpow.pop %v3558
        %v3560 = vmul.f32 %v3523, 1.442695
        %v3561 = vpow.pop %v3560
        %v3562 = vmul.f32 %v3524, 1.442695
        %v3563 = vpow.pop %v3562
        %v3564 = vmul.f32 %v3525, 1.442695
        %v3565 = vpow.pop %v3564
        %v3566 = vmul.f32 %v3526, 1.442695
        %v3567 = vpow.pop %v3566
        %v3568 = vmul.f32 %v3527, 1.442695
        %v3569 = vpow.pop %v3568
        %v3570 = vmul.f32 %v3528, 1.442695
        %v3571 = vpow.pop %v3570
        %v3572 = vmul.f32 %v3529, 1.442695
        %v3573 = vpow.pop %v3572
        %v3574 = vmul.f32 %v3530, 1.442695
        %v3575 = vpow.pop %v3574
        %v3576 = vmul.f32 %v3531, 1.442695
        %v3577 = vpow.pop %v3576
        %v3578 = vmul.f32 %v3532, 1.442695
        %v3579 = vpow.pop %v3578
        %v3580 = vmul.f32 %v3533, 1.442695
        %v3581 = vpow.pop %v3580
        %v3582 = vmul.f32 %v3534, 1.442695
        %v3583 = vpow.pop %v3582
        %v3584 = vmul.f32 %v3535, 1.442695
        %v3585 = vpow.pop %v3584
        %v3586 = vmul.f32 %v3536, 1.442695
        %v3587 = vpow.pop %v3586
        %v3588 = vmul.f32 %v3537, 1.442695
        %v3589 = vpow.pop %v3588
        %v3590 = vmul.f32 %v3538, 1.442695
        %v3591 = vpow.pop %v3590
        %v3592 = vmul.f32 %v3539, 1.442695
        %v3593 = vpow.pop %v3592
        %v3594 = vmul.f32 %v3540, 1.442695
        %v3595 = vpow.pop %v3594
        %v3596 = vmul.f32 %v3541, 1.442695
        %v3597 = vpow.pop %v3596
        %v3598 = vmul.f32 %v3542, 1.442695
        %v3599 = vpow.pop %v3598
        %v3600 = vmul.f32 %v3543, 1.442695
        %v3601 = vpow.pop %v3600
        %v3602 = vmul.f32 %v3544, 1.442695
        %v3603 = vpow.pop %v3602
        %v3604 = vmul.f32 %v3545, 1.442695
        %v3605 = vpow.pop %v3604
        %v3606 = vmul.f32 %v3546, 1.442695
        %v3607 = vpow.pop %v3606
        %v3608 = vmul.f32 %v3547, 1.442695
        %v3609 = vpow.pop %v3608
        %v3610 = vmul.f32 %v3548, 1.442695
        %v3611 = vpow.pop %v3610
        %v3612 = vmul.f32 %v3549, 1.442695
        %v3613 = vpow.pop %v3612
        %v3614 = vadd.f32 %v3551, 1.0
        %v3615 = vadd.f32 %v3553, 1.0
        %v3616 = vadd.f32 %v3555, 1.0
        %v3617 = vadd.f32 %v3557, 1.0
        %v3618 = vadd.f32 %v3559, 1.0
        %v3619 = vadd.f32 %v3561, 1.0
        %v3620 = vadd.f32 %v3563, 1.0
        %v3621 = vadd.f32 %v3565, 1.0
        %v3622 = vadd.f32 %v3567, 1.0
        %v3623 = vadd.f32 %v3569, 1.0
        %v3624 = vadd.f32 %v3571, 1.0
        %v3625 = vadd.f32 %v3573, 1.0
        %v3626 = vadd.f32 %v3575, 1.0
        %v3627 = vadd.f32 %v3577, 1.0
        %v3628 = vadd.f32 %v3579, 1.0
        %v3629 = vadd.f32 %v3581, 1.0
        %v3630 = vadd.f32 %v3583, 1.0
        %v3631 = vadd.f32 %v3585, 1.0
        %v3632 = vadd.f32 %v3587, 1.0
        %v3633 = vadd.f32 %v3589, 1.0
        %v3634 = vadd.f32 %v3591, 1.0
        %v3635 = vadd.f32 %v3593, 1.0
        %v3636 = vadd.f32 %v3595, 1.0
        %v3637 = vadd.f32 %v3597, 1.0
        %v3638 = vadd.f32 %v3599, 1.0
        %v3639 = vadd.f32 %v3601, 1.0
        %v3640 = vadd.f32 %v3603, 1.0
        %v3641 = vadd.f32 %v3605, 1.0
        %v3642 = vadd.f32 %v3607, 1.0
        %v3643 = vadd.f32 %v3609, 1.0
        %v3644 = vadd.f32 %v3611, 1.0
        %v3645 = vadd.f32 %v3613, 1.0
        %v3646 = vrcp.pop %v3614
        %v3647 = vmul.f32 1.0, %v3646
        %v3648 = vrcp.pop %v3615
        %v3649 = vmul.f32 1.0, %v3648
        %v3650 = vrcp.pop %v3616
        %v3651 = vmul.f32 1.0, %v3650
        %v3652 = vrcp.pop %v3617
        %v3653 = vmul.f32 1.0, %v3652
        %v3654 = vrcp.pop %v3618
        %v3655 = vmul.f32 1.0, %v3654
        %v3656 = vrcp.pop %v3619
        %v3657 = vmul.f32 1.0, %v3656
        %v3658 = vrcp.pop %v3620
        %v3659 = vmul.f32 1.0, %v3658
        %v3660 = vrcp.pop %v3621
        %v3661 = vmul.f32 1.0, %v3660
        %v3662 = vrcp.pop %v3622
        %v3663 = vmul.f32 1.0, %v3662
        %v3664 = vrcp.pop %v3623
        %v3665 = vmul.f32 1.0, %v3664
        %v3666 = vrcp.pop %v3624
        %v3667 = vmul.f32 1.0, %v3666
        %v3668 = vrcp.pop %v3625
        %v3669 = vmul.f32 1.0, %v3668
        %v3670 = vrcp.pop %v3626
        %v3671 = vmul.f32 1.0, %v3670
        %v3672 = vrcp.pop %v3627
        %v3673 = vmul.f32 1.0, %v3672
        %v3674 = vrcp.pop %v3628
        %v3675 = vmul.f32 1.0, %v3674
        %v3676 = vrcp.pop %v3629
        %v3677 = vmul.f32 1.0, %v3676
        %v3678 = vrcp.pop %v3630
        %v3679 = vmul.f32 1.0, %v3678
        %v3680 = vrcp.pop %v3631
        %v3681 = vmul.f32 1.0, %v3680
        %v3682 = vrcp.pop %v3632
        %v3683 = vmul.f32 1.0, %v3682
        %v3684 = vrcp.pop %v3633
        %v3685 = vmul.f32 1.0, %v3684
        %v3686 = vrcp.pop %v3634
        %v3687 = vmul.f32 1.0, %v3686
        %v3688 = vrcp.pop %v3635
        %v3689 = vmul.f32 1.0, %v3688
        %v3690 = vrcp.pop %v3636
        %v3691 = vmul.f32 1.0, %v3690
        %v3692 = vrcp.pop %v3637
        %v3693 = vmul.f32 1.0, %v3692
        %v3694 = vrcp.pop %v3638
        %v3695 = vmul.f32 1.0, %v3694
        %v3696 = vrcp.pop %v3639
        %v3697 = vmul.f32 1.0, %v3696
        %v3698 = vrcp.pop %v3640
        %v3699 = vmul.f32 1.0, %v3698
        %v3700 = vrcp.pop %v3641
        %v3701 = vmul.f32 1.0, %v3700
        %v3702 = vrcp.pop %v3642
        %v3703 = vmul.f32 1.0, %v3702
        %v3704 = vrcp.pop %v3643
        %v3705 = vmul.f32 1.0, %v3704
        %v3706 = vrcp.pop %v3644
        %v3707 = vmul.f32 1.0, %v3706
        %v3708 = vrcp.pop %v3645
        %v3709 = vmul.f32 1.0, %v3708
        %v3710 = vmul.f32 %v3360, %v3647
        %v3711 = vmul.f32 %v3365, %v3649
        %v3712 = vmul.f32 %v3370, %v3651
        %v3713 = vmul.f32 %v3375, %v3653
        %v3714 = vmul.f32 %v3380, %v3655
        %v3715 = vmul.f32 %v3385, %v3657
        %v3716 = vmul.f32 %v3390, %v3659
        %v3717 = vmul.f32 %v3395, %v3661
        %v3718 = vmul.f32 %v3400, %v3663
        %v3719 = vmul.f32 %v3405, %v3665
        %v3720 = vmul.f32 %v3410, %v3667
        %v3721 = vmul.f32 %v3415, %v3669
        %v3722 = vmul.f32 %v3420, %v3671
        %v3723 = vmul.f32 %v3425, %v3673
        %v3724 = vmul.f32 %v3430, %v3675
        %v3725 = vmul.f32 %v3435, %v3677
        %v3726 = vmul.f32 %v3440, %v3679
        %v3727 = vmul.f32 %v3445, %v3681
        %v3728 = vmul.f32 %v3450, %v3683
        %v3729 = vmul.f32 %v3455, %v3685
        %v3730 = vmul.f32 %v3460, %v3687
        %v3731 = vmul.f32 %v3465, %v3689
        %v3732 = vmul.f32 %v3470, %v3691
        %v3733 = vmul.f32 %v3475, %v3693
        %v3734 = vmul.f32 %v3480, %v3695
        %v3735 = vmul.f32 %v3485, %v3697
        %v3736 = vmul.f32 %v3490, %v3699
        %v3737 = vmul.f32 %v3495, %v3701
        %v3738 = vmul.f32 %v3500, %v3703
        %v3739 = vmul.f32 %v3505, %v3705
        %v3740 = vmul.f32 %v3510, %v3707
        %v3741 = vmul.f32 %v3515, %v3709
        %v3742 = vld [vmem:[%s9] sm:$0xff]
        %v3743 = vld [vmem:[%s9 + $0x8] sm:$0xff]
        %v3744 = vld [vmem:[%s9 + $0x10] sm:$0xff]
        %v3746 = vsel %vm1123, %v3710, 0
        %v3749 = vsel %vm1123, %v3711, 0
        %v3752 = vsel %vm1123, %v3712, 0
        %v3755 = vsel %vm1123, %v3713, 0
        %v3758 = vsel %vm1123, %v3714, 0
        %v3761 = vsel %vm1123, %v3715, 0
        %v3764 = vsel %vm1123, %v3716, 0
        %v3767 = vsel %vm1123, %v3717, 0
        %v3770 = vsel %vm1123, %v3718, 0
        %v3773 = vsel %vm1123, %v3719, 0
        %v3776 = vsel %vm1123, %v3720, 0
        %v3779 = vsel %vm1123, %v3721, 0
        %v3782 = vsel %vm1123, %v3722, 0
        %v3785 = vsel %vm1123, %v3723, 0
        %v3788 = vsel %vm1123, %v3724, 0
        %v3791 = vsel %vm1123, %v3725, 0
        %v3794 = vsel %vm1123, %v3726, 0
        %v3797 = vsel %vm1123, %v3727, 0
        %v3800 = vsel %vm1123, %v3728, 0
        %v3803 = vsel %vm1123, %v3729, 0
        %v3806 = vsel %vm1123, %v3730, 0
        %v3809 = vsel %vm1123, %v3731, 0
        %v3812 = vsel %vm1123, %v3732, 0
        %v3815 = vsel %vm1123, %v3733, 0
        %v3818 = vsel %vm1123, %v3734, 0
        %v3821 = vsel %vm1123, %v3735, 0
        %v3824 = vsel %vm1123, %v3736, 0
        %v3827 = vsel %vm1123, %v3737, 0
        %v3830 = vsel %vm1123, %v3738, 0
        %v3833 = vsel %vm1123, %v3739, 0
        %v3836 = vsel %vm1123, %v3740, 0
        %v3839 = vsel %vm1123, %v3741, 0
        %3841 = vmatprep.subr.mxu0 %v3743
        %3842 = vmatpush1.msra.mxu0 %v3742
        %3843 = vmatprep.subr.mxu0 0.0
        %3844 = vmatpush1.msra.mxu0 0.0
        %3845 = vmatprep.subr.mxu0 0.0
        %3846 = vmatpush1.msra.mxu0 0.0
        %3847 = vmatprep.subr.mxu0 0.0
        %3848 = vmatpush1.msra.mxu0 0.0
        %3849 = vmatprep.subr.mxu0 0.0
        %3850 = vmatpush1.msra.mxu0 0.0
        %3851 = vmatprep.subr.mxu0 0.0
        %3852 = vmatpush1.msra.mxu0 0.0
        %3853 = vmatprep.subr.mxu0 0.0
        %3854 = vmatpush1.msra.mxu0 0.0
        %3855 = vmatprep.subr.mxu0 0.0
        %3856 = vmatpush1.msra.mxu0 0.0
        %3857 = vmatprep.subr.mxu0 0.0
        %3858 = vmatpush1.msra.mxu0 0.0
        %3859 = vmatprep.subr.mxu0 0.0
        %3860 = vmatpush1.msra.mxu0 0.0
        %3861 = vmatprep.subr.mxu0 0.0
        %3862 = vmatpush1.msra.mxu0 0.0
        %3863 = vmatprep.subr.mxu0 0.0
        %3864 = vmatpush1.msra.mxu0 0.0
        %3865 = vmatprep.subr.mxu0 0.0
        %3866 = vmatpush1.msra.mxu0 0.0
        %3867 = vmatprep.subr.mxu0 0.0
        %3868 = vmatpush1.msra.mxu0 0.0
        %3869 = vmatprep.subr.mxu0 0.0
        %3870 = vmatpush1.msra.mxu0 0.0
        %3871 = vmatprep.subr.mxu0 0.0
        %3872 = vmatpush1.msra.mxu0 0.0
        %3873 = vmatprep.subr.mxu0 0.0
        %3874 = vmatpush1.msra.mxu0 0.0
        %3875 = vmatprep.subr.mxu0 0.0
        %3876 = vmatpush1.msra.mxu0 0.0
        %3877 = vmatprep.subr.mxu0 0.0
        %3878 = vmatpush1.msra.mxu0 0.0
        %3879 = vmatprep.subr.mxu0 0.0
        %3880 = vmatpush1.msra.mxu0 0.0
        %3881 = vmatprep.subr.mxu0 0.0
        %3882 = vmatpush1.msra.mxu0 0.0
        %3883 = vmatprep.subr.mxu0 0.0
        %3884 = vmatpush1.msra.mxu0 0.0
        %3885 = vmatprep.subr.mxu0 0.0
        %3886 = vmatpush1.msra.mxu0 0.0
        %3887 = vmatprep.subr.mxu0 0.0
        %3888 = vmatpush1.msra.mxu0 0.0
        %3889 = vmatprep.subr.mxu0 0.0
        %3890 = vmatpush1.msra.mxu0 0.0
        %3891 = vmatprep.subr.mxu0 0.0
        %3892 = vmatpush1.msra.mxu0 0.0
        %3893 = vmatprep.subr.mxu0 0.0
        %3894 = vmatpush1.msra.mxu0 0.0
        %3895 = vmatprep.subr.mxu0 0.0
        %3896 = vmatpush1.msra.mxu0 0.0
        %3897 = vmatprep.subr.mxu0 0.0
        %3898 = vmatpush1.msra.mxu0 0.0
        %3899 = vmatprep.subr.mxu0 0.0
        %3900 = vmatpush1.msra.mxu0 0.0
        %3901 = vmatprep.subr.mxu0 0.0
        %3902 = vmatpush1.msra.mxu0 0.0
        %3903 = vmatprep.subr.mxu0 0.0
        %3904 = vmatpush1.msra.mxu0 0.0
        %3905 = vmatprep.mubr.f32.mxu0 0.0
        %3906 = vmatmul.mubr.f32.gmra.mrb[0].mxu0 %v3746
        %v3907 = vpop.f32.mrb[0].mxu0
        %v3908 = vadd.f32 0.0, %v3907
        %v3909 = vpop.f32.mrb[0].mxu0
        %v3910 = vadd.f32 0.0, %v3909
        %3911 = vmatprep.mubr.f32.mxu0 0.0
        %3912 = vmatmul.mubr.f32.gmra.mrb[0].mxu0 %v3749
        %v3913 = vpop.f32.mrb[0].mxu0
        %v3914 = vadd.f32 0.0, %v3913
        %v3915 = vpop.f32.mrb[0].mxu0
        %v3916 = vadd.f32 0.0, %v3915
        %3917 = vmatprep.mubr.f32.mxu0 0.0
        %3918 = vmatmul.mubr.f32.gmra.mrb[0].mxu0 %v3752
        %v3919 = vpop.f32.mrb[0].mxu0
        %v3920 = vadd.f32 0.0, %v3919
        %v3921 = vpop.f32.mrb[0].mxu0
        %v3922 = vadd.f32 0.0, %v3921
        %3923 = vmatprep.mubr.f32.mxu0 0.0
        %3924 = vmatmul.mubr.f32.gmra.mrb[0].mxu0 %v3755
        %v3925 = vpop.f32.mrb[0].mxu0
        %v3926 = vadd.f32 0.0, %v3925
        %v3927 = vpop.f32.mrb[0].mxu0
        %v3928 = vadd.f32 0.0, %v3927
        %3929 = vmatprep.mubr.f32.mxu0 0.0
        %3930 = vmatmul.mubr.f32.gmra.mrb[0].mxu0 %v3758
        %v3931 = vpop.f32.mrb[0].mxu0
        %v3932 = vadd.f32 0.0, %v3931
        %v3933 = vpop.f32.mrb[0].mxu0
        %v3934 = vadd.f32 0.0, %v3933
        %3935 = vmatprep.mubr.f32.mxu0 0.0
        %3936 = vmatmul.mubr.f32.gmra.mrb[0].mxu0 %v3761
        %v3937 = vpop.f32.mrb[0].mxu0
        %v3938 = vadd.f32 0.0, %v3937
        %v3939 = vpop.f32.mrb[0].mxu0
        %v3940 = vadd.f32 0.0, %v3939
        %3941 = vmatprep.mubr.f32.mxu0 0.0
        %3942 = vmatmul.mubr.f32.gmra.mrb[0].mxu0 %v3764
        %v3943 = vpop.f32.mrb[0].mxu0
        %v3944 = vadd.f32 0.0, %v3943
        %v3945 = vpop.f32.mrb[0].mxu0
        %v3946 = vadd.f32 0.0, %v3945
        %3947 = vmatprep.mubr.f32.mxu0 0.0
        %3948 = vmatmul.mubr.f32.gmra.mrb[0].mxu0 %v3767
        %v3949 = vpop.f32.mrb[0].mxu0
        %v3950 = vadd.f32 0.0, %v3949
        %v3951 = vpop.f32.mrb[0].mxu0
        %v3952 = vadd.f32 0.0, %v3951
        %3953 = vmatprep.mubr.f32.mxu0 0.0
        %3954 = vmatmul.mubr.f32.gmra.mrb[0].mxu0 %v3770
        %v3955 = vpop.f32.mrb[0].mxu0
        %v3956 = vadd.f32 0.0, %v3955
        %v3957 = vpop.f32.mrb[0].mxu0
        %v3958 = vadd.f32 0.0, %v3957
        %3959 = vmatprep.mubr.f32.mxu0 0.0
        %3960 = vmatmul.mubr.f32.gmra.mrb[0].mxu0 %v3773
        %v3961 = vpop.f32.mrb[0].mxu0
        %v3962 = vadd.f32 0.0, %v3961
        %v3963 = vpop.f32.mrb[0].mxu0
        %v3964 = vadd.f32 0.0, %v3963
        %3965 = vmatprep.mubr.f32.mxu0 0.0
        %3966 = vmatmul.mubr.f32.gmra.mrb[0].mxu0 %v3776
        %v3967 = vpop.f32.mrb[0].mxu0
        %v3968 = vadd.f32 0.0, %v3967
        %v3969 = vpop.f32.mrb[0].mxu0
        %v3970 = vadd.f32 0.0, %v3969
        %3971 = vmatprep.mubr.f32.mxu0 0.0
        %3972 = vmatmul.mubr.f32.gmra.mrb[0].mxu0 %v3779
        %v3973 = vpop.f32.mrb[0].mxu0
        %v3974 = vadd.f32 0.0, %v3973
        %v3975 = vpop.f32.mrb[0].mxu0
        %v3976 = vadd.f32 0.0, %v3975
        %3977 = vmatprep.mubr.f32.mxu0 0.0
        %3978 = vmatmul.mubr.f32.gmra.mrb[0].mxu0 %v3782
        %v3979 = vpop.f32.mrb[0].mxu0
        %v3980 = vadd.f32 0.0, %v3979
        %v3981 = vpop.f32.mrb[0].mxu0
        %v3982 = vadd.f32 0.0, %v3981
        %3983 = vmatprep.mubr.f32.mxu0 0.0
        %3984 = vmatmul.mubr.f32.gmra.mrb[0].mxu0 %v3785
        %v3985 = vpop.f32.mrb[0].mxu0
        %v3986 = vadd.f32 0.0, %v3985
        %v3987 = vpop.f32.mrb[0].mxu0
        %v3988 = vadd.f32 0.0, %v3987
        %3989 = vmatprep.mubr.f32.mxu0 0.0
        %3990 = vmatmul.mubr.f32.gmra.mrb[0].mxu0 %v3788
        %v3991 = vpop.f32.mrb[0].mxu0
        %v3992 = vadd.f32 0.0, %v3991
        %v3993 = vpop.f32.mrb[0].mxu0
        %v3994 = vadd.f32 0.0, %v3993
        %3995 = vmatprep.mubr.f32.mxu0 0.0
        %3996 = vmatmul.mubr.f32.gmra.mrb[0].mxu0 %v3791
        %v3997 = vpop.f32.mrb[0].mxu0
        %v3998 = vadd.f32 0.0, %v3997
        %v3999 = vpop.f32.mrb[0].mxu0
        %v4000 = vadd.f32 0.0, %v3999
        %4001 = vmatprep.mubr.f32.mxu0 0.0
        %4002 = vmatmul.mubr.f32.gmra.mrb[0].mxu0 %v3794
        %v4003 = vpop.f32.mrb[0].mxu0
        %v4004 = vadd.f32 0.0, %v4003
        %v4005 = vpop.f32.mrb[0].mxu0
        %v4006 = vadd.f32 0.0, %v4005
        %4007 = vmatprep.mubr.f32.mxu0 0.0
        %4008 = vmatmul.mubr.f32.gmra.mrb[0].mxu0 %v3797
        %v4009 = vpop.f32.mrb[0].mxu0
        %v4010 = vadd.f32 0.0, %v4009
        %v4011 = vpop.f32.mrb[0].mxu0
        %v4012 = vadd.f32 0.0, %v4011
        %4013 = vmatprep.mubr.f32.mxu0 0.0
        %4014 = vmatmul.mubr.f32.gmra.mrb[0].mxu0 %v3800
        %v4015 = vpop.f32.mrb[0].mxu0
        %v4016 = vadd.f32 0.0, %v4015
        %v4017 = vpop.f32.mrb[0].mxu0
        %v4018 = vadd.f32 0.0, %v4017
        %4019 = vmatprep.mubr.f32.mxu0 0.0
        %4020 = vmatmul.mubr.f32.gmra.mrb[0].mxu0 %v3803
        %v4021 = vpop.f32.mrb[0].mxu0
        %v4022 = vadd.f32 0.0, %v4021
        %v4023 = vpop.f32.mrb[0].mxu0
        %v4024 = vadd.f32 0.0, %v4023
        %4025 = vmatprep.mubr.f32.mxu0 0.0
        %4026 = vmatmul.mubr.f32.gmra.mrb[0].mxu0 %v3806
        %v4027 = vpop.f32.mrb[0].mxu0
        %v4028 = vadd.f32 0.0, %v4027
        %v4029 = vpop.f32.mrb[0].mxu0
        %v4030 = vadd.f32 0.0, %v4029
        %4031 = vmatprep.mubr.f32.mxu0 0.0
        %4032 = vmatmul.mubr.f32.gmra.mrb[0].mxu0 %v3809
        %v4033 = vpop.f32.mrb[0].mxu0
        %v4034 = vadd.f32 0.0, %v4033
        %v4035 = vpop.f32.mrb[0].mxu0
        %v4036 = vadd.f32 0.0, %v4035
        %4037 = vmatprep.mubr.f32.mxu0 0.0
        %4038 = vmatmul.mubr.f32.gmra.mrb[0].mxu0 %v3812
        %v4039 = vpop.f32.mrb[0].mxu0
        %v4040 = vadd.f32 0.0, %v4039
        %v4041 = vpop.f32.mrb[0].mxu0
        %v4042 = vadd.f32 0.0, %v4041
        %4043 = vmatprep.mubr.f32.mxu0 0.0
        %4044 = vmatmul.mubr.f32.gmra.mrb[0].mxu0 %v3815
        %v4045 = vpop.f32.mrb[0].mxu0
        %v4046 = vadd.f32 0.0, %v4045
        %v4047 = vpop.f32.mrb[0].mxu0
        %v4048 = vadd.f32 0.0, %v4047
        %4049 = vmatprep.mubr.f32.mxu0 0.0
        %4050 = vmatmul.mubr.f32.gmra.mrb[0].mxu0 %v3818
        %v4051 = vpop.f32.mrb[0].mxu0
        %v4052 = vadd.f32 0.0, %v4051
        %v4053 = vpop.f32.mrb[0].mxu0
        %v4054 = vadd.f32 0.0, %v4053
        %4055 = vmatprep.mubr.f32.mxu0 0.0
        %4056 = vmatmul.mubr.f32.gmra.mrb[0].mxu0 %v3821
        %v4057 = vpop.f32.mrb[0].mxu0
        %v4058 = vadd.f32 0.0, %v4057
        %v4059 = vpop.f32.mrb[0].mxu0
        %v4060 = vadd.f32 0.0, %v4059
        %4061 = vmatprep.mubr.f32.mxu0 0.0
        %4062 = vmatmul.mubr.f32.gmra.mrb[0].mxu0 %v3824
        %v4063 = vpop.f32.mrb[0].mxu0
        %v4064 = vadd.f32 0.0, %v4063
        %v4065 = vpop.f32.mrb[0].mxu0
        %v4066 = vadd.f32 0.0, %v4065
        %4067 = vmatprep.mubr.f32.mxu0 0.0
        %4068 = vmatmul.mubr.f32.gmra.mrb[0].mxu0 %v3827
        %v4069 = vpop.f32.mrb[0].mxu0
        %v4070 = vadd.f32 0.0, %v4069
        %v4071 = vpop.f32.mrb[0].mxu0
        %v4072 = vadd.f32 0.0, %v4071
        %4073 = vmatprep.mubr.f32.mxu0 0.0
        %4074 = vmatmul.mubr.f32.gmra.mrb[0].mxu0 %v3830
        %v4075 = vpop.f32.mrb[0].mxu0
        %v4076 = vadd.f32 0.0, %v4075
        %v4077 = vpop.f32.mrb[0].mxu0
        %v4078 = vadd.f32 0.0, %v4077
        %4079 = vmatprep.mubr.f32.mxu0 0.0
        %4080 = vmatmul.mubr.f32.gmra.mrb[0].mxu0 %v3833
        %v4081 = vpop.f32.mrb[0].mxu0
        %v4082 = vadd.f32 0.0, %v4081
        %v4083 = vpop.f32.mrb[0].mxu0
        %v4084 = vadd.f32 0.0, %v4083
        %4085 = vmatprep.mubr.f32.mxu0 0.0
        %4086 = vmatmul.mubr.f32.gmra.mrb[0].mxu0 %v3836
        %v4087 = vpop.f32.mrb[0].mxu0
        %v4088 = vadd.f32 0.0, %v4087
        %v4089 = vpop.f32.mrb[0].mxu0
        %v4090 = vadd.f32 0.0, %v4089
        %4091 = vmatprep.mubr.f32.mxu0 0.0
        %4092 = vmatmul.mubr.f32.gmra.mrb[0].mxu0 %v3839
        %v4093 = vpop.f32.mrb[0].mxu0
        %v4094 = vadd.f32 0.0, %v4093
        %v4095 = vpop.f32.mrb[0].mxu0
        %v4096 = vadd.f32 0.0, %v4095
        %4097 = vdwg.mxu0
        %4098 = vmatprep.subr.mxu0 0.0
        %4099 = vmatpush1.msra.mxu0 %v3744
        %4100 = vmatprep.subr.mxu0 0.0
        %4101 = vmatpush1.msra.mxu0 0.0
        %4102 = vmatprep.subr.mxu0 0.0
        %4103 = vmatpush1.msra.mxu0 0.0
        %4104 = vmatprep.subr.mxu0 0.0
        %4105 = vmatpush1.msra.mxu0 0.0
        %4106 = vmatprep.subr.mxu0 0.0
        %4107 = vmatpush1.msra.mxu0 0.0
        %4108 = vmatprep.subr.mxu0 0.0
        %4109 = vmatpush1.msra.mxu0 0.0
        %4110 = vmatprep.subr.mxu0 0.0
        %4111 = vmatpush1.msra.mxu0 0.0
        %4112 = vmatprep.subr.mxu0 0.0
        %4113 = vmatpush1.msra.mxu0 0.0
        %4114 = vmatprep.subr.mxu0 0.0
        %4115 = vmatpush1.msra.mxu0 0.0
        %4116 = vmatprep.subr.mxu0 0.0
        %4117 = vmatpush1.msra.mxu0 0.0
        %4118 = vmatprep.subr.mxu0 0.0
        %4119 = vmatpush1.msra.mxu0 0.0
        %4120 = vmatprep.subr.mxu0 0.0
        %4121 = vmatpush1.msra.mxu0 0.0
        %4122 = vmatprep.subr.mxu0 0.0
        %4123 = vmatpush1.msra.mxu0 0.0
        %4124 = vmatprep.subr.mxu0 0.0
        %4125 = vmatpush1.msra.mxu0 0.0
        %4126 = vmatprep.subr.mxu0 0.0
        %4127 = vmatpush1.msra.mxu0 0.0
        %4128 = vmatprep.subr.mxu0 0.0
        %4129 = vmatpush1.msra.mxu0 0.0
        %4130 = vmatprep.subr.mxu0 0.0
        %4131 = vmatpush1.msra.mxu0 0.0
        %4132 = vmatprep.subr.mxu0 0.0
        %4133 = vmatpush1.msra.mxu0 0.0
        %4134 = vmatprep.subr.mxu0 0.0
        %4135 = vmatpush1.msra.mxu0 0.0
        %4136 = vmatprep.subr.mxu0 0.0
        %4137 = vmatpush1.msra.mxu0 0.0
        %4138 = vmatprep.subr.mxu0 0.0
        %4139 = vmatpush1.msra.mxu0 0.0
        %4140 = vmatprep.subr.mxu0 0.0
        %4141 = vmatpush1.msra.mxu0 0.0
        %4142 = vmatprep.subr.mxu0 0.0
        %4143 = vmatpush1.msra.mxu0 0.0
        %4144 = vmatprep.subr.mxu0 0.0
        %4145 = vmatpush1.msra.mxu0 0.0
        %4146 = vmatprep.subr.mxu0 0.0
        %4147 = vmatpush1.msra.mxu0 0.0
        %4148 = vmatprep.subr.mxu0 0.0
        %4149 = vmatpush1.msra.mxu0 0.0
        %4150 = vmatprep.subr.mxu0 0.0
        %4151 = vmatpush1.msra.mxu0 0.0
        %4152 = vmatprep.subr.mxu0 0.0
        %4153 = vmatpush1.msra.mxu0 0.0
        %4154 = vmatprep.subr.mxu0 0.0
        %4155 = vmatpush1.msra.mxu0 0.0
        %4156 = vmatprep.subr.mxu0 0.0
        %4157 = vmatpush1.msra.mxu0 0.0
        %4158 = vmatprep.subr.mxu0 0.0
        %4159 = vmatpush1.msra.mxu0 0.0
        %4160 = vmatprep.subr.mxu0 0.0
        %4161 = vmatpush1.msra.mxu0 0.0
        %4162 = vmatprep.mubr.f32.mxu0 0.0
        %4163 = vmatmul.mubr.f32.gmra.mrb[0].mxu0 %v3746
        %v4164 = vpop.f32.mrb[0].mxu0
        %v4165 = vadd.f32 0.0, %v4164
        %v4166 = vpop.f32.mrb[0].mxu0
        %4167 = vmatprep.mubr.f32.mxu0 0.0
        %4168 = vmatmul.mubr.f32.gmra.mrb[0].mxu0 %v3749
        %v4169 = vpop.f32.mrb[0].mxu0
        %v4170 = vadd.f32 0.0, %v4169
        %v4171 = vpop.f32.mrb[0].mxu0
        %4172 = vmatprep.mubr.f32.mxu0 0.0
        %4173 = vmatmul.mubr.f32.gmra.mrb[0].mxu0 %v3752
        %v4174 = vpop.f32.mrb[0].mxu0
        %v4175 = vadd.f32 0.0, %v4174
        %v4176 = vpop.f32.mrb[0].mxu0
        %4177 = vmatprep.mubr.f32.mxu0 0.0
        %4178 = vmatmul.mubr.f32.gmra.mrb[0].mxu0 %v3755
        %v4179 = vpop.f32.mrb[0].mxu0
        %v4180 = vadd.f32 0.0, %v4179
        %v4181 = vpop.f32.mrb[0].mxu0
        %4182 = vmatprep.mubr.f32.mxu0 0.0
        %4183 = vmatmul.mubr.f32.gmra.mrb[0].mxu0 %v3758
        %v4184 = vpop.f32.mrb[0].mxu0
        %v4185 = vadd.f32 0.0, %v4184
        %v4186 = vpop.f32.mrb[0].mxu0
        %4187 = vmatprep.mubr.f32.mxu0 0.0
        %4188 = vmatmul.mubr.f32.gmra.mrb[0].mxu0 %v3761
        %v4189 = vpop.f32.mrb[0].mxu0
        %v4190 = vadd.f32 0.0, %v4189
        %v4191 = vpop.f32.mrb[0].mxu0
        %4192 = vmatprep.mubr.f32.mxu0 0.0
        %4193 = vmatmul.mubr.f32.gmra.mrb[0].mxu0 %v3764
        %v4194 = vpop.f32.mrb[0].mxu0
        %v4195 = vadd.f32 0.0, %v4194
        %v4196 = vpop.f32.mrb[0].mxu0
        %4197 = vmatprep.mubr.f32.mxu0 0.0
        %4198 = vmatmul.mubr.f32.gmra.mrb[0].mxu0 %v3767
        %v4199 = vpop.f32.mrb[0].mxu0
        %v4200 = vadd.f32 0.0, %v4199
        %v4201 = vpop.f32.mrb[0].mxu0
        %4202 = vmatprep.mubr.f32.mxu0 0.0
        %4203 = vmatmul.mubr.f32.gmra.mrb[0].mxu0 %v3770
        %v4204 = vpop.f32.mrb[0].mxu0
        %v4205 = vadd.f32 0.0, %v4204
        %v4206 = vpop.f32.mrb[0].mxu0
        %4207 = vmatprep.mubr.f32.mxu0 0.0
        %4208 = vmatmul.mubr.f32.gmra.mrb[0].mxu0 %v3773
        %v4209 = vpop.f32.mrb[0].mxu0
        %v4210 = vadd.f32 0.0, %v4209
        %v4211 = vpop.f32.mrb[0].mxu0
        %4212 = vmatprep.mubr.f32.mxu0 0.0
        %4213 = vmatmul.mubr.f32.gmra.mrb[0].mxu0 %v3776
        %v4214 = vpop.f32.mrb[0].mxu0
        %v4215 = vadd.f32 0.0, %v4214
        %v4216 = vpop.f32.mrb[0].mxu0
        %4217 = vmatprep.mubr.f32.mxu0 0.0
        %4218 = vmatmul.mubr.f32.gmra.mrb[0].mxu0 %v3779
        %v4219 = vpop.f32.mrb[0].mxu0
        %v4220 = vadd.f32 0.0, %v4219
        %v4221 = vpop.f32.mrb[0].mxu0
        %4222 = vmatprep.mubr.f32.mxu0 0.0
        %4223 = vmatmul.mubr.f32.gmra.mrb[0].mxu0 %v3782
        %v4224 = vpop.f32.mrb[0].mxu0
        %v4225 = vadd.f32 0.0, %v4224
        %v4226 = vpop.f32.mrb[0].mxu0
        %4227 = vmatprep.mubr.f32.mxu0 0.0
        %4228 = vmatmul.mubr.f32.gmra.mrb[0].mxu0 %v3785
        %v4229 = vpop.f32.mrb[0].mxu0
        %v4230 = vadd.f32 0.0, %v4229
        %v4231 = vpop.f32.mrb[0].mxu0
        %4232 = vmatprep.mubr.f32.mxu0 0.0
        %4233 = vmatmul.mubr.f32.gmra.mrb[0].mxu0 %v3788
        %v4234 = vpop.f32.mrb[0].mxu0
        %v4235 = vadd.f32 0.0, %v4234
        %v4236 = vpop.f32.mrb[0].mxu0
        %4237 = vmatprep.mubr.f32.mxu0 0.0
        %4238 = vmatmul.mubr.f32.gmra.mrb[0].mxu0 %v3791
        %v4239 = vpop.f32.mrb[0].mxu0
        %v4240 = vadd.f32 0.0, %v4239
        %v4241 = vpop.f32.mrb[0].mxu0
        %4242 = vmatprep.mubr.f32.mxu0 0.0
        %4243 = vmatmul.mubr.f32.gmra.mrb[0].mxu0 %v3794
        %v4244 = vpop.f32.mrb[0].mxu0
        %v4245 = vadd.f32 0.0, %v4244
        %v4246 = vpop.f32.mrb[0].mxu0
        %4247 = vmatprep.mubr.f32.mxu0 0.0
        %4248 = vmatmul.mubr.f32.gmra.mrb[0].mxu0 %v3797
        %v4249 = vpop.f32.mrb[0].mxu0
        %v4250 = vadd.f32 0.0, %v4249
        %v4251 = vpop.f32.mrb[0].mxu0
        %4252 = vmatprep.mubr.f32.mxu0 0.0
        %4253 = vmatmul.mubr.f32.gmra.mrb[0].mxu0 %v3800
        %v4254 = vpop.f32.mrb[0].mxu0
        %v4255 = vadd.f32 0.0, %v4254
        %v4256 = vpop.f32.mrb[0].mxu0
        %4257 = vmatprep.mubr.f32.mxu0 0.0
        %4258 = vmatmul.mubr.f32.gmra.mrb[0].mxu0 %v3803
        %v4259 = vpop.f32.mrb[0].mxu0
        %v4260 = vadd.f32 0.0, %v4259
        %v4261 = vpop.f32.mrb[0].mxu0
        %4262 = vmatprep.mubr.f32.mxu0 0.0
        %4263 = vmatmul.mubr.f32.gmra.mrb[0].mxu0 %v3806
        %v4264 = vpop.f32.mrb[0].mxu0
        %v4265 = vadd.f32 0.0, %v4264
        %v4266 = vpop.f32.mrb[0].mxu0
        %4267 = vmatprep.mubr.f32.mxu0 0.0
        %4268 = vmatmul.mubr.f32.gmra.mrb[0].mxu0 %v3809
        %v4269 = vpop.f32.mrb[0].mxu0
        %v4270 = vadd.f32 0.0, %v4269
        %v4271 = vpop.f32.mrb[0].mxu0
        %4272 = vmatprep.mubr.f32.mxu0 0.0
        %4273 = vmatmul.mubr.f32.gmra.mrb[0].mxu0 %v3812
        %v4274 = vpop.f32.mrb[0].mxu0
        %v4275 = vadd.f32 0.0, %v4274
        %v4276 = vpop.f32.mrb[0].mxu0
        %4277 = vmatprep.mubr.f32.mxu0 0.0
        %4278 = vmatmul.mubr.f32.gmra.mrb[0].mxu0 %v3815
        %v4279 = vpop.f32.mrb[0].mxu0
        %v4280 = vadd.f32 0.0, %v4279
        %v4281 = vpop.f32.mrb[0].mxu0
        %4282 = vmatprep.mubr.f32.mxu0 0.0
        %4283 = vmatmul.mubr.f32.gmra.mrb[0].mxu0 %v3818
        %v4284 = vpop.f32.mrb[0].mxu0
        %v4285 = vadd.f32 0.0, %v4284
        %v4286 = vpop.f32.mrb[0].mxu0
        %4287 = vmatprep.mubr.f32.mxu0 0.0
        %4288 = vmatmul.mubr.f32.gmra.mrb[0].mxu0 %v3821
        %v4289 = vpop.f32.mrb[0].mxu0
        %v4290 = vadd.f32 0.0, %v4289
        %v4291 = vpop.f32.mrb[0].mxu0
        %4292 = vmatprep.mubr.f32.mxu0 0.0
        %4293 = vmatmul.mubr.f32.gmra.mrb[0].mxu0 %v3824
        %v4294 = vpop.f32.mrb[0].mxu0
        %v4295 = vadd.f32 0.0, %v4294
        %v4296 = vpop.f32.mrb[0].mxu0
        %4297 = vmatprep.mubr.f32.mxu0 0.0
        %4298 = vmatmul.mubr.f32.gmra.mrb[0].mxu0 %v3827
        %v4299 = vpop.f32.mrb[0].mxu0
        %v4300 = vadd.f32 0.0, %v4299
        %v4301 = vpop.f32.mrb[0].mxu0
        %4302 = vmatprep.mubr.f32.mxu0 0.0
        %4303 = vmatmul.mubr.f32.gmra.mrb[0].mxu0 %v3830
        %v4304 = vpop.f32.mrb[0].mxu0
        %v4305 = vadd.f32 0.0, %v4304
        %v4306 = vpop.f32.mrb[0].mxu0
        %4307 = vmatprep.mubr.f32.mxu0 0.0
        %4308 = vmatmul.mubr.f32.gmra.mrb[0].mxu0 %v3833
        %v4309 = vpop.f32.mrb[0].mxu0
        %v4310 = vadd.f32 0.0, %v4309
        %v4311 = vpop.f32.mrb[0].mxu0
        %4312 = vmatprep.mubr.f32.mxu0 0.0
        %4313 = vmatmul.mubr.f32.gmra.mrb[0].mxu0 %v3836
        %v4314 = vpop.f32.mrb[0].mxu0
        %v4315 = vadd.f32 0.0, %v4314
        %v4316 = vpop.f32.mrb[0].mxu0
        %4317 = vmatprep.mubr.f32.mxu0 0.0
        %4318 = vmatmul.mubr.f32.gmra.mrb[0].mxu0 %v3839
        %v4319 = vpop.f32.mrb[0].mxu0
        %v4320 = vadd.f32 0.0, %v4319
        %v4321 = vpop.f32.mrb[0].mxu0
        %4322 = vdwg.mxu0
        %v4323 = vmul.f32 %v3908, %v2136
        %v4324 = vmul.f32 %v3910, %v2138
        %v4325 = vmul.f32 %v4165, %v2393
        %v4326 = vmul.f32 %v3914, %v2142
        %v4327 = vmul.f32 %v3916, %v2144
        %v4328 = vmul.f32 %v4170, %v2398
        %v4329 = vmul.f32 %v3920, %v2148
        %v4330 = vmul.f32 %v3922, %v2150
        %v4331 = vmul.f32 %v4175, %v2403
        %v4332 = vmul.f32 %v3926, %v2154
        %v4333 = vmul.f32 %v3928, %v2156
        %v4334 = vmul.f32 %v4180, %v2408
        %v4335 = vmul.f32 %v3932, %v2160
        %v4336 = vmul.f32 %v3934, %v2162
        %v4337 = vmul.f32 %v4185, %v2413
        %v4338 = vmul.f32 %v3938, %v2166
        %v4339 = vmul.f32 %v3940, %v2168
        %v4340 = vmul.f32 %v4190, %v2418
        %v4341 = vmul.f32 %v3944, %v2172
        %v4342 = vmul.f32 %v3946, %v2174
        %v4343 = vmul.f32 %v4195, %v2423
        %v4344 = vmul.f32 %v3950, %v2178
        %v4345 = vmul.f32 %v3952, %v2180
        %v4346 = vmul.f32 %v4200, %v2428
        %v4347 = vmul.f32 %v3956, %v2184
        %v4348 = vmul.f32 %v3958, %v2186
        %v4349 = vmul.f32 %v4205, %v2433
        %v4350 = vmul.f32 %v3962, %v2190
        %v4351 = vmul.f32 %v3964, %v2192
        %v4352 = vmul.f32 %v4210, %v2438
        %v4353 = vmul.f32 %v3968, %v2196
        %v4354 = vmul.f32 %v3970, %v2198
        %v4355 = vmul.f32 %v4215, %v2443
        %v4356 = vmul.f32 %v3974, %v2202
        %v4357 = vmul.f32 %v3976, %v2204
        %v4358 = vmul.f32 %v4220, %v2448
        %v4359 = vmul.f32 %v3980, %v2208
        %v4360 = vmul.f32 %v3982, %v2210
        %v4361 = vmul.f32 %v4225, %v2453
        %v4362 = vmul.f32 %v3986, %v2214
        %v4363 = vmul.f32 %v3988, %v2216
        %v4364 = vmul.f32 %v4230, %v2458
        %v4365 = vmul.f32 %v3992, %v2220
        %v4366 = vmul.f32 %v3994, %v2222
        %v4367 = vmul.f32 %v4235, %v2463
        %v4368 = vmul.f32 %v3998, %v2226
        %v4369 = vmul.f32 %v4000, %v2228
        %v4370 = vmul.f32 %v4240, %v2468
        %v4371 = vmul.f32 %v4004, %v2232
        %v4372 = vmul.f32 %v4006, %v2234
        %v4373 = vmul.f32 %v4245, %v2473
        %v4374 = vmul.f32 %v4010, %v2238
        %v4375 = vmul.f32 %v4012, %v2240
        %v4376 = vmul.f32 %v4250, %v2478
        %v4377 = vmul.f32 %v4016, %v2244
        %v4378 = vmul.f32 %v4018, %v2246
        %v4379 = vmul.f32 %v4255, %v2483
        %v4380 = vmul.f32 %v4022, %v2250
        %v4381 = vmul.f32 %v4024, %v2252
        %v4382 = vmul.f32 %v4260, %v2488
        %v4383 = vmul.f32 %v4028, %v2256
        %v4384 = vmul.f32 %v4030, %v2258
        %v4385 = vmul.f32 %v4265, %v2493
        %v4386 = vmul.f32 %v4034, %v2262
        %v4387 = vmul.f32 %v4036, %v2264
        %v4388 = vmul.f32 %v4270, %v2498
        %v4389 = vmul.f32 %v4040, %v2268
        %v4390 = vmul.f32 %v4042, %v2270
        %v4391 = vmul.f32 %v4275, %v2503
        %v4392 = vmul.f32 %v4046, %v2274
        %v4393 = vmul.f32 %v4048, %v2276
        %v4394 = vmul.f32 %v4280, %v2508
        %v4395 = vmul.f32 %v4052, %v2280
        %v4396 = vmul.f32 %v4054, %v2282
        %v4397 = vmul.f32 %v4285, %v2513
        %v4398 = vmul.f32 %v4058, %v2286
        %v4399 = vmul.f32 %v4060, %v2288
        %v4400 = vmul.f32 %v4290, %v2518
        %v4401 = vmul.f32 %v4064, %v2292
        %v4402 = vmul.f32 %v4066, %v2294
        %v4403 = vmul.f32 %v4295, %v2523
        %v4404 = vmul.f32 %v4070, %v2298
        %v4405 = vmul.f32 %v4072, %v2300
        %v4406 = vmul.f32 %v4300, %v2528
        %v4407 = vmul.f32 %v4076, %v2304
        %v4408 = vmul.f32 %v4078, %v2306
        %v4409 = vmul.f32 %v4305, %v2533
        %v4410 = vmul.f32 %v4082, %v2310
        %v4411 = vmul.f32 %v4084, %v2312
        %v4412 = vmul.f32 %v4310, %v2538
        %v4413 = vmul.f32 %v4088, %v2316
        %v4414 = vmul.f32 %v4090, %v2318
        %v4415 = vmul.f32 %v4315, %v2543
        %v4416 = vmul.f32 %v4094, %v2322
        %v4417 = vmul.f32 %v4096, %v2324
        %v4418 = vmul.f32 %v4320, %v2548
        %v4419 = vmul.f32 %v4323, %v2749
        %v4420 = vmul.f32 %v4324, %v2751
        %v4421 = vmul.f32 %v4325, %v3006
        %v4422 = vmul.f32 %v4326, %v2755
        %v4423 = vmul.f32 %v4327, %v2757
        %v4424 = vmul.f32 %v4328, %v3011
        %v4425 = vmul.f32 %v4329, %v2761
        %v4426 = vmul.f32 %v4330, %v2763
        %v4427 = vmul.f32 %v4331, %v3016
        %v4428 = vmul.f32 %v4332, %v2767
        %v4429 = vmul.f32 %v4333, %v2769
        %v4430 = vmul.f32 %v4334, %v3021
        %v4431 = vmul.f32 %v4335, %v2773
        %v4432 = vmul.f32 %v4336, %v2775
        %v4433 = vmul.f32 %v4337, %v3026
        %v4434 = vmul.f32 %v4338, %v2779
        %v4435 = vmul.f32 %v4339, %v2781
        %v4436 = vmul.f32 %v4340, %v3031
        %v4437 = vmul.f32 %v4341, %v2785
        %v4438 = vmul.f32 %v4342, %v2787
        %v4439 = vmul.f32 %v4343, %v3036
        %v4440 = vmul.f32 %v4344, %v2791
        %v4441 = vmul.f32 %v4345, %v2793
        %v4442 = vmul.f32 %v4346, %v3041
        %v4443 = vmul.f32 %v4347, %v2797
        %v4444 = vmul.f32 %v4348, %v2799
        %v4445 = vmul.f32 %v4349, %v3046
        %v4446 = vmul.f32 %v4350, %v2803
        %v4447 = vmul.f32 %v4351, %v2805
        %v4448 = vmul.f32 %v4352, %v3051
        %v4449 = vmul.f32 %v4353, %v2809
        %v4450 = vmul.f32 %v4354, %v2811
        %v4451 = vmul.f32 %v4355, %v3056
        %v4452 = vmul.f32 %v4356, %v2815
        %v4453 = vmul.f32 %v4357, %v2817
        %v4454 = vmul.f32 %v4358, %v3061
        %v4455 = vmul.f32 %v4359, %v2821
        %v4456 = vmul.f32 %v4360, %v2823
        %v4457 = vmul.f32 %v4361, %v3066
        %v4458 = vmul.f32 %v4362, %v2827
        %v4459 = vmul.f32 %v4363, %v2829
        %v4460 = vmul.f32 %v4364, %v3071
        %v4461 = vmul.f32 %v4365, %v2833
        %v4462 = vmul.f32 %v4366, %v2835
        %v4463 = vmul.f32 %v4367, %v3076
        %v4464 = vmul.f32 %v4368, %v2839
        %v4465 = vmul.f32 %v4369, %v2841
        %v4466 = vmul.f32 %v4370, %v3081
        %v4467 = vmul.f32 %v4371, %v2845
        %v4468 = vmul.f32 %v4372, %v2847
        %v4469 = vmul.f32 %v4373, %v3086
        %v4470 = vmul.f32 %v4374, %v2851
        %v4471 = vmul.f32 %v4375, %v2853
        %v4472 = vmul.f32 %v4376, %v3091
        %v4473 = vmul.f32 %v4377, %v2857
        %v4474 = vmul.f32 %v4378, %v2859
        %v4475 = vmul.f32 %v4379, %v3096
        %v4476 = vmul.f32 %v4380, %v2863
        %v4477 = vmul.f32 %v4381, %v2865
        %v4478 = vmul.f32 %v4382, %v3101
        %v4479 = vmul.f32 %v4383, %v2869
        %v4480 = vmul.f32 %v4384, %v2871
        %v4481 = vmul.f32 %v4385, %v3106
        %v4482 = vmul.f32 %v4386, %v2875
        %v4483 = vmul.f32 %v4387, %v2877
        %v4484 = vmul.f32 %v4388, %v3111
        %v4485 = vmul.f32 %v4389, %v2881
        %v4486 = vmul.f32 %v4390, %v2883
        %v4487 = vmul.f32 %v4391, %v3116
        %v4488 = vmul.f32 %v4392, %v2887
        %v4489 = vmul.f32 %v4393, %v2889
        %v4490 = vmul.f32 %v4394, %v3121
        %v4491 = vmul.f32 %v4395, %v2893
        %v4492 = vmul.f32 %v4396, %v2895
        %v4493 = vmul.f32 %v4397, %v3126
        %v4494 = vmul.f32 %v4398, %v2899
        %v4495 = vmul.f32 %v4399, %v2901
        %v4496 = vmul.f32 %v4400, %v3131
        %v4497 = vmul.f32 %v4401, %v2905
        %v4498 = vmul.f32 %v4402, %v2907
        %v4499 = vmul.f32 %v4403, %v3136
        %v4500 = vmul.f32 %v4404, %v2911
        %v4501 = vmul.f32 %v4405, %v2913
        %v4502 = vmul.f32 %v4406, %v3141
        %v4503 = vmul.f32 %v4407, %v2917
        %v4504 = vmul.f32 %v4408, %v2919
        %v4505 = vmul.f32 %v4409, %v3146
        %v4506 = vmul.f32 %v4410, %v2923
        %v4507 = vmul.f32 %v4411, %v2925
        %v4508 = vmul.f32 %v4412, %v3151
        %v4509 = vmul.f32 %v4413, %v2929
        %v4510 = vmul.f32 %v4414, %v2931
        %v4511 = vmul.f32 %v4415, %v3156
        %v4512 = vmul.f32 %v4416, %v2935
        %v4513 = vmul.f32 %v4417, %v2937
        %v4514 = vmul.f32 %v4418, %v3161
        %4515 = vmatprep.subr.mxu0 %v4420
        %4516 = vmatpush1.msra.mxu0 %v4419
        %4517 = vmatprep.subr.mxu0 %v4423
        %4518 = vmatpush1.msra.mxu0 %v4422
        %4519 = vmatprep.subr.mxu0 %v4426
        %4520 = vmatpush1.msra.mxu0 %v4425
        %4521 = vmatprep.subr.mxu0 %v4429
        %4522 = vmatpush1.msra.mxu0 %v4428
        %4523 = vmatprep.subr.mxu0 %v4432
        %4524 = vmatpush1.msra.mxu0 %v4431
        %4525 = vmatprep.subr.mxu0 %v4435
        %4526 = vmatpush1.msra.mxu0 %v4434
        %4527 = vmatprep.subr.mxu0 %v4438
        %4528 = vmatpush1.msra.mxu0 %v4437
        %4529 = vmatprep.subr.mxu0 %v4441
        %4530 = vmatpush1.msra.mxu0 %v4440
        %4531 = vmatprep.subr.mxu0 %v4444
        %4532 = vmatpush1.msra.mxu0 %v4443
        %4533 = vmatprep.subr.mxu0 %v4447
        %4534 = vmatpush1.msra.mxu0 %v4446
        %4535 = vmatprep.subr.mxu0 %v4450
        %4536 = vmatpush1.msra.mxu0 %v4449
        %4537 = vmatprep.subr.mxu0 %v4453
        %4538 = vmatpush1.msra.mxu0 %v4452
        %4539 = vmatprep.subr.mxu0 %v4456
        %4540 = vmatpush1.msra.mxu0 %v4455
        %4541 = vmatprep.subr.mxu0 %v4459
        %4542 = vmatpush1.msra.mxu0 %v4458
        %4543 = vmatprep.subr.mxu0 %v4462
        %4544 = vmatpush1.msra.mxu0 %v4461
        %4545 = vmatprep.subr.mxu0 %v4465
        %4546 = vmatpush1.msra.mxu0 %v4464
        %4547 = vmatprep.subr.mxu0 %v4468
        %4548 = vmatpush1.msra.mxu0 %v4467
        %4549 = vmatprep.subr.mxu0 %v4471
        %4550 = vmatpush1.msra.mxu0 %v4470
        %4551 = vmatprep.subr.mxu0 %v4474
        %4552 = vmatpush1.msra.mxu0 %v4473
        %4553 = vmatprep.subr.mxu0 %v4477
        %4554 = vmatpush1.msra.mxu0 %v4476
        %4555 = vmatprep.subr.mxu0 %v4480
        %4556 = vmatpush1.msra.mxu0 %v4479
        %4557 = vmatprep.subr.mxu0 %v4483
        %4558 = vmatpush1.msra.mxu0 %v4482
        %4559 = vmatprep.subr.mxu0 %v4486
        %4560 = vmatpush1.msra.mxu0 %v4485
        %4561 = vmatprep.subr.mxu0 %v4489
        %4562 = vmatpush1.msra.mxu0 %v4488
        %4563 = vmatprep.subr.mxu0 %v4492
        %4564 = vmatpush1.msra.mxu0 %v4491
        %4565 = vmatprep.subr.mxu0 %v4495
        %4566 = vmatpush1.msra.mxu0 %v4494
        %4567 = vmatprep.subr.mxu0 %v4498
        %4568 = vmatpush1.msra.mxu0 %v4497
        %4569 = vmatprep.subr.mxu0 %v4501
        %4570 = vmatpush1.msra.mxu0 %v4500
        %4571 = vmatprep.subr.mxu0 %v4504
        %4572 = vmatpush1.msra.mxu0 %v4503
        %4573 = vmatprep.subr.mxu0 %v4507
        %4574 = vmatpush1.msra.mxu0 %v4506
        %4575 = vmatprep.subr.mxu0 %v4510
        %4576 = vmatpush1.msra.mxu0 %v4509
        %4577 = vmatprep.subr.mxu0 %v4513
        %4578 = vmatpush1.msra.mxu0 %v4512
        %4579 = vmatprep.mubr.f32.mxu0 %v1957
        %4580 = vmatmul.mubr.f32.gmra.mrb[0].mxu0 %v1956
        %v4581 = vpop.f32.mrb[0].mxu0
        %v4582 = vadd.f32 0.0, %v4581
        %v4583 = vpop.f32.mrb[0].mxu0
        %v4584 = vadd.f32 0.0, %v4583
        %4585 = vmatprep.mubr.f32.mxu0 %v1959
        %4586 = vmatmul.mubr.f32.gmra.mrb[0].mxu0 %v1958
        %v4587 = vpop.f32.mrb[0].mxu0
        %v4588 = vadd.f32 0.0, %v4587
        %v4589 = vpop.f32.mrb[0].mxu0
        %v4590 = vadd.f32 0.0, %v4589
        %4591 = vmatprep.mubr.f32.mxu0 %v1961
        %4592 = vmatmul.mubr.f32.gmra.mrb[0].mxu0 %v1960
        %v4593 = vpop.f32.mrb[0].mxu0
        %v4594 = vadd.f32 0.0, %v4593
        %v4595 = vpop.f32.mrb[0].mxu0
        %v4596 = vadd.f32 0.0, %v4595
        %4597 = vmatprep.mubr.f32.mxu0 %v1963
        %4598 = vmatmul.mubr.f32.gmra.mrb[0].mxu0 %v1962
        %v4599 = vpop.f32.mrb[0].mxu0
        %v4600 = vadd.f32 0.0, %v4599
        %v4601 = vpop.f32.mrb[0].mxu0
        %v4602 = vadd.f32 0.0, %v4601
        %4603 = vmatprep.mubr.f32.mxu0 %v1965
        %4604 = vmatmul.mubr.f32.gmra.mrb[0].mxu0 %v1964
        %v4605 = vpop.f32.mrb[0].mxu0
        %v4606 = vadd.f32 0.0, %v4605
        %v4607 = vpop.f32.mrb[0].mxu0
        %v4608 = vadd.f32 0.0, %v4607
        %4609 = vmatprep.mubr.f32.mxu0 %v1967
        %4610 = vmatmul.mubr.f32.gmra.mrb[0].mxu0 %v1966
        %v4611 = vpop.f32.mrb[0].mxu0
        %v4612 = vadd.f32 0.0, %v4611
        %v4613 = vpop.f32.mrb[0].mxu0
        %v4614 = vadd.f32 0.0, %v4613
        %4615 = vmatprep.mubr.f32.mxu0 %v1969
        %4616 = vmatmul.mubr.f32.gmra.mrb[0].mxu0 %v1968
        %v4617 = vpop.f32.mrb[0].mxu0
        %v4618 = vadd.f32 0.0, %v4617
        %v4619 = vpop.f32.mrb[0].mxu0
        %v4620 = vadd.f32 0.0, %v4619
        %4621 = vmatprep.mubr.f32.mxu0 %v1971
        %4622 = vmatmul.mubr.f32.gmra.mrb[0].mxu0 %v1970
        %v4623 = vpop.f32.mrb[0].mxu0
        %v4624 = vadd.f32 0.0, %v4623
        %v4625 = vpop.f32.mrb[0].mxu0
        %v4626 = vadd.f32 0.0, %v4625
        %4627 = vdwg.mxu0
        %4628 = vmatprep.subr.mxu0 0.0
        %4629 = vmatpush1.msra.mxu0 %v4421
        %4630 = vmatprep.subr.mxu0 0.0
        %4631 = vmatpush1.msra.mxu0 %v4424
        %4632 = vmatprep.subr.mxu0 0.0
        %4633 = vmatpush1.msra.mxu0 %v4427
        %4634 = vmatprep.subr.mxu0 0.0
        %4635 = vmatpush1.msra.mxu0 %v4430
        %4636 = vmatprep.subr.mxu0 0.0
        %4637 = vmatpush1.msra.mxu0 %v4433
        %4638 = vmatprep.subr.mxu0 0.0
        %4639 = vmatpush1.msra.mxu0 %v4436
        %4640 = vmatprep.subr.mxu0 0.0
        %4641 = vmatpush1.msra.mxu0 %v4439
        %4642 = vmatprep.subr.mxu0 0.0
        %4643 = vmatpush1.msra.mxu0 %v4442
        %4644 = vmatprep.subr.mxu0 0.0
        %4645 = vmatpush1.msra.mxu0 %v4445
        %4646 = vmatprep.subr.mxu0 0.0
        %4647 = vmatpush1.msra.mxu0 %v4448
        %4648 = vmatprep.subr.mxu0 0.0
        %4649 = vmatpush1.msra.mxu0 %v4451
        %4650 = vmatprep.subr.mxu0 0.0
        %4651 = vmatpush1.msra.mxu0 %v4454
        %4652 = vmatprep.subr.mxu0 0.0
        %4653 = vmatpush1.msra.mxu0 %v4457
        %4654 = vmatprep.subr.mxu0 0.0
        %4655 = vmatpush1.msra.mxu0 %v4460
        %4656 = vmatprep.subr.mxu0 0.0
        %4657 = vmatpush1.msra.mxu0 %v4463
        %4658 = vmatprep.subr.mxu0 0.0
        %4659 = vmatpush1.msra.mxu0 %v4466
        %4660 = vmatprep.subr.mxu0 0.0
        %4661 = vmatpush1.msra.mxu0 %v4469
        %4662 = vmatprep.subr.mxu0 0.0
        %4663 = vmatpush1.msra.mxu0 %v4472
        %4664 = vmatprep.subr.mxu0 0.0
        %4665 = vmatpush1.msra.mxu0 %v4475
        %4666 = vmatprep.subr.mxu0 0.0
        %4667 = vmatpush1.msra.mxu0 %v4478
        %4668 = vmatprep.subr.mxu0 0.0
        %4669 = vmatpush1.msra.mxu0 %v4481
        %4670 = vmatprep.subr.mxu0 0.0
        %4671 = vmatpush1.msra.mxu0 %v4484
        %4672 = vmatprep.subr.mxu0 0.0
        %4673 = vmatpush1.msra.mxu0 %v4487
        %4674 = vmatprep.subr.mxu0 0.0
        %4675 = vmatpush1.msra.mxu0 %v4490
        %4676 = vmatprep.subr.mxu0 0.0
        %4677 = vmatpush1.msra.mxu0 %v4493
        %4678 = vmatprep.subr.mxu0 0.0
        %4679 = vmatpush1.msra.mxu0 %v4496
        %4680 = vmatprep.subr.mxu0 0.0
        %4681 = vmatpush1.msra.mxu0 %v4499
        %4682 = vmatprep.subr.mxu0 0.0
        %4683 = vmatpush1.msra.mxu0 %v4502
        %4684 = vmatprep.subr.mxu0 0.0
        %4685 = vmatpush1.msra.mxu0 %v4505
        %4686 = vmatprep.subr.mxu0 0.0
        %4687 = vmatpush1.msra.mxu0 %v4508
        %4688 = vmatprep.subr.mxu0 0.0
        %4689 = vmatpush1.msra.mxu0 %v4511
        %4690 = vmatprep.subr.mxu0 0.0
        %4691 = vmatpush1.msra.mxu0 %v4514
        %4692 = vmatprep.mubr.f32.mxu0 %v1957
        %4693 = vmatmul.mubr.f32.gmra.mrb[0].mxu0 %v1956
        %v4694 = vpop.f32.mrb[0].mxu0
        %v4695 = vadd.f32 0.0, %v4694
        %v4696 = vpop.f32.mrb[0].mxu0
        %4697 = vmatprep.mubr.f32.mxu0 %v1959
        %4698 = vmatmul.mubr.f32.gmra.mrb[0].mxu0 %v1958
        %v4699 = vpop.f32.mrb[0].mxu0
        %v4700 = vadd.f32 0.0, %v4699
        %v4701 = vpop.f32.mrb[0].mxu0
        %4702 = vmatprep.mubr.f32.mxu0 %v1961
        %4703 = vmatmul.mubr.f32.gmra.mrb[0].mxu0 %v1960
        %v4704 = vpop.f32.mrb[0].mxu0
        %v4705 = vadd.f32 0.0, %v4704
        %v4706 = vpop.f32.mrb[0].mxu0
        %4707 = vmatprep.mubr.f32.mxu0 %v1963
        %4708 = vmatmul.mubr.f32.gmra.mrb[0].mxu0 %v1962
        %v4709 = vpop.f32.mrb[0].mxu0
        %v4710 = vadd.f32 0.0, %v4709
        %v4711 = vpop.f32.mrb[0].mxu0
        %4712 = vmatprep.mubr.f32.mxu0 %v1965
        %4713 = vmatmul.mubr.f32.gmra.mrb[0].mxu0 %v1964
        %v4714 = vpop.f32.mrb[0].mxu0
        %v4715 = vadd.f32 0.0, %v4714
        %v4716 = vpop.f32.mrb[0].mxu0
        %4717 = vmatprep.mubr.f32.mxu0 %v1967
        %4718 = vmatmul.mubr.f32.gmra.mrb[0].mxu0 %v1966
        %v4719 = vpop.f32.mrb[0].mxu0
        %v4720 = vadd.f32 0.0, %v4719
        %v4721 = vpop.f32.mrb[0].mxu0
        %4722 = vmatprep.mubr.f32.mxu0 %v1969
        %4723 = vmatmul.mubr.f32.gmra.mrb[0].mxu0 %v1968
        %v4724 = vpop.f32.mrb[0].mxu0
        %v4725 = vadd.f32 0.0, %v4724
        %v4726 = vpop.f32.mrb[0].mxu0
        %4727 = vmatprep.mubr.f32.mxu0 %v1971
        %4728 = vmatmul.mubr.f32.gmra.mrb[0].mxu0 %v1970
        %v4729 = vpop.f32.mrb[0].mxu0
        %v4730 = vadd.f32 0.0, %v4729
        %v4731 = vpop.f32.mrb[0].mxu0
        %4732 = vdwg.mxu0
        %v4733 = vld [vmem:[%s12] sm:$0xff]
        %v4734 = vld [vmem:[%s12 + $0x8] sm:$0xff]
        %v4735 = vld [vmem:[%s12 + $0x10] sm:$0xff]
        %v4736 = vld [vmem:[%s12 + $0x18] sm:$0xff]
        %v4737 = vld [vmem:[%s12 + $0x20] sm:$0xff]
        %v4738 = vld [vmem:[%s12 + $0x28] sm:$0xff]
        %v4739 = vld [vmem:[%s12 + $0x30] sm:$0xff]
        %v4740 = vld [vmem:[%s12 + $0x38] sm:$0xff]
        %v4741 = vld [vmem:[%s12 + $0x40] sm:$0xff]
        %v4742 = vld [vmem:[%s12 + $0x48] sm:$0xff]
        %v4743 = vld [vmem:[%s12 + $0x50] sm:$0xff]
        %v4744 = vld [vmem:[%s12 + $0x58] sm:$0xff]
        %v4745 = vld [vmem:[%s12 + $0x60] sm:$0xff]
        %v4746 = vld [vmem:[%s12 + $0x68] sm:$0xff]
        %v4747 = vld [vmem:[%s12 + $0x70] sm:$0xff]
        %v4748 = vld [vmem:[%s12 + $0x78] sm:$0xff]
        %v4749 = vld [vmem:[%s12 + $0x80] sm:$0xff]
        %v4750 = vld [vmem:[%s12 + $0x88] sm:$0xff]
        %v4751 = vld [vmem:[%s12 + $0x90] sm:$0xff]
        %v4752 = vld [vmem:[%s12 + $0x98] sm:$0xff]
        %v4753 = vld [vmem:[%s12 + $0xa0] sm:$0xff]
        %v4754 = vld [vmem:[%s12 + $0xa8] sm:$0xff]
        %v4755 = vld [vmem:[%s12 + $0xb0] sm:$0xff]
        %v4756 = vld [vmem:[%s12 + $0xb8] sm:$0xff]
        %v4757 = vld [vmem:[%s12 + $0xc0] sm:$0xff]
        %v4758 = vld [vmem:[%s12 + $0xc8] sm:$0xff]
        %v4759 = vld [vmem:[%s12 + $0xd0] sm:$0xff]
        %v4760 = vld [vmem:[%s12 + $0xd8] sm:$0xff]
        %v4761 = vld [vmem:[%s12 + $0xe0] sm:$0xff]
        %v4762 = vld [vmem:[%s12 + $0xe8] sm:$0xff]
        %v4763 = vld [vmem:[%s12 + $0xf0] sm:$0xff]
        %v4764 = vld [vmem:[%s12 + $0xf8] sm:$0xff]
        %v4765 = vld [vmem:[%s12 + $0x100] sm:$0xff]
        %v4766 = vld [vmem:[%s12 + $0x108] sm:$0xff]
        %v4767 = vld [vmem:[%s12 + $0x110] sm:$0xff]
        %v4768 = vld [vmem:[%s12 + $0x118] sm:$0xff]
        %v4769 = vld [vmem:[%s12 + $0x120] sm:$0xff]
        %v4770 = vld [vmem:[%s12 + $0x128] sm:$0xff]
        %v4771 = vld [vmem:[%s12 + $0x130] sm:$0xff]
        %v4772 = vld [vmem:[%s12 + $0x138] sm:$0xff]
        %v4774 = vsel %vm1972, %v4695, 0
        %v4777 = vsel %vm1972, %v4700, 0
        %v4780 = vsel %vm1972, %v4705, 0
        %v4783 = vsel %vm1972, %v4710, 0
        %v4786 = vsel %vm1972, %v4715, 0
        %v4789 = vsel %vm1972, %v4720, 0
        %v4792 = vsel %vm1972, %v4725, 0
        %v4795 = vsel %vm1972, %v4730, 0
        %4797 = vmatprep.subr.mxu0 0.0
        %4798 = vmatpush1.msra.mxu0 %v4733
        %4799 = vmatprep.subr.mxu0 0.0
        %4800 = vmatpush1.msra.mxu0 %v4734
        %4801 = vmatprep.subr.mxu0 0.0
        %4802 = vmatpush1.msra.mxu0 %v4735
        %4803 = vmatprep.subr.mxu0 0.0
        %4804 = vmatpush1.msra.mxu0 %v4736
        %4805 = vmatprep.subr.mxu0 0.0
        %4806 = vmatpush1.msra.mxu0 %v4737
        %4807 = vmatprep.subr.mxu0 0.0
        %4808 = vmatpush1.msra.mxu0 %v4738
        %4809 = vmatprep.subr.mxu0 0.0
        %4810 = vmatpush1.msra.mxu0 %v4739
        %4811 = vmatprep.subr.mxu0 0.0
        %4812 = vmatpush1.msra.mxu0 %v4740
        %4813 = vmatprep.subr.mxu0 0.0
        %4814 = vmatpush1.msra.mxu0 %v4741
        %4815 = vmatprep.subr.mxu0 0.0
        %4816 = vmatpush1.msra.mxu0 %v4742
        %4817 = vmatprep.subr.mxu0 0.0
        %4818 = vmatpush1.msra.mxu0 %v4743
        %4819 = vmatprep.subr.mxu0 0.0
        %4820 = vmatpush1.msra.mxu0 %v4744
        %4821 = vmatprep.subr.mxu0 0.0
        %4822 = vmatpush1.msra.mxu0 %v4745
        %4823 = vmatprep.subr.mxu0 0.0
        %4824 = vmatpush1.msra.mxu0 %v4746
        %4825 = vmatprep.subr.mxu0 0.0
        %4826 = vmatpush1.msra.mxu0 %v4747
        %4827 = vmatprep.subr.mxu0 0.0
        %4828 = vmatpush1.msra.mxu0 %v4748
        %4829 = vmatprep.subr.mxu0 0.0
        %4830 = vmatpush1.msra.mxu0 %v4749
        %4831 = vmatprep.subr.mxu0 0.0
        %4832 = vmatpush1.msra.mxu0 %v4750
        %4833 = vmatprep.subr.mxu0 0.0
        %4834 = vmatpush1.msra.mxu0 %v4751
        %4835 = vmatprep.subr.mxu0 0.0
        %4836 = vmatpush1.msra.mxu0 %v4752
        %4837 = vmatprep.subr.mxu0 0.0
        %4838 = vmatpush1.msra.mxu0 %v4753
        %4839 = vmatprep.subr.mxu0 0.0
        %4840 = vmatpush1.msra.mxu0 %v4754
        %4841 = vmatprep.subr.mxu0 0.0
        %4842 = vmatpush1.msra.mxu0 %v4755
        %4843 = vmatprep.subr.mxu0 0.0
        %4844 = vmatpush1.msra.mxu0 %v4756
        %4845 = vmatprep.subr.mxu0 0.0
        %4846 = vmatpush1.msra.mxu0 %v4757
        %4847 = vmatprep.subr.mxu0 0.0
        %4848 = vmatpush1.msra.mxu0 %v4758
        %4849 = vmatprep.subr.mxu0 0.0
        %4850 = vmatpush1.msra.mxu0 %v4759
        %4851 = vmatprep.subr.mxu0 0.0
        %4852 = vmatpush1.msra.mxu0 %v4760
        %4853 = vmatprep.subr.mxu0 0.0
        %4854 = vmatpush1.msra.mxu0 %v4761
        %4855 = vmatprep.subr.mxu0 0.0
        %4856 = vmatpush1.msra.mxu0 %v4762
        %4857 = vmatprep.subr.mxu0 0.0
        %4858 = vmatpush1.msra.mxu0 %v4763
        %4859 = vmatprep.subr.mxu0 0.0
        %4860 = vmatpush1.msra.mxu0 %v4764
        %4861 = vmatprep.mubr.f32.mxu0 %v4584
        %4862 = vmatmul.mubr.f32.gmra.mrb[0].mxu0 %v4582
        %v4863 = vpop.f32.mrb[0].mxu0
        %v4864 = vadd.f32 %v1642, %v4863
        %v4865 = vpop.f32.mrb[0].mxu0
        %4866 = vmatprep.mubr.f32.mxu0 %v4590
        %4867 = vmatmul.mubr.f32.gmra.mrb[0].mxu0 %v4588
        %v4868 = vpop.f32.mrb[0].mxu0
        %v4869 = vadd.f32 %v1647, %v4868
        %v4870 = vpop.f32.mrb[0].mxu0
        %4871 = vmatprep.mubr.f32.mxu0 %v4596
        %4872 = vmatmul.mubr.f32.gmra.mrb[0].mxu0 %v4594
        %v4873 = vpop.f32.mrb[0].mxu0
        %v4874 = vadd.f32 %v1652, %v4873
        %v4875 = vpop.f32.mrb[0].mxu0
        %4876 = vmatprep.mubr.f32.mxu0 %v4602
        %4877 = vmatmul.mubr.f32.gmra.mrb[0].mxu0 %v4600
        %v4878 = vpop.f32.mrb[0].mxu0
        %v4879 = vadd.f32 %v1657, %v4878
        %v4880 = vpop.f32.mrb[0].mxu0
        %4881 = vmatprep.mubr.f32.mxu0 %v4608
        %4882 = vmatmul.mubr.f32.gmra.mrb[0].mxu0 %v4606
        %v4883 = vpop.f32.mrb[0].mxu0
        %v4884 = vadd.f32 %v1662, %v4883
        %v4885 = vpop.f32.mrb[0].mxu0
        %4886 = vmatprep.mubr.f32.mxu0 %v4614
        %4887 = vmatmul.mubr.f32.gmra.mrb[0].mxu0 %v4612
        %v4888 = vpop.f32.mrb[0].mxu0
        %v4889 = vadd.f32 %v1667, %v4888
        %v4890 = vpop.f32.mrb[0].mxu0
        %4891 = vmatprep.mubr.f32.mxu0 %v4620
        %4892 = vmatmul.mubr.f32.gmra.mrb[0].mxu0 %v4618
        %v4893 = vpop.f32.mrb[0].mxu0
        %v4894 = vadd.f32 %v1672, %v4893
        %v4895 = vpop.f32.mrb[0].mxu0
        %4896 = vmatprep.mubr.f32.mxu0 %v4626
        %4897 = vmatmul.mubr.f32.gmra.mrb[0].mxu0 %v4624
        %v4898 = vpop.f32.mrb[0].mxu0
        %v4899 = vadd.f32 %v1677, %v4898
        %v4900 = vpop.f32.mrb[0].mxu0
        %4901 = vdwg.mxu0
        %4902 = vmatprep.subr.mxu0 0.0
        %4903 = vmatpush1.msra.mxu0 %v4765
        %4904 = vmatprep.subr.mxu0 0.0
        %4905 = vmatpush1.msra.mxu0 %v4766
        %4906 = vmatprep.subr.mxu0 0.0
        %4907 = vmatpush1.msra.mxu0 %v4767
        %4908 = vmatprep.subr.mxu0 0.0
        %4909 = vmatpush1.msra.mxu0 %v4768
        %4910 = vmatprep.subr.mxu0 0.0
        %4911 = vmatpush1.msra.mxu0 %v4769
        %4912 = vmatprep.subr.mxu0 0.0
        %4913 = vmatpush1.msra.mxu0 %v4770
        %4914 = vmatprep.subr.mxu0 0.0
        %4915 = vmatpush1.msra.mxu0 %v4771
        %4916 = vmatprep.subr.mxu0 0.0
        %4917 = vmatpush1.msra.mxu0 %v4772
        %4918 = vmatprep.subr.mxu0 0.0
        %4919 = vmatpush1.msra.mxu0 0.0
        %4920 = vmatprep.subr.mxu0 0.0
        %4921 = vmatpush1.msra.mxu0 0.0
        %4922 = vmatprep.subr.mxu0 0.0
        %4923 = vmatpush1.msra.mxu0 0.0
        %4924 = vmatprep.subr.mxu0 0.0
        %4925 = vmatpush1.msra.mxu0 0.0
        %4926 = vmatprep.subr.mxu0 0.0
        %4927 = vmatpush1.msra.mxu0 0.0
        %4928 = vmatprep.subr.mxu0 0.0
        %4929 = vmatpush1.msra.mxu0 0.0
        %4930 = vmatprep.subr.mxu0 0.0
        %4931 = vmatpush1.msra.mxu0 0.0
        %4932 = vmatprep.subr.mxu0 0.0
        %4933 = vmatpush1.msra.mxu0 0.0
        %4934 = vmatprep.subr.mxu0 0.0
        %4935 = vmatpush1.msra.mxu0 0.0
        %4936 = vmatprep.subr.mxu0 0.0
        %4937 = vmatpush1.msra.mxu0 0.0
        %4938 = vmatprep.subr.mxu0 0.0
        %4939 = vmatpush1.msra.mxu0 0.0
        %4940 = vmatprep.subr.mxu0 0.0
        %4941 = vmatpush1.msra.mxu0 0.0
        %4942 = vmatprep.subr.mxu0 0.0
        %4943 = vmatpush1.msra.mxu0 0.0
        %4944 = vmatprep.subr.mxu0 0.0
        %4945 = vmatpush1.msra.mxu0 0.0
        %4946 = vmatprep.subr.mxu0 0.0
        %4947 = vmatpush1.msra.mxu0 0.0
        %4948 = vmatprep.subr.mxu0 0.0
        %4949 = vmatpush1.msra.mxu0 0.0
        %4950 = vmatprep.subr.mxu0 0.0
        %4951 = vmatpush1.msra.mxu0 0.0
        %4952 = vmatprep.subr.mxu0 0.0
        %4953 = vmatpush1.msra.mxu0 0.0
        %4954 = vmatprep.subr.mxu0 0.0
        %4955 = vmatpush1.msra.mxu0 0.0
        %4956 = vmatprep.subr.mxu0 0.0
        %4957 = vmatpush1.msra.mxu0 0.0
        %4958 = vmatprep.subr.mxu0 0.0
        %4959 = vmatpush1.msra.mxu0 0.0
        %4960 = vmatprep.subr.mxu0 0.0
        %4961 = vmatpush1.msra.mxu0 0.0
        %4962 = vmatprep.subr.mxu0 0.0
        %4963 = vmatpush1.msra.mxu0 0.0
        %4964 = vmatprep.subr.mxu0 0.0
        %4965 = vmatpush1.msra.mxu0 0.0
        %4966 = vmatprep.mubr.f32.mxu0 0.0
        %4967 = vmatmul.mubr.f32.gmra.mrb[0].mxu0 %v4774
        %v4968 = vpop.f32.mrb[0].mxu0
        %v4969 = vadd.f32 %v4864, %v4968
        %v4970 = vpop.f32.mrb[0].mxu0
        %4971 = vmatprep.mubr.f32.mxu0 0.0
        %4972 = vmatmul.mubr.f32.gmra.mrb[0].mxu0 %v4777
        %v4973 = vpop.f32.mrb[0].mxu0
        %v4974 = vadd.f32 %v4869, %v4973
        %v4975 = vpop.f32.mrb[0].mxu0
        %4976 = vmatprep.mubr.f32.mxu0 0.0
        %4977 = vmatmul.mubr.f32.gmra.mrb[0].mxu0 %v4780
        %v4978 = vpop.f32.mrb[0].mxu0
        %v4979 = vadd.f32 %v4874, %v4978
        %v4980 = vpop.f32.mrb[0].mxu0
        %4981 = vmatprep.mubr.f32.mxu0 0.0
        %4982 = vmatmul.mubr.f32.gmra.mrb[0].mxu0 %v4783
        %v4983 = vpop.f32.mrb[0].mxu0
        %v4984 = vadd.f32 %v4879, %v4983
        %v4985 = vpop.f32.mrb[0].mxu0
        %4986 = vmatprep.mubr.f32.mxu0 0.0
        %4987 = vmatmul.mubr.f32.gmra.mrb[0].mxu0 %v4786
        %v4988 = vpop.f32.mrb[0].mxu0
        %v4989 = vadd.f32 %v4884, %v4988
        %v4990 = vpop.f32.mrb[0].mxu0
        %4991 = vmatprep.mubr.f32.mxu0 0.0
        %4992 = vmatmul.mubr.f32.gmra.mrb[0].mxu0 %v4789
        %v4993 = vpop.f32.mrb[0].mxu0
        %v4994 = vadd.f32 %v4889, %v4993
        %v4995 = vpop.f32.mrb[0].mxu0
        %4996 = vmatprep.mubr.f32.mxu0 0.0
        %4997 = vmatmul.mubr.f32.gmra.mrb[0].mxu0 %v4792
        %v4998 = vpop.f32.mrb[0].mxu0
        %v4999 = vadd.f32 %v4894, %v4998
        %v5000 = vpop.f32.mrb[0].mxu0
        %5001 = vmatprep.mubr.f32.mxu0 0.0
        %5002 = vmatmul.mubr.f32.gmra.mrb[0].mxu0 %v4795
        %v5003 = vpop.f32.mrb[0].mxu0
        %v5004 = vadd.f32 %v4899, %v5003
        %v5005 = vpop.f32.mrb[0].mxu0
        %5006 = vdwg.mxu0
        %5007 = vst [vmem:[%s511] sm:$0xff] %v4969
        %5008 = vst [vmem:[%s511 + $0x8] sm:$0xff] %v4974
        %5009 = vst [vmem:[%s511 + $0x10] sm:$0xff] %v4979
        %5010 = vst [vmem:[%s511 + $0x18] sm:$0xff] %v4984
        %5011 = vst [vmem:[%s511 + $0x20] sm:$0xff] %v4989
        %5012 = vst [vmem:[%s511 + $0x28] sm:$0xff] %v4994
        %5013 = vst [vmem:[%s511 + $0x30] sm:$0xff] %v4999
        %5014 = vst [vmem:[%s511 + $0x38] sm:$0xff] %v5004
        %s5015 = sand.u32 %s338, 1
        %s5016 = scalar_lea.sflag [#allocation3], %s5015
        %s5017 = sand.u32 %s338, 1
        %s5018 = smul.addr %s5017, 64
        %s5019 = scalar_lea.vmem [#allocation2], %s5018
        // Predicated region
        $region73: #{interaction_block.1} parent=71 // pred_check
          %p5020 = pneg %p348
        $region74: #{interaction_block.1} parent=71 // pred_check_branch
          %5022 = sbr.rel (%p5020) target = $region76
        $region75: #{interaction_block.1} parent=71 // pred_region
          %s5023 = smul.u32 8, %s27
          %s5025 = ssub.s32 1024, 1024
          %5026 = vsyncadd %s5016, %s5025
          %s5027 = smul.addr %s5023, 128
          %s5028 = scalar_lea.hbm %s13, %s5027
          %s5029 = sshll.u32 %s5019, 4
          %s5030 = int_to_ptr.vmem [resolvable:$true] %s5029
          %5035 = dma.vmem_to_hbm [thread:$0]  %s5030, 1024, %s5028, %s5016, 128, 128, 8
        $region76: #{interaction_block.1} parent=71 // pred_fallthru
          _
      $region72: #{interaction_block.1} parent=5 // pred_fallthru
        _
      %p5036 = scmp.le.s32.totalorder 2, %s22
      // Predicated region
      $region77: #{interaction_block.1} parent=5 // pred_check
        %p5037 = pneg %p5036
      $region78: #{interaction_block.1} parent=5 // pred_check_branch
        %5039 = sbr.rel (%p5037) target = $region80
      $region79: #{interaction_block.1} parent=5 // pred_region
        %s5040 = ssub.s32 %s22, 2
        // Predicated region
        $region81: #{interaction_block.1} parent=79 // pred_check
          %p5041 = pneg %p354
        $region82: #{interaction_block.1} parent=79 // pred_check_branch
          %5043 = sbr.rel (%p5041) target = $region84
        $region83: #{interaction_block.1} parent=79 // pred_region
          %s5044 = sand.u32 %s339, 1
          %s5045 = scalar_lea.sflag [#allocation3], %s5044
          %s5046 = sand.u32 %s339, 1
          %s5047 = smul.addr %s5046, 64
          %s5048 = scalar_lea.vmem [#allocation2], %s5047
          %5049 = dma.done %s5045, 1024
        $region84: #{interaction_block.1} parent=79 // pred_fallthru
          _
      $region80: #{interaction_block.1} parent=5 // pred_fallthru
        _
    $region6: #{interaction_block.1} parent=1 // loop_footer
      %s26 = sadd.s32 1, %s22
    $region7: #{interaction_block.1} parent=1 // loop_footer_branch
      %21 = sbr.rel target = $region3
    $region8: #{interaction_block.1} parent=1 // loop_exit
      _
    %5050 = vsyncpa [#allocation3], 1
    %s5051 = scalar_lea.sflag [#allocation3], 1
    %5052 = vsyncpa %s5051, 1

</llo_original>
